<compile_context>
chip_gen: v5e
topology: v5e:2x2
jax: 0.10.0
libtpu: 0.0.40
codegen_flags: <defaults>
</compile_context>

<pallas_src>
import functools

import jax
import jax.numpy as jnp
from jax import lax
from jax.experimental import pallas as pl
from jax.experimental.pallas import tpu as pltpu


# ----------------------------------------------------------------------------
# Pallas kernel: fused chain of (3x3 conv + bias + ReLU), pixels on lanes.
# ----------------------------------------------------------------------------
def _repblock_kernel(img_w, x_ref, mask_ref, *refs):
    """refs = (w_0, b_0, ..., w_{L-1}, b_{L-1}, out_ref, xs_ref).

    x_ref    : (Cp_in0, HW_pad)       bf16  input image, channels x flat pixels
    mask_ref : (8, HW_pad)            f32   row0: p<H*W, row1: col-1 ok, row2: col+1 ok
    w_l      : (Cp_out_l, 9*Cp_in_l)  bf16  reparameterized 3x3 weights (tap-major)
    b_l      : (Cp_out_l, 1)          f32   bias
    out_ref  : (Cp_out_last, HW_pad)  f32
    xs_ref   : (9*Cp_max, HW_pad)     bf16  VMEM scratch holding the MXU RHS
    """
    out_ref, xs_ref = refs[-2], refs[-1]
    wb = refs[:-2]
    n_layers = len(wb) // 2
    hw_pad = x_ref.shape[-1]

    # Masks are layer-invariant; load them once.
    tail_m = mask_ref[0:1, :]                               # p < H*W
    col_m = {-1: mask_ref[1:2, :], 1: mask_ref[2:3, :]}     # col+dx in [0, W)

    act = x_ref[...].astype(jnp.float32)                    # (Cp_in0, HW_pad)
    for l in range(n_layers):
        w = wb[2 * l][...]                                  # (Cp_out, 9*Cp_in) bf16
        b = wb[2 * l + 1][...]                              # (Cp_out, 1)       f32
        cp = w.shape[1] // 9

        # Zero the padded tail columns once per layer; together with
        # HW_pad >= H*W + W this makes the dy=+-1, dx=0 taps read zeros outside
        # the image, so only the 6 dx=+-1 taps still need a (column) mask.
        act = act * tail_m

        # Gather the 9 shifted taps with static lane rotations (XLU slot) and
        # write them tap-major into the bf16 MXU RHS scratch (one copy only).
        for t in range(9):
            dy, dx = t // 3 - 1, t % 3 - 1
            s = dy * img_w + dx                             # static flat shift
            if s == 0:
                tap = act
            else:
                tap = pltpu.roll(act, shift=(-s) % hw_pad, axis=1)
            if dx != 0:
                tap = tap * col_m[dx]
            xs_ref[t * cp:(t + 1) * cp, :] = tap.astype(jnp.bfloat16)

        # One big MXU matmul per layer (bf16 in, f32 accumulate) + bias + ReLU.
        y = jnp.dot(w, xs_ref[0:9 * cp, :], preferred_element_type=jnp.float32)
        act = jnp.maximum(y + b, 0.0)                       # (Cp_out, HW_pad) f32

    out_ref[...] = act.astype(out_ref.dtype)


def _const_spec(shape, single_buffer):
    """BlockSpec for a grid-invariant operand (weights / bias / mask)."""
    if single_buffer:
        return pl.BlockSpec(shape, lambda b: (0, 0), pipeline_mode=pl.Buffered(1))
    return pl.BlockSpec(shape, lambda b: (0, 0))


def _repblock_pallas(x_flat, mask, packed, img_w, cp_max, single_buffer_consts):
    B, cp_in0, hw_pad = x_flat.shape
    cp_out_last = packed[-1][0].shape[0]

    kern = functools.partial(_repblock_kernel, img_w)

    in_specs = [pl.BlockSpec((None, cp_in0, hw_pad), lambda b: (b, 0, 0)),
                _const_spec(mask.shape, single_buffer_consts)]
    args = [x_flat, mask]

    # Conservative VMEM budget (assume double-buffering everywhere) + headroom.
    vmem_bytes = 2 * cp_in0 * hw_pad * 2                 # input blocks (bf16)
    vmem_bytes += 2 * cp_out_last * hw_pad * 4           # output blocks (f32)
    vmem_bytes += 2 * mask.shape[0] * hw_pad * 4         # mask
    for w_mat, b_col in packed:
        in_specs.append(_const_spec(w_mat.shape, single_buffer_consts))
        in_specs.append(_const_spec(b_col.shape, single_buffer_consts))
        args += [w_mat, b_col]
        vmem_bytes += 2 * (w_mat.size * 2 + w_mat.shape[0] * 128 * 4)
    vmem_bytes += 9 * cp_max * hw_pad * 2                 # RHS scratch (bf16)
    vmem_bytes += 4 * max(cp_max, cp_out_last) * hw_pad * 4   # live f32 temps
    vmem_limit = int(min(max(2 * vmem_bytes, 32 << 20), 64 << 20))

    return pl.pallas_call(
        kern,
        out_shape=jax.ShapeDtypeStruct((B, cp_out_last, hw_pad), jnp.float32),
        grid_spec=pltpu.PrefetchScalarGridSpec(
            num_scalar_prefetch=0,
            grid=(B,),                                    # >= 2 steps for v7x
            in_specs=in_specs,
            out_specs=pl.BlockSpec((None, cp_out_last, hw_pad),
                                   lambda b: (b, 0, 0)),
            scratch_shapes=[pltpu.VMEM((9 * cp_max, hw_pad), jnp.bfloat16)]),
        compiler_params=pltpu.CompilerParams(
            dimension_semantics=("parallel",),
            vmem_limit_bytes=vmem_limit),
    )(*args)


# ----------------------------------------------------------------------------
# Glue: RepVGG reparameterization, padding/packing, forward.
# ----------------------------------------------------------------------------
def _round_up(x, m):
    return (x + m - 1) // m * m


def repvgg_equivalent_kernel(p, in_ch, out_ch, eps=1e-5):
    """RepVGGBlock.get_equivalent_kernel_bias in JAX (eval-mode BN folding)."""
    def fuse(w, bn):
        gamma, beta, mean, var = bn
        t = gamma / jnp.sqrt(var + eps)
        return w * t[:, None, None, None], beta - mean * t

    k3, b3 = fuse(p["w3"], p["bn3"])                       # (out, in, 3, 3)
    k1, b1 = fuse(p["w1"], p["bn1"])                       # (out, in, 1, 1)
    k1 = jnp.pad(k1, ((0, 0), (0, 0), (1, 1), (1, 1)))     # center of 3x3
    k, b = k3 + k1, b3 + b1
    if p["bnid"] is not None:                              # identity branch
        gamma, beta, mean, var = p["bnid"]
        t = gamma / jnp.sqrt(var + eps)
        kid = jnp.zeros((out_ch, in_ch, 3, 3), jnp.float32)
        kid = kid.at[jnp.arange(out_ch), jnp.arange(in_ch), 1, 1].set(t)
        k = k + kid
        b = b + (beta - mean * t)
    return k, b


def _pack_weight(k, b, cin_p, cout_p):
    """(Cout,Cin,3,3)+(Cout,) -> tap-major bf16 (Cout_p,9*Cin_p) + f32 (Cout_p,1)."""
    cout, cin = k.shape[:2]
    kp = jnp.zeros((cout_p, cin_p, 3, 3), jnp.float32).at[:cout, :cin].set(k)
    w_mat = jnp.transpose(kp, (0, 2, 3, 1)).reshape(cout_p, 9 * cin_p)
    b_col = jnp.zeros((cout_p, 1), jnp.float32).at[:cout, 0].set(b)
    return w_mat.astype(jnp.bfloat16), b_col


def _make_masks(H, W, hw_pad):
    """(8, HW_pad) f32: row0 = p<H*W, row1 = col-1 valid, row2 = col+1 valid."""
    p = jnp.arange(hw_pad)
    col = p % W
    m = jnp.zeros((8, hw_pad), jnp.float32)
    m = m.at[0].set((p < H * W).astype(jnp.float32))
    m = m.at[1].set((col >= 1).astype(jnp.float32))
    m = m.at[2].set((col <= W - 2).astype(jnp.float32))
    return m


def repblock_forward(x, block_params):
    """RepBlock forward (inference semantics).  x is NCHW float32."""
    B, c_in, H, W = x.shape
    HW = H * W
    # Flat pixels on the lane axis, padded to a multiple of 128 AND leaving at
    # least W zero tail columns so vertically shifted taps read zeros.
    hw_pad = _round_up(HW + W, 128)

    # Reparameterize each RepVGG block to one 3x3 conv + bias.
    eqs, ci = [], c_in
    for p in block_params:
        assert p["w3"].shape[2:] == (3, 3) and p["w1"].shape[2:] == (1, 1)
        co = p["w3"].shape[0]
        k_eq, b_eq = repvgg_equivalent_kernel(p, ci, co)
        eqs.append((k_eq, b_eq, ci, co))
        ci = co

    # Channels padded to multiples of 16 (bf16 sublane packing / (16,128) tiles).
    cps = [_round_up(c_in, 16)] + [_round_up(e[3], 16) for e in eqs]
    packed = [_pack_weight(k_eq, b_eq, cp_i, cp_o)
              for (k_eq, b_eq, _, _), cp_i, cp_o in zip(eqs, cps[:-1], cps[1:])]

    # NCHW stays NCHW: flatten pixels onto the lane axis, zero-pad, ship bf16.
    x_flat = x.reshape(B, c_in, HW)
    x_flat = jnp.pad(x_flat, ((0, 0), (0, cps[0] - c_in), (0, hw_pad - HW)))
    x_flat = x_flat.astype(jnp.bfloat16)
    mask = _make_masks(H, W, hw_pad)

    out_p = None
    for single_buffer in (True, False):   # fall back if pl.Buffered(1) unsupported
        try:
            out_p = jax.block_until_ready(
                _repblock_pallas(x_flat, mask, packed, W,
                                 cp_max=max(cps[:-1]),
                                 single_buffer_consts=single_buffer))
            break
        except Exception:
            if not single_buffer:
                raise
    c_out = eqs[-1][3]
    return out_p[:, :c_out, :HW].reshape(B, c_out, H, W)


# ----------------------------------------------------------------------------
# Pure-JAX reference (3-branch RepVGG forward, eval-mode BN) for validation.
# ----------------------------------------------------------------------------
def _bn_eval(y, bn, eps=1e-5):
    gamma, beta, mean, var = bn
    t = gamma / jnp.sqrt(var + eps)
    return y * t[None, :, None, None] + (beta - mean * t)[None, :, None, None]


def _conv_nchw(x, w, pad):
    return lax.conv_general_dilated(
        x, w, window_strides=(1, 1), padding=((pad, pad), (pad, pad)),
        dimension_numbers=("NCHW", "OIHW", "NCHW"))


def repblock_reference(x, block_params):
    for p in block_params:
        y = _bn_eval(_conv_nchw(x, p["w3"], 1), p["bn3"])
        y = y + _bn_eval(_conv_nchw(x, p["w1"], 0), p["bn1"])
        if p["bnid"] is not None:
            y = y + _bn_eval(x, p["bnid"])
        x = jnp.maximum(y, 0.0)
    return x


# ----------------------------------------------------------------------------
# Deterministic parameter construction + example run.
# ----------------------------------------------------------------------------
def _make_bn(key, ch):
    k1, k2, k3, k4 = jax.random.split(key, 4)
    gamma = 1.0 + 0.1 * jax.random.normal(k1, (ch,), jnp.float32)
    beta = 0.1 * jax.random.normal(k2, (ch,), jnp.float32)
    mean = 0.1 * jax.random.normal(k3, (ch,), jnp.float32)
    var = jax.random.uniform(k4, (ch,), jnp.float32, minval=0.5, maxval=1.5)
    return (gamma, beta, mean, var)


def make_repvgg_params(key, in_ch, out_ch):
    k3w, k3b, k1w, k1b, kidb = jax.random.split(key, 5)
    std3 = (2.0 / (out_ch * 9)) ** 0.5          # kaiming fan_out, 3x3
    std1 = (2.0 / out_ch) ** 0.5                # kaiming fan_out, 1x1
    return {
        "w3": jax.random.normal(k3w, (out_ch, in_ch, 3, 3), jnp.float32) * std3,
        "bn3": _make_bn(k3b, out_ch),
        "w1": jax.random.normal(k1w, (out_ch, in_ch, 1, 1), jnp.float32) * std1,
        "bn1": _make_bn(k1b, out_ch),
        "bnid": _make_bn(kidb, in_ch) if in_ch == out_ch else None,
    }


if __name__ == "__main__":
    key = jax.random.PRNGKey(0)
    B, C_in, C_out, H, W, n = 2, 16, 32, 16, 16, 2
    keys = jax.random.split(key, n + 1)

    x = jax.random.normal(keys[0], (B, C_in, H, W), jnp.float32)   # NCHW

    # RepBlock: conv1 = RepVGGBlock(C_in, C_out); block = (n-1) x RepVGGBlock(C_out, C_out)
    block_params, ci = [], C_in
    for i in range(n):
        block_params.append(make_repvgg_params(keys[i + 1], ci, C_out))
        ci = C_out

    out = repblock_forward(x, block_params)
    out = jax.block_until_ready(out)

    assert out.shape == (B, C_out, H, W)
    assert bool(jnp.all(jnp.isfinite(out)))

    ref = repblock_reference(x, block_params)
    scale = float(jnp.max(jnp.abs(ref)))
    err = float(jnp.max(jnp.abs(out - ref)))
    assert err <= 3e-2 * max(1.0, scale), f"max|err|={err} vs scale={scale}"

    print("KERNEL_OK")
</pallas_src>

<mosaic_0001>
module attributes {stable_mosaic.version = 11 : i64} {
  func.func @_repblock_kernel(%arg0: i32, %arg1: memref<1x16x384xbf16, #tpu.memory_space<vmem>>, %arg2: memref<8x384xf32, #tpu.memory_space<vmem>>, %arg3: memref<32x144xbf16, #tpu.memory_space<vmem>>, %arg4: memref<32x1xf32, #tpu.memory_space<vmem>>, %arg5: memref<32x288xbf16, #tpu.memory_space<vmem>>, %arg6: memref<32x1xf32, #tpu.memory_space<vmem>>, %arg7: memref<1x32x384xf32, #tpu.memory_space<vmem>>, %arg8: memref<288x384xbf16, #tpu.memory_space<vmem>>) attributes {dimension_semantics = [#tpu.dimension_semantics<parallel>], iteration_bounds = array<i64: 2>, scalar_prefetch = 0 : i64, scratch_operands = 1 : i64, tpu.core_type = #tpu.core_type<tc>, window_params = [{transform_indices = @transform_0, window_bounds = array<i64: 1, 16, 384>}, {pipeline_mode = #tpu.pipeline_mode<synchronous>, transform_indices = @transform_1, window_bounds = array<i64: 8, 384>}, {pipeline_mode = #tpu.pipeline_mode<synchronous>, transform_indices = @transform_2, window_bounds = array<i64: 32, 144>}, {pipeline_mode = #tpu.pipeline_mode<synchronous>, transform_indices = @transform_3, window_bounds = array<i64: 32, 1>}, {pipeline_mode = #tpu.pipeline_mode<synchronous>, transform_indices = @transform_4, window_bounds = array<i64: 32, 288>}, {pipeline_mode = #tpu.pipeline_mode<synchronous>, transform_indices = @transform_5, window_bounds = array<i64: 32, 1>}, {transform_indices = @transform_6, window_bounds = array<i64: 1, 32, 384>}]} {
    %c0 = arith.constant 0 : index
    %c0_0 = arith.constant 0 : index
    %0 = vector.load %arg2[%c0, %c0_0] : memref<8x384xf32, #tpu.memory_space<vmem>>, vector<1x384xf32>
    %c1 = arith.constant 1 : index
    %c0_1 = arith.constant 0 : index
    %1 = vector.load %arg2[%c1, %c0_1] : memref<8x384xf32, #tpu.memory_space<vmem>>, vector<1x384xf32>
    %c2 = arith.constant 2 : index
    %c0_2 = arith.constant 0 : index
    %2 = vector.load %arg2[%c2, %c0_2] : memref<8x384xf32, #tpu.memory_space<vmem>>, vector<1x384xf32>
    %c0_3 = arith.constant 0 : index
    %c0_4 = arith.constant 0 : index
    %c0_5 = arith.constant 0 : index
    %3 = vector.load %arg1[%c0_3, %c0_4, %c0_5] : memref<1x16x384xbf16, #tpu.memory_space<vmem>>, vector<1x16x384xbf16>
    %4 = vector.shape_cast %3 : vector<1x16x384xbf16> to vector<16x384xbf16>
    %5 = arith.extf %4 : vector<16x384xbf16> to vector<16x384xf32>
    %c0_6 = arith.constant 0 : index
    %c0_7 = arith.constant 0 : index
    %6 = vector.load %arg3[%c0_6, %c0_7] : memref<32x144xbf16, #tpu.memory_space<vmem>>, vector<32x144xbf16>
    %c0_8 = arith.constant 0 : index
    %c0_9 = arith.constant 0 : index
    %7 = vector.load %arg4[%c0_8, %c0_9] : memref<32x1xf32, #tpu.memory_space<vmem>>, vector<32x1xf32>
    %8 = vector.broadcast %0 : vector<1x384xf32> to vector<16x384xf32>
    %9 = arith.mulf %5, %8 : vector<16x384xf32>
    %c17_i32 = arith.constant 17 : i32
    %10 = tpu.dynamic_rotate %9 by %c17_i32 dim 1 : vector<16x384xf32>, i32 -> vector<16x384xf32>
    %11 = vector.broadcast %1 : vector<1x384xf32> to vector<16x384xf32>
    %12 = arith.mulf %10, %11 : vector<16x384xf32>
    %13 = arith.truncf %12 : vector<16x384xf32> to vector<16x384xbf16>
    %c0_10 = arith.constant 0 : index
    %c0_11 = arith.constant 0 : index
    %14 = vector.load %arg8[%c0_10, %c0_11] : memref<288x384xbf16, #tpu.memory_space<vmem>>, vector<16x384xbf16>
    tpu.vector_store %arg8[%c0_10, %c0_11], %13 {strides = array<i32>} : memref<288x384xbf16, #tpu.memory_space<vmem>>, vector<16x384xbf16>,
    %c16_i32 = arith.constant 16 : i32
    %15 = tpu.dynamic_rotate %9 by %c16_i32 dim 1 : vector<16x384xf32>, i32 -> vector<16x384xf32>
    %16 = arith.truncf %15 : vector<16x384xf32> to vector<16x384xbf16>
    %c16 = arith.constant 16 : index
    %c0_12 = arith.constant 0 : index
    %17 = vector.load %arg8[%c16, %c0_12] : memref<288x384xbf16, #tpu.memory_space<vmem>>, vector<16x384xbf16>
    tpu.vector_store %arg8[%c16, %c0_12], %16 {strides = array<i32>} : memref<288x384xbf16, #tpu.memory_space<vmem>>, vector<16x384xbf16>,
    %c15_i32 = arith.constant 15 : i32
    %18 = tpu.dynamic_rotate %9 by %c15_i32 dim 1 : vector<16x384xf32>, i32 -> vector<16x384xf32>
    %19 = vector.broadcast %2 : vector<1x384xf32> to vector<16x384xf32>
    %20 = arith.mulf %18, %19 : vector<16x384xf32>
    %21 = arith.truncf %20 : vector<16x384xf32> to vector<16x384xbf16>
    %c32 = arith.constant 32 : index
    %c0_13 = arith.constant 0 : index
    %22 = vector.load %arg8[%c32, %c0_13] : memref<288x384xbf16, #tpu.memory_space<vmem>>, vector<16x384xbf16>
    tpu.vector_store %arg8[%c32, %c0_13], %21 {strides = array<i32>} : memref<288x384xbf16, #tpu.memory_space<vmem>>, vector<16x384xbf16>,
    %c1_i32 = arith.constant 1 : i32
    %23 = tpu.dynamic_rotate %9 by %c1_i32 dim 1 : vector<16x384xf32>, i32 -> vector<16x384xf32>
    %24 = vector.broadcast %1 : vector<1x384xf32> to vector<16x384xf32>
    %25 = arith.mulf %23, %24 : vector<16x384xf32>
    %26 = arith.truncf %25 : vector<16x384xf32> to vector<16x384xbf16>
    %c48 = arith.constant 48 : index
    %c0_14 = arith.constant 0 : index
    %27 = vector.load %arg8[%c48, %c0_14] : memref<288x384xbf16, #tpu.memory_space<vmem>>, vector<16x384xbf16>
    tpu.vector_store %arg8[%c48, %c0_14], %26 {strides = array<i32>} : memref<288x384xbf16, #tpu.memory_space<vmem>>, vector<16x384xbf16>,
    %28 = arith.truncf %9 : vector<16x384xf32> to vector<16x384xbf16>
    %c64 = arith.constant 64 : index
    %c0_15 = arith.constant 0 : index
    %29 = vector.load %arg8[%c64, %c0_15] : memref<288x384xbf16, #tpu.memory_space<vmem>>, vector<16x384xbf16>
    tpu.vector_store %arg8[%c64, %c0_15], %28 {strides = array<i32>} : memref<288x384xbf16, #tpu.memory_space<vmem>>, vector<16x384xbf16>,
    %c383_i32 = arith.constant 383 : i32
    %30 = tpu.dynamic_rotate %9 by %c383_i32 dim 1 : vector<16x384xf32>, i32 -> vector<16x384xf32>
    %31 = vector.broadcast %2 : vector<1x384xf32> to vector<16x384xf32>
    %32 = arith.mulf %30, %31 : vector<16x384xf32>
    %33 = arith.truncf %32 : vector<16x384xf32> to vector<16x384xbf16>
    %c80 = arith.constant 80 : index
    %c0_16 = arith.constant 0 : index
    %34 = vector.load %arg8[%c80, %c0_16] : memref<288x384xbf16, #tpu.memory_space<vmem>>, vector<16x384xbf16>
    tpu.vector_store %arg8[%c80, %c0_16], %33 {strides = array<i32>} : memref<288x384xbf16, #tpu.memory_space<vmem>>, vector<16x384xbf16>,
    %c369_i32 = arith.constant 369 : i32
    %35 = tpu.dynamic_rotate %9 by %c369_i32 dim 1 : vector<16x384xf32>, i32 -> vector<16x384xf32>
    %36 = vector.broadcast %1 : vector<1x384xf32> to vector<16x384xf32>
    %37 = arith.mulf %35, %36 : vector<16x384xf32>
    %38 = arith.truncf %37 : vector<16x384xf32> to vector<16x384xbf16>
    %c96 = arith.constant 96 : index
    %c0_17 = arith.constant 0 : index
    %39 = vector.load %arg8[%c96, %c0_17] : memref<288x384xbf16, #tpu.memory_space<vmem>>, vector<16x384xbf16>
    tpu.vector_store %arg8[%c96, %c0_17], %38 {strides = array<i32>} : memref<288x384xbf16, #tpu.memory_space<vmem>>, vector<16x384xbf16>,
    %c368_i32 = arith.constant 368 : i32
    %40 = tpu.dynamic_rotate %9 by %c368_i32 dim 1 : vector<16x384xf32>, i32 -> vector<16x384xf32>
    %41 = arith.truncf %40 : vector<16x384xf32> to vector<16x384xbf16>
    %c112 = arith.constant 112 : index
    %c0_18 = arith.constant 0 : index
    %42 = vector.load %arg8[%c112, %c0_18] : memref<288x384xbf16, #tpu.memory_space<vmem>>, vector<16x384xbf16>
    tpu.vector_store %arg8[%c112, %c0_18], %41 {strides = array<i32>} : memref<288x384xbf16, #tpu.memory_space<vmem>>, vector<16x384xbf16>,
    %c367_i32 = arith.constant 367 : i32
    %43 = tpu.dynamic_rotate %9 by %c367_i32 dim 1 : vector<16x384xf32>, i32 -> vector<16x384xf32>
    %44 = vector.broadcast %2 : vector<1x384xf32> to vector<16x384xf32>
    %45 = arith.mulf %43, %44 : vector<16x384xf32>
    %46 = arith.truncf %45 : vector<16x384xf32> to vector<16x384xbf16>
    %c128 = arith.constant 128 : index
    %c0_19 = arith.constant 0 : index
    %47 = vector.load %arg8[%c128, %c0_19] : memref<288x384xbf16, #tpu.memory_space<vmem>>, vector<16x384xbf16>
    tpu.vector_store %arg8[%c128, %c0_19], %46 {strides = array<i32>} : memref<288x384xbf16, #tpu.memory_space<vmem>>, vector<16x384xbf16>,
    %c0_20 = arith.constant 0 : index
    %c0_21 = arith.constant 0 : index
    %48 = vector.load %arg8[%c0_20, %c0_21] : memref<288x384xbf16, #tpu.memory_space<vmem>>, vector<144x384xbf16>
    %cst = arith.constant dense<0.000000e+00> : vector<32x384xf32>
    %49 = tpu.matmul %6, %48, %cst {dimension_numbers = #tpu.dot_dimension_numbers<[1], [0], [0], [1], [0, 0, 1, 1], [], []>} : vector<32x144xbf16>, vector<144x384xbf16>, vector<32x384xf32> -> vector<32x384xf32>
    %50 = vector.broadcast %7 : vector<32x1xf32> to vector<32x384xf32>
    %51 = arith.addf %49, %50 : vector<32x384xf32>
    %cst_22 = arith.constant 0.000000e+00 : f32
    %52 = vector.broadcast %cst_22 : f32 to vector<32x384xf32>
    %53 = arith.maximumf %51, %52 : vector<32x384xf32>
    %c0_23 = arith.constant 0 : index
    %c0_24 = arith.constant 0 : index
    %54 = vector.load %arg5[%c0_23, %c0_24] : memref<32x288xbf16, #tpu.memory_space<vmem>>, vector<32x288xbf16>
    %c0_25 = arith.constant 0 : index
    %c0_26 = arith.constant 0 : index
    %55 = vector.load %arg6[%c0_25, %c0_26] : memref<32x1xf32, #tpu.memory_space<vmem>>, vector<32x1xf32>
    %56 = vector.broadcast %0 : vector<1x384xf32> to vector<32x384xf32>
    %57 = arith.mulf %53, %56 : vector<32x384xf32>
    %c17_i32_27 = arith.constant 17 : i32
    %58 = tpu.dynamic_rotate %57 by %c17_i32_27 dim 1 : vector<32x384xf32>, i32 -> vector<32x384xf32>
    %59 = vector.broadcast %1 : vector<1x384xf32> to vector<32x384xf32>
    %60 = arith.mulf %58, %59 : vector<32x384xf32>
    %61 = arith.truncf %60 : vector<32x384xf32> to vector<32x384xbf16>
    %c0_28 = arith.constant 0 : index
    %c0_29 = arith.constant 0 : index
    %62 = vector.load %arg8[%c0_28, %c0_29] : memref<288x384xbf16, #tpu.memory_space<vmem>>, vector<32x384xbf16>
    tpu.vector_store %arg8[%c0_28, %c0_29], %61 {strides = array<i32>} : memref<288x384xbf16, #tpu.memory_space<vmem>>, vector<32x384xbf16>,
    %c16_i32_30 = arith.constant 16 : i32
    %63 = tpu.dynamic_rotate %57 by %c16_i32_30 dim 1 : vector<32x384xf32>, i32 -> vector<32x384xf32>
    %64 = arith.truncf %63 : vector<32x384xf32> to vector<32x384xbf16>
    %c32_31 = arith.constant 32 : index
    %c0_32 = arith.constant 0 : index
    %65 = vector.load %arg8[%c32_31, %c0_32] : memref<288x384xbf16, #tpu.memory_space<vmem>>, vector<32x384xbf16>
    tpu.vector_store %arg8[%c32_31, %c0_32], %64 {strides = array<i32>} : memref<288x384xbf16, #tpu.memory_space<vmem>>, vector<32x384xbf16>,
    %c15_i32_33 = arith.constant 15 : i32
    %66 = tpu.dynamic_rotate %57 by %c15_i32_33 dim 1 : vector<32x384xf32>, i32 -> vector<32x384xf32>
    %67 = vector.broadcast %2 : vector<1x384xf32> to vector<32x384xf32>
    %68 = arith.mulf %66, %67 : vector<32x384xf32>
    %69 = arith.truncf %68 : vector<32x384xf32> to vector<32x384xbf16>
    %c64_34 = arith.constant 64 : index
    %c0_35 = arith.constant 0 : index
    %70 = vector.load %arg8[%c64_34, %c0_35] : memref<288x384xbf16, #tpu.memory_space<vmem>>, vector<32x384xbf16>
    tpu.vector_store %arg8[%c64_34, %c0_35], %69 {strides = array<i32>} : memref<288x384xbf16, #tpu.memory_space<vmem>>, vector<32x384xbf16>,
    %c1_i32_36 = arith.constant 1 : i32
    %71 = tpu.dynamic_rotate %57 by %c1_i32_36 dim 1 : vector<32x384xf32>, i32 -> vector<32x384xf32>
    %72 = vector.broadcast %1 : vector<1x384xf32> to vector<32x384xf32>
    %73 = arith.mulf %71, %72 : vector<32x384xf32>
    %74 = arith.truncf %73 : vector<32x384xf32> to vector<32x384xbf16>
    %c96_37 = arith.constant 96 : index
    %c0_38 = arith.constant 0 : index
    %75 = vector.load %arg8[%c96_37, %c0_38] : memref<288x384xbf16, #tpu.memory_space<vmem>>, vector<32x384xbf16>
    tpu.vector_store %arg8[%c96_37, %c0_38], %74 {strides = array<i32>} : memref<288x384xbf16, #tpu.memory_space<vmem>>, vector<32x384xbf16>,
    %76 = arith.truncf %57 : vector<32x384xf32> to vector<32x384xbf16>
    %c128_39 = arith.constant 128 : index
    %c0_40 = arith.constant 0 : index
    %77 = vector.load %arg8[%c128_39, %c0_40] : memref<288x384xbf16, #tpu.memory_space<vmem>>, vector<32x384xbf16>
    tpu.vector_store %arg8[%c128_39, %c0_40], %76 {strides = array<i32>} : memref<288x384xbf16, #tpu.memory_space<vmem>>, vector<32x384xbf16>,
    %c383_i32_41 = arith.constant 383 : i32
    %78 = tpu.dynamic_rotate %57 by %c383_i32_41 dim 1 : vector<32x384xf32>, i32 -> vector<32x384xf32>
    %79 = vector.broadcast %2 : vector<1x384xf32> to vector<32x384xf32>
    %80 = arith.mulf %78, %79 : vector<32x384xf32>
    %81 = arith.truncf %80 : vector<32x384xf32> to vector<32x384xbf16>
    %c160 = arith.constant 160 : index
    %c0_42 = arith.constant 0 : index
    %82 = vector.load %arg8[%c160, %c0_42] : memref<288x384xbf16, #tpu.memory_space<vmem>>, vector<32x384xbf16>
    tpu.vector_store %arg8[%c160, %c0_42], %81 {strides = array<i32>} : memref<288x384xbf16, #tpu.memory_space<vmem>>, vector<32x384xbf16>,
    %c369_i32_43 = arith.constant 369 : i32
    %83 = tpu.dynamic_rotate %57 by %c369_i32_43 dim 1 : vector<32x384xf32>, i32 -> vector<32x384xf32>
    %84 = vector.broadcast %1 : vector<1x384xf32> to vector<32x384xf32>
    %85 = arith.mulf %83, %84 : vector<32x384xf32>
    %86 = arith.truncf %85 : vector<32x384xf32> to vector<32x384xbf16>
    %c192 = arith.constant 192 : index
    %c0_44 = arith.constant 0 : index
    %87 = vector.load %arg8[%c192, %c0_44] : memref<288x384xbf16, #tpu.memory_space<vmem>>, vector<32x384xbf16>
    tpu.vector_store %arg8[%c192, %c0_44], %86 {strides = array<i32>} : memref<288x384xbf16, #tpu.memory_space<vmem>>, vector<32x384xbf16>,
    %c368_i32_45 = arith.constant 368 : i32
    %88 = tpu.dynamic_rotate %57 by %c368_i32_45 dim 1 : vector<32x384xf32>, i32 -> vector<32x384xf32>
    %89 = arith.truncf %88 : vector<32x384xf32> to vector<32x384xbf16>
    %c224 = arith.constant 224 : index
    %c0_46 = arith.constant 0 : index
    %90 = vector.load %arg8[%c224, %c0_46] : memref<288x384xbf16, #tpu.memory_space<vmem>>, vector<32x384xbf16>
    tpu.vector_store %arg8[%c224, %c0_46], %89 {strides = array<i32>} : memref<288x384xbf16, #tpu.memory_space<vmem>>, vector<32x384xbf16>,
    %c367_i32_47 = arith.constant 367 : i32
    %91 = tpu.dynamic_rotate %57 by %c367_i32_47 dim 1 : vector<32x384xf32>, i32 -> vector<32x384xf32>
    %92 = vector.broadcast %2 : vector<1x384xf32> to vector<32x384xf32>
    %93 = arith.mulf %91, %92 : vector<32x384xf32>
    %94 = arith.truncf %93 : vector<32x384xf32> to vector<32x384xbf16>
    %c256 = arith.constant 256 : index
    %c0_48 = arith.constant 0 : index
    %95 = vector.load %arg8[%c256, %c0_48] : memref<288x384xbf16, #tpu.memory_space<vmem>>, vector<32x384xbf16>
    tpu.vector_store %arg8[%c256, %c0_48], %94 {strides = array<i32>} : memref<288x384xbf16, #tpu.memory_space<vmem>>, vector<32x384xbf16>,
    %c0_49 = arith.constant 0 : index
    %c0_50 = arith.constant 0 : index
    %96 = vector.load %arg8[%c0_49, %c0_50] : memref<288x384xbf16, #tpu.memory_space<vmem>>, vector<288x384xbf16>
    %cst_51 = arith.constant dense<0.000000e+00> : vector<32x384xf32>
    %97 = tpu.matmul %54, %96, %cst_51 {dimension_numbers = #tpu.dot_dimension_numbers<[1], [0], [0], [1], [0, 0, 1, 1], [], []>} : vector<32x288xbf16>, vector<288x384xbf16>, vector<32x384xf32> -> vector<32x384xf32>
    %98 = vector.broadcast %55 : vector<32x1xf32> to vector<32x384xf32>
    %99 = arith.addf %97, %98 : vector<32x384xf32>
    %cst_52 = arith.constant 0.000000e+00 : f32
    %100 = vector.broadcast %cst_52 : f32 to vector<32x384xf32>
    %101 = arith.maximumf %99, %100 : vector<32x384xf32>
    %c0_53 = arith.constant 0 : index
    %c0_54 = arith.constant 0 : index
    %c0_55 = arith.constant 0 : index
    %102 = vector.load %arg7[%c0_53, %c0_54, %c0_55] : memref<1x32x384xf32, #tpu.memory_space<vmem>>, vector<1x32x384xf32>
    %103 = vector.shape_cast %102 : vector<1x32x384xf32> to vector<32x384xf32>
    %104 = vector.shape_cast %101 : vector<32x384xf32> to vector<1x32x384xf32>
    tpu.vector_store %arg7[%c0_53, %c0_54, %c0_55], %104 {strides = array<i32>} : memref<1x32x384xf32, #tpu.memory_space<vmem>>, vector<1x32x384xf32>,
    return
  }
  func.func @transform_0(%arg0: i32) -> (i32, i32, i32) {
    %c0_i32 = arith.constant 0 : i32
    %c0_i32_0 = arith.constant 0 : i32
    %c0_i32_1 = arith.constant 0 : i32
    return %arg0, %c0_i32, %c0_i32_0 : i32, i32, i32
  }
  func.func @transform_1(%arg0: i32) -> (i32, i32) {
    %c0_i32 = arith.constant 0 : i32
    %c0_i32_0 = arith.constant 0 : i32
    %c0_i32_1 = arith.constant 0 : i32
    return %c0_i32, %c0_i32_0 : i32, i32
  }
  func.func @transform_2(%arg0: i32) -> (i32, i32) {
    %c0_i32 = arith.constant 0 : i32
    %c0_i32_0 = arith.constant 0 : i32
    %c0_i32_1 = arith.constant 0 : i32
    return %c0_i32, %c0_i32_0 : i32, i32
  }
  func.func @transform_3(%arg0: i32) -> (i32, i32) {
    %c0_i32 = arith.constant 0 : i32
    %c0_i32_0 = arith.constant 0 : i32
    %c0_i32_1 = arith.constant 0 : i32
    return %c0_i32, %c0_i32_0 : i32, i32
  }
  func.func @transform_4(%arg0: i32) -> (i32, i32) {
    %c0_i32 = arith.constant 0 : i32
    %c0_i32_0 = arith.constant 0 : i32
    %c0_i32_1 = arith.constant 0 : i32
    return %c0_i32, %c0_i32_0 : i32, i32
  }
  func.func @transform_5(%arg0: i32) -> (i32, i32) {
    %c0_i32 = arith.constant 0 : i32
    %c0_i32_0 = arith.constant 0 : i32
    %c0_i32_1 = arith.constant 0 : i32
    return %c0_i32, %c0_i32_0 : i32, i32
  }
  func.func @transform_6(%arg0: i32) -> (i32, i32, i32) {
    %c0_i32 = arith.constant 0 : i32
    %c0_i32_0 = arith.constant 0 : i32
    %c0_i32_1 = arith.constant 0 : i32
    return %arg0, %c0_i32, %c0_i32_0 : i32, i32, i32
  }
}

module attributes {stable_mosaic.version = 11 : i64} {
  func.func @_repblock_kernel(%arg0: i32, %arg1: memref<1x16x384xbf16, #tpu.memory_space<vmem>>, %arg2: memref<8x384xf32, #tpu.memory_space<vmem>>, %arg3: memref<32x144xbf16, #tpu.memory_space<vmem>>, %arg4: memref<32x1xf32, #tpu.memory_space<vmem>>, %arg5: memref<32x288xbf16, #tpu.memory_space<vmem>>, %arg6: memref<32x1xf32, #tpu.memory_space<vmem>>, %arg7: memref<1x32x384xf32, #tpu.memory_space<vmem>>, %arg8: memref<288x384xbf16, #tpu.memory_space<vmem>>) attributes {dimension_semantics = [#tpu.dimension_semantics<parallel>], iteration_bounds = array<i64: 2>, scalar_prefetch = 0 : i64, scratch_operands = 1 : i64, tpu.core_type = #tpu.core_type<tc>, window_params = [{transform_indices = @transform_0, window_bounds = array<i64: 1, 16, 384>}, {pipeline_mode = #tpu.pipeline_mode<synchronous>, transform_indices = @transform_1, window_bounds = array<i64: 8, 384>}, {pipeline_mode = #tpu.pipeline_mode<synchronous>, transform_indices = @transform_2, window_bounds = array<i64: 32, 144>}, {pipeline_mode = #tpu.pipeline_mode<synchronous>, transform_indices = @transform_3, window_bounds = array<i64: 32, 1>}, {pipeline_mode = #tpu.pipeline_mode<synchronous>, transform_indices = @transform_4, window_bounds = array<i64: 32, 288>}, {pipeline_mode = #tpu.pipeline_mode<synchronous>, transform_indices = @transform_5, window_bounds = array<i64: 32, 1>}, {transform_indices = @transform_6, window_bounds = array<i64: 1, 32, 384>}]} {
    %c0 = arith.constant 0 : index
    %c0_0 = arith.constant 0 : index
    %0 = vector.load %arg2[%c0, %c0_0] : memref<8x384xf32, #tpu.memory_space<vmem>>, vector<1x384xf32>
    %c1 = arith.constant 1 : index
    %c0_1 = arith.constant 0 : index
    %1 = vector.load %arg2[%c1, %c0_1] : memref<8x384xf32, #tpu.memory_space<vmem>>, vector<1x384xf32>
    %c2 = arith.constant 2 : index
    %c0_2 = arith.constant 0 : index
    %2 = vector.load %arg2[%c2, %c0_2] : memref<8x384xf32, #tpu.memory_space<vmem>>, vector<1x384xf32>
    %c0_3 = arith.constant 0 : index
    %c0_4 = arith.constant 0 : index
    %c0_5 = arith.constant 0 : index
    %3 = vector.load %arg1[%c0_3, %c0_4, %c0_5] : memref<1x16x384xbf16, #tpu.memory_space<vmem>>, vector<1x16x384xbf16>
    %4 = vector.shape_cast %3 : vector<1x16x384xbf16> to vector<16x384xbf16>
    %5 = arith.extf %4 : vector<16x384xbf16> to vector<16x384xf32>
    %c0_6 = arith.constant 0 : index
    %c0_7 = arith.constant 0 : index
    %6 = vector.load %arg3[%c0_6, %c0_7] : memref<32x144xbf16, #tpu.memory_space<vmem>>, vector<32x144xbf16>
    %c0_8 = arith.constant 0 : index
    %c0_9 = arith.constant 0 : index
    %7 = vector.load %arg4[%c0_8, %c0_9] : memref<32x1xf32, #tpu.memory_space<vmem>>, vector<32x1xf32>
    %8 = vector.broadcast %0 : vector<1x384xf32> to vector<16x384xf32>
    %9 = arith.mulf %5, %8 : vector<16x384xf32>
    %c17_i32 = arith.constant 17 : i32
    %10 = tpu.dynamic_rotate %9 by %c17_i32 dim 1 : vector<16x384xf32>, i32 -> vector<16x384xf32>
    %11 = vector.broadcast %1 : vector<1x384xf32> to vector<16x384xf32>
    %12 = arith.mulf %10, %11 : vector<16x384xf32>
    %13 = arith.truncf %12 : vector<16x384xf32> to vector<16x384xbf16>
    %c0_10 = arith.constant 0 : index
    %c0_11 = arith.constant 0 : index
    %14 = vector.load %arg8[%c0_10, %c0_11] : memref<288x384xbf16, #tpu.memory_space<vmem>>, vector<16x384xbf16>
    tpu.vector_store %arg8[%c0_10, %c0_11], %13 {strides = array<i32>} : memref<288x384xbf16, #tpu.memory_space<vmem>>, vector<16x384xbf16>,
    %c16_i32 = arith.constant 16 : i32
    %15 = tpu.dynamic_rotate %9 by %c16_i32 dim 1 : vector<16x384xf32>, i32 -> vector<16x384xf32>
    %16 = arith.truncf %15 : vector<16x384xf32> to vector<16x384xbf16>
    %c16 = arith.constant 16 : index
    %c0_12 = arith.constant 0 : index
    %17 = vector.load %arg8[%c16, %c0_12] : memref<288x384xbf16, #tpu.memory_space<vmem>>, vector<16x384xbf16>
    tpu.vector_store %arg8[%c16, %c0_12], %16 {strides = array<i32>} : memref<288x384xbf16, #tpu.memory_space<vmem>>, vector<16x384xbf16>,
    %c15_i32 = arith.constant 15 : i32
    %18 = tpu.dynamic_rotate %9 by %c15_i32 dim 1 : vector<16x384xf32>, i32 -> vector<16x384xf32>
    %19 = vector.broadcast %2 : vector<1x384xf32> to vector<16x384xf32>
    %20 = arith.mulf %18, %19 : vector<16x384xf32>
    %21 = arith.truncf %20 : vector<16x384xf32> to vector<16x384xbf16>
    %c32 = arith.constant 32 : index
    %c0_13 = arith.constant 0 : index
    %22 = vector.load %arg8[%c32, %c0_13] : memref<288x384xbf16, #tpu.memory_space<vmem>>, vector<16x384xbf16>
    tpu.vector_store %arg8[%c32, %c0_13], %21 {strides = array<i32>} : memref<288x384xbf16, #tpu.memory_space<vmem>>, vector<16x384xbf16>,
    %c1_i32 = arith.constant 1 : i32
    %23 = tpu.dynamic_rotate %9 by %c1_i32 dim 1 : vector<16x384xf32>, i32 -> vector<16x384xf32>
    %24 = vector.broadcast %1 : vector<1x384xf32> to vector<16x384xf32>
    %25 = arith.mulf %23, %24 : vector<16x384xf32>
    %26 = arith.truncf %25 : vector<16x384xf32> to vector<16x384xbf16>
    %c48 = arith.constant 48 : index
    %c0_14 = arith.constant 0 : index
    %27 = vector.load %arg8[%c48, %c0_14] : memref<288x384xbf16, #tpu.memory_space<vmem>>, vector<16x384xbf16>
    tpu.vector_store %arg8[%c48, %c0_14], %26 {strides = array<i32>} : memref<288x384xbf16, #tpu.memory_space<vmem>>, vector<16x384xbf16>,
    %28 = arith.truncf %9 : vector<16x384xf32> to vector<16x384xbf16>
    %c64 = arith.constant 64 : index
    %c0_15 = arith.constant 0 : index
    %29 = vector.load %arg8[%c64, %c0_15] : memref<288x384xbf16, #tpu.memory_space<vmem>>, vector<16x384xbf16>
    tpu.vector_store %arg8[%c64, %c0_15], %28 {strides = array<i32>} : memref<288x384xbf16, #tpu.memory_space<vmem>>, vector<16x384xbf16>,
    %c383_i32 = arith.constant 383 : i32
    %30 = tpu.dynamic_rotate %9 by %c383_i32 dim 1 : vector<16x384xf32>, i32 -> vector<16x384xf32>
    %31 = vector.broadcast %2 : vector<1x384xf32> to vector<16x384xf32>
    %32 = arith.mulf %30, %31 : vector<16x384xf32>
    %33 = arith.truncf %32 : vector<16x384xf32> to vector<16x384xbf16>
    %c80 = arith.constant 80 : index
    %c0_16 = arith.constant 0 : index
    %34 = vector.load %arg8[%c80, %c0_16] : memref<288x384xbf16, #tpu.memory_space<vmem>>, vector<16x384xbf16>
    tpu.vector_store %arg8[%c80, %c0_16], %33 {strides = array<i32>} : memref<288x384xbf16, #tpu.memory_space<vmem>>, vector<16x384xbf16>,
    %c369_i32 = arith.constant 369 : i32
    %35 = tpu.dynamic_rotate %9 by %c369_i32 dim 1 : vector<16x384xf32>, i32 -> vector<16x384xf32>
    %36 = vector.broadcast %1 : vector<1x384xf32> to vector<16x384xf32>
    %37 = arith.mulf %35, %36 : vector<16x384xf32>
    %38 = arith.truncf %37 : vector<16x384xf32> to vector<16x384xbf16>
    %c96 = arith.constant 96 : index
    %c0_17 = arith.constant 0 : index
    %39 = vector.load %arg8[%c96, %c0_17] : memref<288x384xbf16, #tpu.memory_space<vmem>>, vector<16x384xbf16>
    tpu.vector_store %arg8[%c96, %c0_17], %38 {strides = array<i32>} : memref<288x384xbf16, #tpu.memory_space<vmem>>, vector<16x384xbf16>,
    %c368_i32 = arith.constant 368 : i32
    %40 = tpu.dynamic_rotate %9 by %c368_i32 dim 1 : vector<16x384xf32>, i32 -> vector<16x384xf32>
    %41 = arith.truncf %40 : vector<16x384xf32> to vector<16x384xbf16>
    %c112 = arith.constant 112 : index
    %c0_18 = arith.constant 0 : index
    %42 = vector.load %arg8[%c112, %c0_18] : memref<288x384xbf16, #tpu.memory_space<vmem>>, vector<16x384xbf16>
    tpu.vector_store %arg8[%c112, %c0_18], %41 {strides = array<i32>} : memref<288x384xbf16, #tpu.memory_space<vmem>>, vector<16x384xbf16>,
    %c367_i32 = arith.constant 367 : i32
    %43 = tpu.dynamic_rotate %9 by %c367_i32 dim 1 : vector<16x384xf32>, i32 -> vector<16x384xf32>
    %44 = vector.broadcast %2 : vector<1x384xf32> to vector<16x384xf32>
    %45 = arith.mulf %43, %44 : vector<16x384xf32>
    %46 = arith.truncf %45 : vector<16x384xf32> to vector<16x384xbf16>
    %c128 = arith.constant 128 : index
    %c0_19 = arith.constant 0 : index
    %47 = vector.load %arg8[%c128, %c0_19] : memref<288x384xbf16, #tpu.memory_space<vmem>>, vector<16x384xbf16>
    tpu.vector_store %arg8[%c128, %c0_19], %46 {strides = array<i32>} : memref<288x384xbf16, #tpu.memory_space<vmem>>, vector<16x384xbf16>,
    %c0_20 = arith.constant 0 : index
    %c0_21 = arith.constant 0 : index
    %48 = vector.load %arg8[%c0_20, %c0_21] : memref<288x384xbf16, #tpu.memory_space<vmem>>, vector<144x384xbf16>
    %cst = arith.constant dense<0.000000e+00> : vector<32x384xf32>
    %49 = tpu.matmul %6, %48, %cst {dimension_numbers = #tpu.dot_dimension_numbers<[1], [0], [0], [1], [0, 0, 1, 1], [], []>} : vector<32x144xbf16>, vector<144x384xbf16>, vector<32x384xf32> -> vector<32x384xf32>
    %50 = vector.broadcast %7 : vector<32x1xf32> to vector<32x384xf32>
    %51 = arith.addf %49, %50 : vector<32x384xf32>
    %cst_22 = arith.constant 0.000000e+00 : f32
    %52 = vector.broadcast %cst_22 : f32 to vector<32x384xf32>
    %53 = arith.maximumf %51, %52 : vector<32x384xf32>
    %c0_23 = arith.constant 0 : index
    %c0_24 = arith.constant 0 : index
    %54 = vector.load %arg5[%c0_23, %c0_24] : memref<32x288xbf16, #tpu.memory_space<vmem>>, vector<32x288xbf16>
    %c0_25 = arith.constant 0 : index
    %c0_26 = arith.constant 0 : index
    %55 = vector.load %arg6[%c0_25, %c0_26] : memref<32x1xf32, #tpu.memory_space<vmem>>, vector<32x1xf32>
    %56 = vector.broadcast %0 : vector<1x384xf32> to vector<32x384xf32>
    %57 = arith.mulf %53, %56 : vector<32x384xf32>
    %c17_i32_27 = arith.constant 17 : i32
    %58 = tpu.dynamic_rotate %57 by %c17_i32_27 dim 1 : vector<32x384xf32>, i32 -> vector<32x384xf32>
    %59 = vector.broadcast %1 : vector<1x384xf32> to vector<32x384xf32>
    %60 = arith.mulf %58, %59 : vector<32x384xf32>
    %61 = arith.truncf %60 : vector<32x384xf32> to vector<32x384xbf16>
    %c0_28 = arith.constant 0 : index
    %c0_29 = arith.constant 0 : index
    %62 = vector.load %arg8[%c0_28, %c0_29] : memref<288x384xbf16, #tpu.memory_space<vmem>>, vector<32x384xbf16>
    tpu.vector_store %arg8[%c0_28, %c0_29], %61 {strides = array<i32>} : memref<288x384xbf16, #tpu.memory_space<vmem>>, vector<32x384xbf16>,
    %c16_i32_30 = arith.constant 16 : i32
    %63 = tpu.dynamic_rotate %57 by %c16_i32_30 dim 1 : vector<32x384xf32>, i32 -> vector<32x384xf32>
    %64 = arith.truncf %63 : vector<32x384xf32> to vector<32x384xbf16>
    %c32_31 = arith.constant 32 : index
    %c0_32 = arith.constant 0 : index
    %65 = vector.load %arg8[%c32_31, %c0_32] : memref<288x384xbf16, #tpu.memory_space<vmem>>, vector<32x384xbf16>
    tpu.vector_store %arg8[%c32_31, %c0_32], %64 {strides = array<i32>} : memref<288x384xbf16, #tpu.memory_space<vmem>>, vector<32x384xbf16>,
    %c15_i32_33 = arith.constant 15 : i32
    %66 = tpu.dynamic_rotate %57 by %c15_i32_33 dim 1 : vector<32x384xf32>, i32 -> vector<32x384xf32>
    %67 = vector.broadcast %2 : vector<1x384xf32> to vector<32x384xf32>
    %68 = arith.mulf %66, %67 : vector<32x384xf32>
    %69 = arith.truncf %68 : vector<32x384xf32> to vector<32x384xbf16>
    %c64_34 = arith.constant 64 : index
    %c0_35 = arith.constant 0 : index
    %70 = vector.load %arg8[%c64_34, %c0_35] : memref<288x384xbf16, #tpu.memory_space<vmem>>, vector<32x384xbf16>
    tpu.vector_store %arg8[%c64_34, %c0_35], %69 {strides = array<i32>} : memref<288x384xbf16, #tpu.memory_space<vmem>>, vector<32x384xbf16>,
    %c1_i32_36 = arith.constant 1 : i32
    %71 = tpu.dynamic_rotate %57 by %c1_i32_36 dim 1 : vector<32x384xf32>, i32 -> vector<32x384xf32>
    %72 = vector.broadcast %1 : vector<1x384xf32> to vector<32x384xf32>
    %73 = arith.mulf %71, %72 : vector<32x384xf32>
    %74 = arith.truncf %73 : vector<32x384xf32> to vector<32x384xbf16>
    %c96_37 = arith.constant 96 : index
    %c0_38 = arith.constant 0 : index
    %75 = vector.load %arg8[%c96_37, %c0_38] : memref<288x384xbf16, #tpu.memory_space<vmem>>, vector<32x384xbf16>
    tpu.vector_store %arg8[%c96_37, %c0_38], %74 {strides = array<i32>} : memref<288x384xbf16, #tpu.memory_space<vmem>>, vector<32x384xbf16>,
    %76 = arith.truncf %57 : vector<32x384xf32> to vector<32x384xbf16>
    %c128_39 = arith.constant 128 : index
    %c0_40 = arith.constant 0 : index
    %77 = vector.load %arg8[%c128_39, %c0_40] : memref<288x384xbf16, #tpu.memory_space<vmem>>, vector<32x384xbf16>
    tpu.vector_store %arg8[%c128_39, %c0_40], %76 {strides = array<i32>} : memref<288x384xbf16, #tpu.memory_space<vmem>>, vector<32x384xbf16>,
    %c383_i32_41 = arith.constant 383 : i32
    %78 = tpu.dynamic_rotate %57 by %c383_i32_41 dim 1 : vector<32x384xf32>, i32 -> vector<32x384xf32>
    %79 = vector.broadcast %2 : vector<1x384xf32> to vector<32x384xf32>
    %80 = arith.mulf %78, %79 : vector<32x384xf32>
    %81 = arith.truncf %80 : vector<32x384xf32> to vector<32x384xbf16>
    %c160 = arith.constant 160 : index
    %c0_42 = arith.constant 0 : index
    %82 = vector.load %arg8[%c160, %c0_42] : memref<288x384xbf16, #tpu.memory_space<vmem>>, vector<32x384xbf16>
    tpu.vector_store %arg8[%c160, %c0_42], %81 {strides = array<i32>} : memref<288x384xbf16, #tpu.memory_space<vmem>>, vector<32x384xbf16>,
    %c369_i32_43 = arith.constant 369 : i32
    %83 = tpu.dynamic_rotate %57 by %c369_i32_43 dim 1 : vector<32x384xf32>, i32 -> vector<32x384xf32>
    %84 = vector.broadcast %1 : vector<1x384xf32> to vector<32x384xf32>
    %85 = arith.mulf %83, %84 : vector<32x384xf32>
    %86 = arith.truncf %85 : vector<32x384xf32> to vector<32x384xbf16>
    %c192 = arith.constant 192 : index
    %c0_44 = arith.constant 0 : index
    %87 = vector.load %arg8[%c192, %c0_44] : memref<288x384xbf16, #tpu.memory_space<vmem>>, vector<32x384xbf16>
    tpu.vector_store %arg8[%c192, %c0_44], %86 {strides = array<i32>} : memref<288x384xbf16, #tpu.memory_space<vmem>>, vector<32x384xbf16>,
    %c368_i32_45 = arith.constant 368 : i32
    %88 = tpu.dynamic_rotate %57 by %c368_i32_45 dim 1 : vector<32x384xf32>, i32 -> vector<32x384xf32>
    %89 = arith.truncf %88 : vector<32x384xf32> to vector<32x384xbf16>
    %c224 = arith.constant 224 : index
    %c0_46 = arith.constant 0 : index
    %90 = vector.load %arg8[%c224, %c0_46] : memref<288x384xbf16, #tpu.memory_space<vmem>>, vector<32x384xbf16>
    tpu.vector_store %arg8[%c224, %c0_46], %89 {strides = array<i32>} : memref<288x384xbf16, #tpu.memory_space<vmem>>, vector<32x384xbf16>,
    %c367_i32_47 = arith.constant 367 : i32
    %91 = tpu.dynamic_rotate %57 by %c367_i32_47 dim 1 : vector<32x384xf32>, i32 -> vector<32x384xf32>
    %92 = vector.broadcast %2 : vector<1x384xf32> to vector<32x384xf32>
    %93 = arith.mulf %91, %92 : vector<32x384xf32>
    %94 = arith.truncf %93 : vector<32x384xf32> to vector<32x384xbf16>
    %c256 = arith.constant 256 : index
    %c0_48 = arith.constant 0 : index
    %95 = vector.load %arg8[%c256, %c0_48] : memref<288x384xbf16, #tpu.memory_space<vmem>>, vector<32x384xbf16>
    tpu.vector_store %arg8[%c256, %c0_48], %94 {strides = array<i32>} : memref<288x384xbf16, #tpu.memory_space<vmem>>, vector<32x384xbf16>,
    %c0_49 = arith.constant 0 : index
    %c0_50 = arith.constant 0 : index
    %96 = vector.load %arg8[%c0_49, %c0_50] : memref<288x384xbf16, #tpu.memory_space<vmem>>, vector<288x384xbf16>
    %cst_51 = arith.constant dense<0.000000e+00> : vector<32x384xf32>
    %97 = tpu.matmul %54, %96, %cst_51 {dimension_numbers = #tpu.dot_dimension_numbers<[1], [0], [0], [1], [0, 0, 1, 1], [], []>} : vector<32x288xbf16>, vector<288x384xbf16>, vector<32x384xf32> -> vector<32x384xf32>
    %98 = vector.broadcast %55 : vector<32x1xf32> to vector<32x384xf32>
    %99 = arith.addf %97, %98 : vector<32x384xf32>
    %cst_52 = arith.constant 0.000000e+00 : f32
    %100 = vector.broadcast %cst_52 : f32 to vector<32x384xf32>
    %101 = arith.maximumf %99, %100 : vector<32x384xf32>
    %c0_53 = arith.constant 0 : index
    %c0_54 = arith.constant 0 : index
    %c0_55 = arith.constant 0 : index
    %102 = vector.load %arg7[%c0_53, %c0_54, %c0_55] : memref<1x32x384xf32, #tpu.memory_space<vmem>>, vector<1x32x384xf32>
    %103 = vector.shape_cast %102 : vector<1x32x384xf32> to vector<32x384xf32>
    %104 = vector.shape_cast %101 : vector<32x384xf32> to vector<1x32x384xf32>
    tpu.vector_store %arg7[%c0_53, %c0_54, %c0_55], %104 {strides = array<i32>} : memref<1x32x384xf32, #tpu.memory_space<vmem>>, vector<1x32x384xf32>,
    return
  }
  func.func @transform_0(%arg0: i32) -> (i32, i32, i32) {
    %c0_i32 = arith.constant 0 : i32
    %c0_i32_0 = arith.constant 0 : i32
    %c0_i32_1 = arith.constant 0 : i32
    return %arg0, %c0_i32, %c0_i32_0 : i32, i32, i32
  }
  func.func @transform_1(%arg0: i32) -> (i32, i32) {
    %c0_i32 = arith.constant 0 : i32
    %c0_i32_0 = arith.constant 0 : i32
    %c0_i32_1 = arith.constant 0 : i32
    return %c0_i32, %c0_i32_0 : i32, i32
  }
  func.func @transform_2(%arg0: i32) -> (i32, i32) {
    %c0_i32 = arith.constant 0 : i32
    %c0_i32_0 = arith.constant 0 : i32
    %c0_i32_1 = arith.constant 0 : i32
    return %c0_i32, %c0_i32_0 : i32, i32
  }
  func.func @transform_3(%arg0: i32) -> (i32, i32) {
    %c0_i32 = arith.constant 0 : i32
    %c0_i32_0 = arith.constant 0 : i32
    %c0_i32_1 = arith.constant 0 : i32
    return %c0_i32, %c0_i32_0 : i32, i32
  }
  func.func @transform_4(%arg0: i32) -> (i32, i32) {
    %c0_i32 = arith.constant 0 : i32
    %c0_i32_0 = arith.constant 0 : i32
    %c0_i32_1 = arith.constant 0 : i32
    return %c0_i32, %c0_i32_0 : i32, i32
  }
  func.func @transform_5(%arg0: i32) -> (i32, i32) {
    %c0_i32 = arith.constant 0 : i32
    %c0_i32_0 = arith.constant 0 : i32
    %c0_i32_1 = arith.constant 0 : i32
    return %c0_i32, %c0_i32_0 : i32, i32
  }
  func.func @transform_6(%arg0: i32) -> (i32, i32, i32) {
    %c0_i32 = arith.constant 0 : i32
    %c0_i32_0 = arith.constant 0 : i32
    %c0_i32_1 = arith.constant 0 : i32
    return %arg0, %c0_i32, %c0_i32_0 : i32, i32, i32
  }
}

</mosaic_0001>

<llo_original>
// kernel: tpu_custom_call.1
$region0: #{tpu_custom_call.1}
  #allocation0 [shape = 'u32[]', space=smem, size = 0x4, offset = 0x4, fixed_abs, tag = 'smem constant byte address 0x4 - core index']
  #allocation1 [shape = 'u32[72,128]{1,0:T(1,128)}', space=vmem, size = 0x9000, scoped, tag = 'internal scratch']
  #allocation2 [shape = 'bf16[288,384]{1,0:T(8,128)(2,1)}', space=vmem, size = 0x36000, scoped, tag = 'scratch operand']
  %s0 = inlined_call_operand.vmem [shape: bf16[2,16,384], index: 0, kind: input, shape index: {}]
  %s1 = inlined_call_operand.hbm [shape: f32[8,384], index: 1, kind: input, shape index: {}]
  %s2 = inlined_call_operand.hbm [shape: bf16[32,144], index: 2, kind: input, shape index: {}]
  %s3 = inlined_call_operand.vmem [shape: f32[32,1], index: 3, kind: input, shape index: {}]
  %s4 = inlined_call_operand.hbm [shape: bf16[32,288], index: 4, kind: input, shape index: {}]
  %s5 = inlined_call_operand.vmem [shape: f32[32,1], index: 5, kind: input, shape index: {}]
  %s6 = inlined_call_operand.hbm [shape: f32[2,32,384], index: 6, kind: output, shape index: {}]
  %s7 = sld [smem:[#allocation0]]
  $region69: #{tpu_custom_call.1} parent=0
    _
  %s9 = ssub.s32 1, %s7
  %s10 = scalar_select 0, %s9, %s7
  $region1: #{tpu_custom_call.1} parent=0
    #allocation3 [shape = 'u8[12288]{0}', space=vmem, size = 0x3000, scoped, tag = 'input window, operand 1, single buffered']
    #allocation4 [shape = 's32[2]{0}', space=sflag, size = 0x8, scoped, tag = 'scoped memory for tpu_custom_call.1']
    #allocation5 [shape = 's32[2]{0}', space=sflag, size = 0x8, scoped, tag = 'scoped memory for tpu_custom_call.1']
    #allocation6 [shape = 'u8[16384]{0}', space=vmem, size = 0x4000, scoped, tag = 'input window, operand 2, single buffered']
    #allocation7 [shape = 's32[1]{0}', space=sflag, size = 0x4, scoped, tag = 'scoped memory for tpu_custom_call.1']
    #allocation8 [shape = 'u8[24576]{0}', space=vmem, size = 0x6000, scoped, tag = 'input window, operand 4, single buffered']
    #allocation9 [shape = 'u8[98304]{0}', space=vmem, size = 0x18000, scoped, tag = 'output window, operand 0']
    %11 = vsyncpa [#allocation4], 0
    %12 = vsyncpa [#allocation7], 0
    %13 = vsyncpa [#allocation5], 0
    %s14 = scalar_lea.sflag [#allocation5], 1
    %15 = vsyncpa %s14, 0
    loop: start=0, step=1, limit=4
    $region2: #{tpu_custom_call.1} parent=1 // loop_pre_header
      _
    $region3: #{tpu_custom_call.1} parent=1 // loop_header
      %s17 = sphi 0, %s21
      %p18 = scmp.ge.s32.totalorder %s17, 4
      %s27 = sphi 0, %s29
      %s30 = sphi 0, %s27
      %s31 = sphi 0, %s30
      %s47 = sphi 0, %s31
      %s51 = sphi 0, %s51
      %s53 = sphi 0, %s51
      %s54 = sphi 0, %s53
      %s68 = sphi 0, %s54
      %s72 = sphi 0, %s72
      %s74 = sphi 0, %s72
      %s75 = sphi 0, %s74
      %s89 = sphi 0, %s75
      %s93 = sphi 0, %s93
      %s95 = sphi 0, %s93
      %s96 = sphi 0, %s95
      %s110 = sphi 0, %s96
      %s114 = sphi 0, %s114
      %s116 = sphi 0, %s114
      %s117 = sphi 0, %s116
      %s131 = sphi 0, %s117
      %s135 = sphi 0, %s135
      %s137 = sphi 0, %s135
      %s138 = sphi 0, %s137
      %s152 = sphi 0, %s138
      %s158 = sphi 0, %s160
      %s161 = sphi 0, %s158
      %s162 = sphi 0, %s161
      %s178 = sphi 0, %s162
    $region4: #{tpu_custom_call.1} parent=1 // loop_header_branch
      %20 = sbr.rel (%p18) target = $region8
    $region5: #{tpu_custom_call.1} parent=1 // loop_body
      %s22 = ssub.s32 %s17, 1
      %s23 = ssub.s32 %s17, 2
      %s24 = sadd.s32 %s17, 1
      %s25 = ssub.s32 %s17, %s24
      %p26 = scmp.eq.s32.totalorder %s25, 0
      %s28 = sadd.s32 %s27, 1
      %s29 = scalar_select %p26, %s27, %s28
      %p32 = pneg %p26
      %p33 = scmp.eq.s32.totalorder %s17, 1
      %p34 = por %p32, %p33
      %p35 = scmp.ne.s32.totalorder %s27, %s30
      %p36 = scmp.eq.s32.totalorder %s17, 0
      %p37 = por %p35, %p36
      %p38 = scmp.ne.s32.totalorder %s27, %s30
      %p39 = scmp.eq.s32.totalorder %s22, 1
      %p40 = por %p38, %p39
      %p41 = scmp.ne.s32.totalorder %s30, %s31
      %p42 = scmp.eq.s32.totalorder %s22, 0
      %p43 = por %p41, %p42
      %p44 = scmp.ne.s32.totalorder %s30, %s31
      %p45 = scmp.eq.s32.totalorder %s23, 1
      %p46 = por %p44, %p45
      %p48 = scmp.ne.s32.totalorder %s31, %s47
      %p49 = scmp.eq.s32.totalorder %s23, 0
      %p50 = por %p48, %p49
      %s52 = sadd.s32 %s51, 1
      %p55 = scmp.eq.s32.totalorder %s17, 1
      %p56 = scmp.ne.s32.totalorder %s51, %s53
      %p57 = scmp.eq.s32.totalorder %s17, 0
      %p58 = por %p56, %p57
      %p59 = scmp.ne.s32.totalorder %s51, %s53
      %p60 = scmp.eq.s32.totalorder %s22, 1
      %p61 = por %p59, %p60
      %p62 = scmp.ne.s32.totalorder %s53, %s54
      %p63 = scmp.eq.s32.totalorder %s22, 0
      %p64 = por %p62, %p63
      %p65 = scmp.ne.s32.totalorder %s53, %s54
      %p66 = scmp.eq.s32.totalorder %s23, 1
      %p67 = por %p65, %p66
      %p69 = scmp.ne.s32.totalorder %s54, %s68
      %p70 = scmp.eq.s32.totalorder %s23, 0
      %p71 = por %p69, %p70
      %s73 = sadd.s32 %s72, 1
      %p76 = scmp.eq.s32.totalorder %s17, 1
      %p77 = scmp.ne.s32.totalorder %s72, %s74
      %p78 = scmp.eq.s32.totalorder %s17, 0
      %p79 = por %p77, %p78
      %p80 = scmp.ne.s32.totalorder %s72, %s74
      %p81 = scmp.eq.s32.totalorder %s22, 1
      %p82 = por %p80, %p81
      %p83 = scmp.ne.s32.totalorder %s74, %s75
      %p84 = scmp.eq.s32.totalorder %s22, 0
      %p85 = por %p83, %p84
      %p86 = scmp.ne.s32.totalorder %s74, %s75
      %p87 = scmp.eq.s32.totalorder %s23, 1
      %p88 = por %p86, %p87
      %p90 = scmp.ne.s32.totalorder %s75, %s89
      %p91 = scmp.eq.s32.totalorder %s23, 0
      %p92 = por %p90, %p91
      %s94 = sadd.s32 %s93, 1
      %p97 = scmp.eq.s32.totalorder %s17, 1
      %p98 = scmp.ne.s32.totalorder %s93, %s95
      %p99 = scmp.eq.s32.totalorder %s17, 0
      %p100 = por %p98, %p99
      %p101 = scmp.ne.s32.totalorder %s93, %s95
      %p102 = scmp.eq.s32.totalorder %s22, 1
      %p103 = por %p101, %p102
      %p104 = scmp.ne.s32.totalorder %s95, %s96
      %p105 = scmp.eq.s32.totalorder %s22, 0
      %p106 = por %p104, %p105
      %p107 = scmp.ne.s32.totalorder %s95, %s96
      %p108 = scmp.eq.s32.totalorder %s23, 1
      %p109 = por %p107, %p108
      %p111 = scmp.ne.s32.totalorder %s96, %s110
      %p112 = scmp.eq.s32.totalorder %s23, 0
      %p113 = por %p111, %p112
      %s115 = sadd.s32 %s114, 1
      %p118 = scmp.eq.s32.totalorder %s17, 1
      %p119 = scmp.ne.s32.totalorder %s114, %s116
      %p120 = scmp.eq.s32.totalorder %s17, 0
      %p121 = por %p119, %p120
      %p122 = scmp.ne.s32.totalorder %s114, %s116
      %p123 = scmp.eq.s32.totalorder %s22, 1
      %p124 = por %p122, %p123
      %p125 = scmp.ne.s32.totalorder %s116, %s117
      %p126 = scmp.eq.s32.totalorder %s22, 0
      %p127 = por %p125, %p126
      %p128 = scmp.ne.s32.totalorder %s116, %s117
      %p129 = scmp.eq.s32.totalorder %s23, 1
      %p130 = por %p128, %p129
      %p132 = scmp.ne.s32.totalorder %s117, %s131
      %p133 = scmp.eq.s32.totalorder %s23, 0
      %p134 = por %p132, %p133
      %s136 = sadd.s32 %s135, 1
      %p139 = scmp.eq.s32.totalorder %s17, 1
      %p140 = scmp.ne.s32.totalorder %s135, %s137
      %p141 = scmp.eq.s32.totalorder %s17, 0
      %p142 = por %p140, %p141
      %p143 = scmp.ne.s32.totalorder %s135, %s137
      %p144 = scmp.eq.s32.totalorder %s22, 1
      %p145 = por %p143, %p144
      %p146 = scmp.ne.s32.totalorder %s137, %s138
      %p147 = scmp.eq.s32.totalorder %s22, 0
      %p148 = por %p146, %p147
      %p149 = scmp.ne.s32.totalorder %s137, %s138
      %p150 = scmp.eq.s32.totalorder %s23, 1
      %p151 = por %p149, %p150
      %p153 = scmp.ne.s32.totalorder %s138, %s152
      %p154 = scmp.eq.s32.totalorder %s23, 0
      %p155 = por %p153, %p154
      %s156 = ssub.s32 %s17, %s24
      %p157 = scmp.eq.s32.totalorder %s156, 0
      %s159 = sadd.s32 %s158, 1
      %s160 = scalar_select %p157, %s158, %s159
      %p163 = pneg %p157
      %p164 = scmp.eq.s32.totalorder %s17, 1
      %p165 = por %p163, %p164
      %p166 = scmp.ne.s32.totalorder %s158, %s161
      %p167 = scmp.eq.s32.totalorder %s17, 0
      %p168 = por %p166, %p167
      %p169 = scmp.ne.s32.totalorder %s158, %s161
      %p170 = scmp.eq.s32.totalorder %s22, 1
      %p171 = por %p169, %p170
      %p172 = scmp.ne.s32.totalorder %s161, %s162
      %p173 = scmp.eq.s32.totalorder %s22, 0
      %p174 = por %p172, %p173
      %p175 = scmp.ne.s32.totalorder %s161, %s162
      %p176 = scmp.eq.s32.totalorder %s23, 1
      %p177 = por %p175, %p176
      %p179 = scmp.ne.s32.totalorder %s162, %s178
      %p180 = scmp.eq.s32.totalorder %s23, 0
      %p181 = por %p179, %p180
      %p182 = scmp.le.s32.totalorder 1, %s17
      %p183 = scmp.lt.s32.totalorder %s17, 3
      %p184 = pnand %p182, %p183
      %p185 = pneg %p184
      // Predicated region
      $region9: #{tpu_custom_call.1} parent=5 // pred_check
        _
      $region10: #{tpu_custom_call.1} parent=5 // pred_check_branch
        %187 = sbr.rel (%p184) target = $region12
      $region11: #{tpu_custom_call.1} parent=5 // pred_region
        %s188 = ssub.s32 %s17, 1
        // Predicated region
        $region13: #{tpu_custom_call.1} parent=11 // pred_check
          %p189 = pneg %p64
        $region14: #{tpu_custom_call.1} parent=11 // pred_check_branch
          %191 = sbr.rel (%p189) target = $region16
        $region15: #{tpu_custom_call.1} parent=11 // pred_region
          %193 = vsyncadd [#allocation4], 0
          %s195 = sshll.u32 %s1, 4
          %s196 = int_to_ptr.hbm [resolvable:$true] %s195
          %s197 = sshll.u32 [#allocation3], 4
          %s198 = int_to_ptr.vmem [resolvable:$true] %s197
          %200 = dma.hbm_to_vmem [thread:$0]  %s196, 384, %s198, [#allocation4]
        $region16: #{tpu_custom_call.1} parent=11 // pred_fallthru
          _
        // Predicated region
        $region17: #{tpu_custom_call.1} parent=11 // pred_check
          %p201 = pneg %p85
        $region18: #{tpu_custom_call.1} parent=11 // pred_check_branch
          %203 = sbr.rel (%p201) target = $region20
        $region19: #{tpu_custom_call.1} parent=11 // pred_region
          %205 = vsyncadd [#allocation7], 0
          %s206 = sshll.u32 %s2, 4
          %s207 = int_to_ptr.hbm [resolvable:$true] %s206
          %s208 = sshll.u32 [#allocation6], 4
          %s209 = int_to_ptr.vmem [resolvable:$true] %s208
          %214 = dma.hbm_to_vmem [thread:$0]  %s207, 512, %s209, [#allocation7], 128, 128, 8
        $region20: #{tpu_custom_call.1} parent=11 // pred_fallthru
          _
        // Predicated region
        $region21: #{tpu_custom_call.1} parent=11 // pred_check
          %p215 = pneg %p106
        $region22: #{tpu_custom_call.1} parent=11 // pred_check_branch
          %217 = sbr.rel (%p215) target = $region24
        $region23: #{tpu_custom_call.1} parent=11 // pred_region
          _
        $region24: #{tpu_custom_call.1} parent=11 // pred_fallthru
          _
        // Predicated region
        $region25: #{tpu_custom_call.1} parent=11 // pred_check
          %p218 = pneg %p127
        $region26: #{tpu_custom_call.1} parent=11 // pred_check_branch
          %220 = sbr.rel (%p218) target = $region28
        $region27: #{tpu_custom_call.1} parent=11 // pred_region
          %222 = vsyncadd [#allocation7], 0
          %s223 = sshll.u32 %s4, 4
          %s224 = int_to_ptr.hbm [resolvable:$true] %s223
          %s225 = sshll.u32 [#allocation8], 4
          %s226 = int_to_ptr.vmem [resolvable:$true] %s225
          %231 = dma.hbm_to_vmem [thread:$0]  %s224, 768, %s226, [#allocation7], 192, 192, 12
        $region28: #{tpu_custom_call.1} parent=11 // pred_fallthru
          _
        // Predicated region
        $region29: #{tpu_custom_call.1} parent=11 // pred_check
          %p232 = pneg %p148
        $region30: #{tpu_custom_call.1} parent=11 // pred_check_branch
          %234 = sbr.rel (%p232) target = $region32
        $region31: #{tpu_custom_call.1} parent=11 // pred_region
          _
        $region32: #{tpu_custom_call.1} parent=11 // pred_fallthru
          _
      $region12: #{tpu_custom_call.1} parent=5 // pred_fallthru
        _
      %p235 = scmp.lt.s32.totalorder %s17, 2
      // Predicated region
      $region33: #{tpu_custom_call.1} parent=5 // pred_check
        %p236 = pneg %p235
      $region34: #{tpu_custom_call.1} parent=5 // pred_check_branch
        %238 = sbr.rel (%p236) target = $region36
      $region35: #{tpu_custom_call.1} parent=5 // pred_region
        // Predicated region
        $region37: #{tpu_custom_call.1} parent=35 // pred_check
          %p239 = pneg %p37
        $region38: #{tpu_custom_call.1} parent=35 // pred_check_branch
          %241 = sbr.rel (%p239) target = $region40
        $region39: #{tpu_custom_call.1} parent=35 // pred_region
          %p242 = scmp.lt.s32.totalorder %s17, 1
          %s243 = scalar_select %p242, %s17, 1
          %s244 = smul.addr %s243, 6
          %s245 = smul.addr %s244, 4
          %s246 = scalar_lea.vmem %s0, %s245
        $region40: #{tpu_custom_call.1} parent=35 // pred_fallthru
          _
      $region36: #{tpu_custom_call.1} parent=5 // pred_fallthru
        _
      %p247 = scmp.le.s32.totalorder 1, %s17
      %p248 = scmp.lt.s32.totalorder %s17, 3
      %p249 = pnand %p247, %p248
      %p250 = pneg %p249
      // Predicated region
      $region41: #{tpu_custom_call.1} parent=5 // pred_check
        _
      $region42: #{tpu_custom_call.1} parent=5 // pred_check_branch
        %252 = sbr.rel (%p249) target = $region44
      $region43: #{tpu_custom_call.1} parent=5 // pred_region
        %s253 = ssub.s32 %s17, 1
        // Predicated region
        $region45: #{tpu_custom_call.1} parent=43 // pred_check
          %p254 = pneg %p64
        $region46: #{tpu_custom_call.1} parent=43 // pred_check_branch
          %256 = sbr.rel (%p254) target = $region48
        $region47: #{tpu_custom_call.1} parent=43 // pred_region
          %258 = dma.done [#allocation4], 384
        $region48: #{tpu_custom_call.1} parent=43 // pred_fallthru
          _
        // Predicated region
        $region49: #{tpu_custom_call.1} parent=43 // pred_check
          %p259 = pneg %p85
        $region50: #{tpu_custom_call.1} parent=43 // pred_check_branch
          %261 = sbr.rel (%p259) target = $region52
        $region51: #{tpu_custom_call.1} parent=43 // pred_region
          %263 = dma.done [#allocation7], 512
        $region52: #{tpu_custom_call.1} parent=43 // pred_fallthru
          _
        // Predicated region
        $region53: #{tpu_custom_call.1} parent=43 // pred_check
          %p264 = pneg %p127
        $region54: #{tpu_custom_call.1} parent=43 // pred_check_branch
          %266 = sbr.rel (%p264) target = $region56
        $region55: #{tpu_custom_call.1} parent=43 // pred_region
          %268 = dma.done [#allocation7], 768
        $region56: #{tpu_custom_call.1} parent=43 // pred_fallthru
          _
        %p269 = scmp.lt.s32.totalorder %s22, 1
        %s270 = scalar_select %p269, %s22, 1
        %s271 = smul.addr %s270, 6
        %s272 = smul.addr %s271, 4
        %s273 = scalar_lea.vmem %s0, %s272
        %p274 = pneg %p43
        %p275 = pneg %p40
        %p276 = pneg %p64
        %p277 = pneg %p61
        %p278 = pneg %p85
        %p279 = pneg %p82
        %p280 = pneg %p106
        %p281 = pneg %p103
        %p282 = pneg %p127
        %p283 = pneg %p124
        %p284 = pneg %p148
        %p285 = pneg %p145
        %p286 = pneg %p174
        %p287 = pneg %p171
        %s288 = sand.u32 %s161, 1
        %s289 = scalar_lea.sflag [#allocation5], %s288
        %s290 = sand.u32 %s161, 1
        %s291 = smul.addr %s290, 96
        %s292 = scalar_lea.vmem [#allocation9], %s291
        %p293 = scmp.lt.s32.totalorder %s22, 1
        %s294 = scalar_select %p293, %s22, 1
        %s295 = smul.addr %s294, 6
        %s296 = smul.addr %s295, 4
        %s297 = scalar_lea.vmem %s0, %s296
        %v299 = vld [vmem:[#allocation3] ss:$8 sm:$0x7]
        %s300 = scalar_lea.vmem [#allocation3], 1
        %v301 = vld [vmem:[%s300] ss:$8 sm:$0x7]
        %s302 = scalar_lea.vmem [#allocation3], 2
        %v303 = vld [vmem:[%s302] ss:$8 sm:$0x7]
        %v304 = vld [vmem:[%s297] sm:$0xff]
        %v305 = vld [vmem:[%s297 + $0x8] sm:$0xf]
        %v306 = vld [vmem:[%s297 + $0xc] sm:$0xff]
        %v307 = vld [vmem:[%s297 + $0x14] sm:$0xf]
        %v308 = vunpack.c.l.bf16 %v304
        %v309 = vunpack.c.h.bf16 %v304
        %v310 = vunpack.c.l.bf16 %v305
        %v311 = vunpack.c.l.bf16 %v306
        %v312 = vunpack.c.h.bf16 %v306
        %v313 = vunpack.c.l.bf16 %v307
        %v314 = vld [vmem:[#allocation6] sm:$0xff]
        %v315 = vld [vmem:[#allocation6 + $0x8] sm:$0xff]
        %v316 = vld [vmem:[#allocation6 + $0x10] sm:$0xff]
        %v317 = vld [vmem:[#allocation6 + $0x18] sm:$0xff]
        %v318 = vld [vmem:[%s3] sm:$0xff]
        %v319 = vld [vmem:[%s3 + $0x8] sm:$0xff]
        %v320 = vld [vmem:[%s3 + $0x10] sm:$0xff]
        %v321 = vld [vmem:[%s3 + $0x18] sm:$0xff]
        %v323 = vperm.slane %v299, 0
        %v324 = vperm.slane %v299, 1
        %v325 = vperm.slane %v299, 2
        %v329 = vmul.f32 %v308, %v323
        %v330 = vmul.f32 %v309, %v324
        %v331 = vmul.f32 %v310, %v325
        %v332 = vmul.f32 %v311, %v323
        %v333 = vmul.f32 %v312, %v324
        %v334 = vmul.f32 %v313, %v325
        %335 = vrot.lane.b32.xlu0 %v329, 17
        %v336 = vpop.permute.xlu0 %335
        %337 = vrot.lane.b32.xlu0 %v332, 17
        %v338 = vpop.permute.xlu0 %337
        %339 = vrot.lane.b32.xlu0 %v330, 17
        %v340 = vpop.permute.xlu0 %339
        %341 = vrot.lane.b32.xlu0 %v333, 17
        %v342 = vpop.permute.xlu0 %341
        %343 = vrot.lane.b32.xlu0 %v331, 17
        %v344 = vpop.permute.xlu0 %343
        %345 = vrot.lane.b32.xlu0 %v334, 17
        %v346 = vpop.permute.xlu0 %345
        %v347 = vlaneseq
        %v348 = vand.u32 %v347, 127
        %vm349 = vcmp.lt.s32.totalorder %v348, 17
        %v350 = vsel %vm349, %v340, %v344
        %v351 = vsel %vm349, %v342, %v346
        %v352 = vsel %vm349, %v336, %v340
        %v353 = vsel %vm349, %v338, %v342
        %v354 = vsel %vm349, %v344, %v336
        %v355 = vsel %vm349, %v346, %v338
        %v357 = vperm.slane %v301, 0
        %v358 = vperm.slane %v301, 1
        %v359 = vperm.slane %v301, 2
        %v363 = vmul.f32 %v354, %v357
        %v364 = vmul.f32 %v352, %v358
        %v365 = vmul.f32 %v350, %v359
        %v366 = vmul.f32 %v355, %v357
        %v367 = vmul.f32 %v353, %v358
        %v368 = vmul.f32 %v351, %v359
        %v369 = vpack.c.bf16 %v364, %v363
        %v370 = vpack.c.bf16 %v365, %v365
        %v371 = vpack.c.bf16 %v367, %v366
        %v372 = vpack.c.bf16 %v368, %v368
        %373 = vst [vmem:[#allocation2] sm:$0xff] %v369
        %374 = vst [vmem:[#allocation2 + $0x8] sm:$0xf] %v370
        %375 = vst [vmem:[#allocation2 + $0xc] sm:$0xff] %v371
        %376 = vst [vmem:[#allocation2 + $0x14] sm:$0xf] %v372
        %377 = vrot.lane.b32.xlu0 %v329, 16
        %v378 = vpop.permute.xlu0 %377
        %379 = vrot.lane.b32.xlu0 %v332, 16
        %v380 = vpop.permute.xlu0 %379
        %381 = vrot.lane.b32.xlu0 %v330, 16
        %v382 = vpop.permute.xlu0 %381
        %383 = vrot.lane.b32.xlu0 %v333, 16
        %v384 = vpop.permute.xlu0 %383
        %385 = vrot.lane.b32.xlu0 %v331, 16
        %v386 = vpop.permute.xlu0 %385
        %387 = vrot.lane.b32.xlu0 %v334, 16
        %v388 = vpop.permute.xlu0 %387
        %vm389 = vcmp.lt.s32.totalorder %v348, 16
        %v390 = vsel %vm389, %v382, %v386
        %v391 = vsel %vm389, %v384, %v388
        %v392 = vsel %vm389, %v378, %v382
        %v393 = vsel %vm389, %v380, %v384
        %v394 = vsel %vm389, %v386, %v378
        %v395 = vsel %vm389, %v388, %v380
        %v396 = vpack.c.bf16 %v392, %v394
        %v397 = vpack.c.bf16 %v390, %v390
        %v398 = vpack.c.bf16 %v393, %v395
        %v399 = vpack.c.bf16 %v391, %v391
        %400 = vst [vmem:[#allocation2 + $0x18] sm:$0xff] %v396
        %401 = vst [vmem:[#allocation2 + $0x20] sm:$0xf] %v397
        %402 = vst [vmem:[#allocation2 + $0x24] sm:$0xff] %v398
        %403 = vst [vmem:[#allocation2 + $0x2c] sm:$0xf] %v399
        %404 = vrot.lane.b32.xlu0 %v329, 15
        %v405 = vpop.permute.xlu0 %404
        %406 = vrot.lane.b32.xlu0 %v332, 15
        %v407 = vpop.permute.xlu0 %406
        %408 = vrot.lane.b32.xlu0 %v330, 15
        %v409 = vpop.permute.xlu0 %408
        %410 = vrot.lane.b32.xlu0 %v333, 15
        %v411 = vpop.permute.xlu0 %410
        %412 = vrot.lane.b32.xlu0 %v331, 15
        %v413 = vpop.permute.xlu0 %412
        %414 = vrot.lane.b32.xlu0 %v334, 15
        %v415 = vpop.permute.xlu0 %414
        %vm416 = vcmp.lt.s32.totalorder %v348, 15
        %v417 = vsel %vm416, %v409, %v413
        %v418 = vsel %vm416, %v411, %v415
        %v419 = vsel %vm416, %v405, %v409
        %v420 = vsel %vm416, %v407, %v411
        %v421 = vsel %vm416, %v413, %v405
        %v422 = vsel %vm416, %v415, %v407
        %v424 = vperm.slane %v303, 0
        %v425 = vperm.slane %v303, 1
        %v426 = vperm.slane %v303, 2
        %v430 = vmul.f32 %v421, %v424
        %v431 = vmul.f32 %v419, %v425
        %v432 = vmul.f32 %v417, %v426
        %v433 = vmul.f32 %v422, %v424
        %v434 = vmul.f32 %v420, %v425
        %v435 = vmul.f32 %v418, %v426
        %v436 = vpack.c.bf16 %v431, %v430
        %v437 = vpack.c.bf16 %v432, %v432
        %v438 = vpack.c.bf16 %v434, %v433
        %v439 = vpack.c.bf16 %v435, %v435
        %440 = vst [vmem:[#allocation2 + $0x30] sm:$0xff] %v436
        %441 = vst [vmem:[#allocation2 + $0x38] sm:$0xf] %v437
        %442 = vst [vmem:[#allocation2 + $0x3c] sm:$0xff] %v438
        %443 = vst [vmem:[#allocation2 + $0x44] sm:$0xf] %v439
        %444 = vrot.lane.b32.xlu0 %v329, 1
        %v445 = vpop.permute.xlu0 %444
        %446 = vrot.lane.b32.xlu0 %v332, 1
        %v447 = vpop.permute.xlu0 %446
        %448 = vrot.lane.b32.xlu0 %v330, 1
        %v449 = vpop.permute.xlu0 %448
        %450 = vrot.lane.b32.xlu0 %v333, 1
        %v451 = vpop.permute.xlu0 %450
        %452 = vrot.lane.b32.xlu0 %v331, 1
        %v453 = vpop.permute.xlu0 %452
        %454 = vrot.lane.b32.xlu0 %v334, 1
        %v455 = vpop.permute.xlu0 %454
        %vm456 = vcmp.lt.s32.totalorder %v348, 1
        %v457 = vsel %vm456, %v449, %v453
        %v458 = vsel %vm456, %v451, %v455
        %v459 = vsel %vm456, %v445, %v449
        %v460 = vsel %vm456, %v447, %v451
        %v461 = vsel %vm456, %v453, %v445
        %v462 = vsel %vm456, %v455, %v447
        %v463 = vmul.f32 %v461, %v357
        %v464 = vmul.f32 %v459, %v358
        %v465 = vmul.f32 %v457, %v359
        %v466 = vmul.f32 %v462, %v357
        %v467 = vmul.f32 %v460, %v358
        %v468 = vmul.f32 %v458, %v359
        %v469 = vpack.c.bf16 %v464, %v463
        %v470 = vpack.c.bf16 %v465, %v465
        %v471 = vpack.c.bf16 %v467, %v466
        %v472 = vpack.c.bf16 %v468, %v468
        %473 = vst [vmem:[#allocation2 + $0x48] sm:$0xff] %v469
        %474 = vst [vmem:[#allocation2 + $0x50] sm:$0xf] %v470
        %475 = vst [vmem:[#allocation2 + $0x54] sm:$0xff] %v471
        %476 = vst [vmem:[#allocation2 + $0x5c] sm:$0xf] %v472
        %v477 = vpack.c.bf16 %v330, %v329
        %v478 = vpack.c.bf16 %v331, %v331
        %v479 = vpack.c.bf16 %v333, %v332
        %v480 = vpack.c.bf16 %v334, %v334
        %481 = vst [vmem:[#allocation2 + $0x60] sm:$0xff] %v477
        %482 = vst [vmem:[#allocation2 + $0x68] sm:$0xf] %v478
        %483 = vst [vmem:[#allocation2 + $0x6c] sm:$0xff] %v479
        %484 = vst [vmem:[#allocation2 + $0x74] sm:$0xf] %v480
        %485 = vrot.lane.b32.xlu0 %v329, 127
        %v486 = vpop.permute.xlu0 %485
        %487 = vrot.lane.b32.xlu0 %v332, 127
        %v488 = vpop.permute.xlu0 %487
        %489 = vrot.lane.b32.xlu0 %v330, 127
        %v490 = vpop.permute.xlu0 %489
        %491 = vrot.lane.b32.xlu0 %v333, 127
        %v492 = vpop.permute.xlu0 %491
        %493 = vrot.lane.b32.xlu0 %v331, 127
        %v494 = vpop.permute.xlu0 %493
        %495 = vrot.lane.b32.xlu0 %v334, 127
        %v496 = vpop.permute.xlu0 %495
        %vm497 = vcmp.lt.s32.totalorder %v348, 127
        %v498 = vsel %vm497, %v490, %v494
        %v499 = vsel %vm497, %v492, %v496
        %v500 = vsel %vm497, %v486, %v490
        %v501 = vsel %vm497, %v488, %v492
        %v502 = vsel %vm497, %v494, %v486
        %v503 = vsel %vm497, %v496, %v488
        %v504 = vmul.f32 %v500, %v424
        %v505 = vmul.f32 %v498, %v425
        %v506 = vmul.f32 %v502, %v426
        %v507 = vmul.f32 %v501, %v424
        %v508 = vmul.f32 %v499, %v425
        %v509 = vmul.f32 %v503, %v426
        %v510 = vpack.c.bf16 %v505, %v504
        %v511 = vpack.c.bf16 %v506, %v506
        %v512 = vpack.c.bf16 %v508, %v507
        %v513 = vpack.c.bf16 %v509, %v509
        %514 = vst [vmem:[#allocation2 + $0x78] sm:$0xff] %v510
        %515 = vst [vmem:[#allocation2 + $0x80] sm:$0xf] %v511
        %516 = vst [vmem:[#allocation2 + $0x84] sm:$0xff] %v512
        %517 = vst [vmem:[#allocation2 + $0x8c] sm:$0xf] %v513
        %518 = vrot.lane.b32.xlu0 %v329, 113
        %v519 = vpop.permute.xlu0 %518
        %520 = vrot.lane.b32.xlu0 %v332, 113
        %v521 = vpop.permute.xlu0 %520
        %522 = vrot.lane.b32.xlu0 %v330, 113
        %v523 = vpop.permute.xlu0 %522
        %524 = vrot.lane.b32.xlu0 %v333, 113
        %v525 = vpop.permute.xlu0 %524
        %526 = vrot.lane.b32.xlu0 %v331, 113
        %v527 = vpop.permute.xlu0 %526
        %528 = vrot.lane.b32.xlu0 %v334, 113
        %v529 = vpop.permute.xlu0 %528
        %vm530 = vcmp.lt.s32.totalorder %v348, 113
        %v531 = vsel %vm530, %v523, %v527
        %v532 = vsel %vm530, %v525, %v529
        %v533 = vsel %vm530, %v519, %v523
        %v534 = vsel %vm530, %v521, %v525
        %v535 = vsel %vm530, %v527, %v519
        %v536 = vsel %vm530, %v529, %v521
        %v537 = vmul.f32 %v533, %v357
        %v538 = vmul.f32 %v531, %v358
        %v539 = vmul.f32 %v535, %v359
        %v540 = vmul.f32 %v534, %v357
        %v541 = vmul.f32 %v532, %v358
        %v542 = vmul.f32 %v536, %v359
        %v543 = vpack.c.bf16 %v538, %v537
        %v544 = vpack.c.bf16 %v539, %v539
        %v545 = vpack.c.bf16 %v541, %v540
        %v546 = vpack.c.bf16 %v542, %v542
        %547 = vst [vmem:[#allocation2 + $0x90] sm:$0xff] %v543
        %548 = vst [vmem:[#allocation2 + $0x98] sm:$0xf] %v544
        %549 = vst [vmem:[#allocation2 + $0x9c] sm:$0xff] %v545
        %550 = vst [vmem:[#allocation2 + $0xa4] sm:$0xf] %v546
        %551 = vrot.lane.b32.xlu0 %v329, 112
        %v552 = vpop.permute.xlu0 %551
        %553 = vrot.lane.b32.xlu0 %v332, 112
        %v554 = vpop.permute.xlu0 %553
        %555 = vrot.lane.b32.xlu0 %v330, 112
        %v556 = vpop.permute.xlu0 %555
        %557 = vrot.lane.b32.xlu0 %v333, 112
        %v558 = vpop.permute.xlu0 %557
        %559 = vrot.lane.b32.xlu0 %v331, 112
        %v560 = vpop.permute.xlu0 %559
        %561 = vrot.lane.b32.xlu0 %v334, 112
        %v562 = vpop.permute.xlu0 %561
        %vm563 = vcmp.lt.s32.totalorder %v348, 112
        %v564 = vsel %vm563, %v556, %v560
        %v565 = vsel %vm563, %v558, %v562
        %v566 = vsel %vm563, %v552, %v556
        %v567 = vsel %vm563, %v554, %v558
        %v568 = vsel %vm563, %v560, %v552
        %v569 = vsel %vm563, %v562, %v554
        %v570 = vpack.c.bf16 %v564, %v566
        %v571 = vpack.c.bf16 %v568, %v568
        %v572 = vpack.c.bf16 %v565, %v567
        %v573 = vpack.c.bf16 %v569, %v569
        %574 = vst [vmem:[#allocation2 + $0xa8] sm:$0xff] %v570
        %575 = vst [vmem:[#allocation2 + $0xb0] sm:$0xf] %v571
        %576 = vst [vmem:[#allocation2 + $0xb4] sm:$0xff] %v572
        %577 = vst [vmem:[#allocation2 + $0xbc] sm:$0xf] %v573
        %578 = vrot.lane.b32.xlu0 %v329, 111
        %v579 = vpop.permute.xlu0 %578
        %580 = vrot.lane.b32.xlu0 %v332, 111
        %v581 = vpop.permute.xlu0 %580
        %582 = vrot.lane.b32.xlu0 %v330, 111
        %v583 = vpop.permute.xlu0 %582
        %584 = vrot.lane.b32.xlu0 %v333, 111
        %v585 = vpop.permute.xlu0 %584
        %586 = vrot.lane.b32.xlu0 %v331, 111
        %v587 = vpop.permute.xlu0 %586
        %588 = vrot.lane.b32.xlu0 %v334, 111
        %v589 = vpop.permute.xlu0 %588
        %vm590 = vcmp.lt.s32.totalorder %v348, 111
        %v591 = vsel %vm590, %v583, %v587
        %v592 = vsel %vm590, %v585, %v589
        %v593 = vsel %vm590, %v579, %v583
        %v594 = vsel %vm590, %v581, %v585
        %v595 = vsel %vm590, %v587, %v579
        %v596 = vsel %vm590, %v589, %v581
        %v597 = vmul.f32 %v593, %v424
        %v598 = vmul.f32 %v591, %v425
        %v599 = vmul.f32 %v595, %v426
        %v600 = vmul.f32 %v594, %v424
        %v601 = vmul.f32 %v592, %v425
        %v602 = vmul.f32 %v596, %v426
        %v603 = vpack.c.bf16 %v598, %v597
        %v604 = vpack.c.bf16 %v599, %v599
        %v605 = vpack.c.bf16 %v601, %v600
        %v606 = vpack.c.bf16 %v602, %v602
        %607 = vst [vmem:[#allocation2 + $0xc0] sm:$0xff] %v603
        %608 = vst [vmem:[#allocation2 + $0xc8] sm:$0xf] %v604
        %609 = vst [vmem:[#allocation2 + $0xcc] sm:$0xff] %v605
        %610 = vst [vmem:[#allocation2 + $0xd4] sm:$0xf] %v606
        %v611 = vld [vmem:[#allocation2] sm:$0xff]
        %v612 = vld [vmem:[#allocation2 + $0x8] sm:$0xf]
        %v613 = vld [vmem:[#allocation2 + $0xc] sm:$0xff]
        %v614 = vld [vmem:[#allocation2 + $0x14] sm:$0xf]
        %v615 = vld [vmem:[#allocation2 + $0x18] sm:$0xff]
        %v616 = vld [vmem:[#allocation2 + $0x20] sm:$0xf]
        %v617 = vld [vmem:[#allocation2 + $0x24] sm:$0xff]
        %v618 = vld [vmem:[#allocation2 + $0x2c] sm:$0xf]
        %v619 = vld [vmem:[#allocation2 + $0x30] sm:$0xff]
        %v620 = vld [vmem:[#allocation2 + $0x38] sm:$0xf]
        %v621 = vld [vmem:[#allocation2 + $0x3c] sm:$0xff]
        %v622 = vld [vmem:[#allocation2 + $0x44] sm:$0xf]
        %v623 = vld [vmem:[#allocation2 + $0x48] sm:$0xff]
        %v624 = vld [vmem:[#allocation2 + $0x50] sm:$0xf]
        %v625 = vld [vmem:[#allocation2 + $0x54] sm:$0xff]
        %v626 = vld [vmem:[#allocation2 + $0x5c] sm:$0xf]
        %v627 = vld [vmem:[#allocation2 + $0x60] sm:$0xff]
        %v628 = vld [vmem:[#allocation2 + $0x68] sm:$0xf]
        %v629 = vld [vmem:[#allocation2 + $0x6c] sm:$0xff]
        %v630 = vld [vmem:[#allocation2 + $0x74] sm:$0xf]
        %v631 = vld [vmem:[#allocation2 + $0x78] sm:$0xff]
        %v632 = vld [vmem:[#allocation2 + $0x80] sm:$0xf]
        %v633 = vld [vmem:[#allocation2 + $0x84] sm:$0xff]
        %v634 = vld [vmem:[#allocation2 + $0x8c] sm:$0xf]
        %v635 = vld [vmem:[#allocation2 + $0x90] sm:$0xff]
        %v636 = vld [vmem:[#allocation2 + $0x98] sm:$0xf]
        %v637 = vld [vmem:[#allocation2 + $0x9c] sm:$0xff]
        %v638 = vld [vmem:[#allocation2 + $0xa4] sm:$0xf]
        %v639 = vld [vmem:[#allocation2 + $0xa8] sm:$0xff]
        %v640 = vld [vmem:[#allocation2 + $0xb0] sm:$0xf]
        %v641 = vld [vmem:[#allocation2 + $0xb4] sm:$0xff]
        %v642 = vld [vmem:[#allocation2 + $0xbc] sm:$0xf]
        %v643 = vld [vmem:[#allocation2 + $0xc0] sm:$0xff]
        %v644 = vld [vmem:[#allocation2 + $0xc8] sm:$0xf]
        %v645 = vld [vmem:[#allocation2 + $0xcc] sm:$0xff]
        %v646 = vld [vmem:[#allocation2 + $0xd4] sm:$0xf]
        %648 = vset.pattern.permute.xlu0 0
        %649 = vperm.xlu0 %648, %v318
        %v650 = vpop.permute.xlu0 %649
        %653 = vset.pattern.permute.xlu0 0
        %654 = vperm.xlu0 %653, %v319
        %v655 = vpop.permute.xlu0 %654
        %658 = vset.pattern.permute.xlu0 0
        %659 = vperm.xlu0 %658, %v320
        %v660 = vpop.permute.xlu0 %659
        %663 = vset.pattern.permute.xlu0 0
        %664 = vperm.xlu0 %663, %v321
        %v665 = vpop.permute.xlu0 %664
        %v671 = vunpack.c.l.b16 %v314
        %v672 = vunpack.c.h.b16 %v314
        %v673 = vunpack.c.l.b16 %v315
        %v674 = vunpack.c.h.b16 %v315
        %v675 = vunpack.c.l.b16 %v316
        %v676 = vunpack.c.h.b16 %v316
        %v677 = vunpack.c.l.b16 %v317
        %v678 = vunpack.c.h.b16 %v317
        %v679 = vpack.c.b16 %v673, %v671
        %v680 = vpack.c.b16 %v674, %v672
        %v681 = vpack.c.b16 %v677, %v675
        %v682 = vpack.c.b16 %v678, %v676
        %v721 = vunpack.c.l.b16 %v611
        %v722 = vunpack.c.h.b16 %v611
        %v723 = vunpack.c.l.b16 %v612
        %v724 = vunpack.c.l.b16 %v613
        %v725 = vunpack.c.h.b16 %v613
        %v726 = vunpack.c.l.b16 %v614
        %v727 = vunpack.c.l.b16 %v615
        %v728 = vunpack.c.h.b16 %v615
        %v729 = vunpack.c.l.b16 %v616
        %v730 = vunpack.c.l.b16 %v617
        %v731 = vunpack.c.h.b16 %v617
        %v732 = vunpack.c.l.b16 %v618
        %v733 = vunpack.c.l.b16 %v619
        %v734 = vunpack.c.h.b16 %v619
        %v735 = vunpack.c.l.b16 %v620
        %v736 = vunpack.c.l.b16 %v621
        %v737 = vunpack.c.h.b16 %v621
        %v738 = vunpack.c.l.b16 %v622
        %v739 = vunpack.c.l.b16 %v623
        %v740 = vunpack.c.h.b16 %v623
        %v741 = vunpack.c.l.b16 %v624
        %v742 = vunpack.c.l.b16 %v625
        %v743 = vunpack.c.h.b16 %v625
        %v744 = vunpack.c.l.b16 %v626
        %v745 = vunpack.c.l.b16 %v627
        %v746 = vunpack.c.h.b16 %v627
        %v747 = vunpack.c.l.b16 %v628
        %v748 = vunpack.c.l.b16 %v629
        %v749 = vunpack.c.h.b16 %v629
        %v750 = vunpack.c.l.b16 %v630
        %v751 = vunpack.c.l.b16 %v631
        %v752 = vunpack.c.h.b16 %v631
        %v753 = vunpack.c.l.b16 %v632
        %v754 = vunpack.c.l.b16 %v633
        %v755 = vunpack.c.h.b16 %v633
        %v756 = vunpack.c.l.b16 %v634
        %v757 = vunpack.c.l.b16 %v635
        %v758 = vunpack.c.h.b16 %v635
        %v759 = vunpack.c.l.b16 %v636
        %v760 = vunpack.c.l.b16 %v637
        %v761 = vunpack.c.h.b16 %v637
        %v762 = vunpack.c.l.b16 %v638
        %v763 = vunpack.c.l.b16 %v639
        %v764 = vunpack.c.h.b16 %v639
        %v765 = vunpack.c.l.b16 %v640
        %v766 = vunpack.c.l.b16 %v641
        %v767 = vunpack.c.h.b16 %v641
        %v768 = vunpack.c.l.b16 %v642
        %v769 = vunpack.c.l.b16 %v643
        %v770 = vunpack.c.h.b16 %v643
        %v771 = vunpack.c.l.b16 %v644
        %v772 = vunpack.c.l.b16 %v645
        %v773 = vunpack.c.h.b16 %v645
        %v774 = vunpack.c.l.b16 %v646
        %v775 = vpack.c.b16 %v724, %v721
        %v776 = vpack.c.b16 %v725, %v722
        %v777 = vpack.c.b16 %v726, %v723
        %v778 = vpack.c.b16 %v730, %v727
        %v779 = vpack.c.b16 %v731, %v728
        %v780 = vpack.c.b16 %v732, %v729
        %v781 = vpack.c.b16 %v736, %v733
        %v782 = vpack.c.b16 %v737, %v734
        %v783 = vpack.c.b16 %v738, %v735
        %v784 = vpack.c.b16 %v742, %v739
        %v785 = vpack.c.b16 %v743, %v740
        %v786 = vpack.c.b16 %v744, %v741
        %v787 = vpack.c.b16 %v748, %v745
        %v788 = vpack.c.b16 %v749, %v746
        %v789 = vpack.c.b16 %v750, %v747
        %v790 = vpack.c.b16 %v754, %v751
        %v791 = vpack.c.b16 %v755, %v752
        %v792 = vpack.c.b16 %v756, %v753
        %v793 = vpack.c.b16 %v760, %v757
        %v794 = vpack.c.b16 %v761, %v758
        %v795 = vpack.c.b16 %v762, %v759
        %v796 = vpack.c.b16 %v766, %v763
        %v797 = vpack.c.b16 %v767, %v764
        %v798 = vpack.c.b16 %v768, %v765
        %v799 = vpack.c.b16 %v772, %v769
        %v800 = vpack.c.b16 %v773, %v770
        %v801 = vpack.c.b16 %v774, %v771
        %vm829 = vcmask 130048
        %v831 = vsel %vm829, %v680, 0
        %v834 = vsel %vm829, %v682, 0
        %836 = vmatpush.bf16.msra.mxu0 %v796
        %837 = vmatpush.bf16.msra.mxu0 %v793
        %838 = vmatpush.bf16.msra.mxu0 %v790
        %839 = vmatpush.bf16.msra.mxu0 %v787
        %840 = vmatpush.bf16.msra.mxu0 %v784
        %841 = vmatpush.bf16.msra.mxu0 %v781
        %842 = vmatpush.bf16.msra.mxu0 %v778
        %843 = vmatpush.bf16.msra.mxu0 %v775
        %844 = vmatmul.bf16.gmra.mxu0 %v679
        %v845 = vpop.f32.mrf.mxu0
        %v846 = vadd.f32 %v650, %v845
        %v847 = vpop.f32.mrf.mxu0
        %v848 = vadd.f32 %v655, %v847
        %849 = vmatmul.bf16.gmra.mxu0 %v681
        %v850 = vpop.f32.mrf.mxu0
        %v851 = vadd.f32 %v660, %v850
        %v852 = vpop.f32.mrf.mxu0
        %v853 = vadd.f32 %v665, %v852
        %854 = vdwg.mxu0
        %855 = vmatpush.bf16.msra.mxu0 0
        %856 = vmatpush.bf16.msra.mxu0 0
        %857 = vmatpush.bf16.msra.mxu0 0
        %858 = vmatpush.bf16.msra.mxu0 0
        %859 = vmatpush.bf16.msra.mxu0 0
        %860 = vmatpush.bf16.msra.mxu0 0
        %861 = vmatpush.bf16.msra.mxu0 0
        %862 = vmatpush.bf16.msra.mxu0 %v799
        %863 = vmatmul.bf16.gmra.mxu0 %v831
        %v864 = vpop.f32.mrf.mxu0
        %v865 = vadd.f32 %v846, %v864
        %v866 = vpop.f32.mrf.mxu0
        %v867 = vadd.f32 %v848, %v866
        %868 = vmatmul.bf16.gmra.mxu0 %v834
        %v869 = vpop.f32.mrf.mxu0
        %v870 = vadd.f32 %v851, %v869
        %v871 = vpop.f32.mrf.mxu0
        %v872 = vadd.f32 %v853, %v871
        %873 = vdwg.mxu0
        %874 = vmatpush.bf16.msra.mxu0 %v797
        %875 = vmatpush.bf16.msra.mxu0 %v794
        %876 = vmatpush.bf16.msra.mxu0 %v791
        %877 = vmatpush.bf16.msra.mxu0 %v788
        %878 = vmatpush.bf16.msra.mxu0 %v785
        %879 = vmatpush.bf16.msra.mxu0 %v782
        %880 = vmatpush.bf16.msra.mxu0 %v779
        %881 = vmatpush.bf16.msra.mxu0 %v776
        %882 = vmatmul.bf16.gmra.mxu0 %v679
        %v883 = vpop.f32.mrf.mxu0
        %v884 = vadd.f32 %v650, %v883
        %v885 = vpop.f32.mrf.mxu0
        %v886 = vadd.f32 %v655, %v885
        %887 = vmatmul.bf16.gmra.mxu0 %v681
        %v888 = vpop.f32.mrf.mxu0
        %v889 = vadd.f32 %v660, %v888
        %v890 = vpop.f32.mrf.mxu0
        %v891 = vadd.f32 %v665, %v890
        %892 = vdwg.mxu0
        %893 = vmatpush.bf16.msra.mxu0 0
        %894 = vmatpush.bf16.msra.mxu0 0
        %895 = vmatpush.bf16.msra.mxu0 0
        %896 = vmatpush.bf16.msra.mxu0 0
        %897 = vmatpush.bf16.msra.mxu0 0
        %898 = vmatpush.bf16.msra.mxu0 0
        %899 = vmatpush.bf16.msra.mxu0 0
        %900 = vmatpush.bf16.msra.mxu0 %v800
        %901 = vmatmul.bf16.gmra.mxu0 %v831
        %v902 = vpop.f32.mrf.mxu0
        %v903 = vadd.f32 %v884, %v902
        %v904 = vpop.f32.mrf.mxu0
        %v905 = vadd.f32 %v886, %v904
        %906 = vmatmul.bf16.gmra.mxu0 %v834
        %v907 = vpop.f32.mrf.mxu0
        %v908 = vadd.f32 %v889, %v907
        %v909 = vpop.f32.mrf.mxu0
        %v910 = vadd.f32 %v891, %v909
        %911 = vdwg.mxu0
        %912 = vmatpush.bf16.msra.mxu0 %v798
        %913 = vmatpush.bf16.msra.mxu0 %v795
        %914 = vmatpush.bf16.msra.mxu0 %v792
        %915 = vmatpush.bf16.msra.mxu0 %v789
        %916 = vmatpush.bf16.msra.mxu0 %v786
        %917 = vmatpush.bf16.msra.mxu0 %v783
        %918 = vmatpush.bf16.msra.mxu0 %v780
        %919 = vmatpush.bf16.msra.mxu0 %v777
        %920 = vmatmul.bf16.gmra.mxu0 %v679
        %v921 = vpop.f32.mrf.mxu0
        %v922 = vadd.f32 %v650, %v921
        %v923 = vpop.f32.mrf.mxu0
        %v924 = vadd.f32 %v655, %v923
        %925 = vmatmul.bf16.gmra.mxu0 %v681
        %v926 = vpop.f32.mrf.mxu0
        %v927 = vadd.f32 %v660, %v926
        %v928 = vpop.f32.mrf.mxu0
        %v929 = vadd.f32 %v665, %v928
        %930 = vdwg.mxu0
        %931 = vmatpush.bf16.msra.mxu0 0
        %932 = vmatpush.bf16.msra.mxu0 0
        %933 = vmatpush.bf16.msra.mxu0 0
        %934 = vmatpush.bf16.msra.mxu0 0
        %935 = vmatpush.bf16.msra.mxu0 0
        %936 = vmatpush.bf16.msra.mxu0 0
        %937 = vmatpush.bf16.msra.mxu0 0
        %938 = vmatpush.bf16.msra.mxu0 %v801
        %939 = vmatmul.bf16.gmra.mxu0 %v831
        %v940 = vpop.f32.mrf.mxu0
        %v941 = vadd.f32 %v922, %v940
        %v942 = vpop.f32.mrf.mxu0
        %v943 = vadd.f32 %v924, %v942
        %944 = vmatmul.bf16.gmra.mxu0 %v834
        %v945 = vpop.f32.mrf.mxu0
        %v946 = vadd.f32 %v927, %v945
        %v947 = vpop.f32.mrf.mxu0
        %v948 = vadd.f32 %v929, %v947
        %949 = vdwg.mxu0
        %v950 = vmax.f32 %v865, 0.0
        %v951 = vmax.f32 %v903, 0.0
        %v952 = vmax.f32 %v941, 0.0
        %v953 = vmax.f32 %v867, 0.0
        %v954 = vmax.f32 %v905, 0.0
        %v955 = vmax.f32 %v943, 0.0
        %v956 = vmax.f32 %v870, 0.0
        %v957 = vmax.f32 %v908, 0.0
        %v958 = vmax.f32 %v946, 0.0
        %v959 = vmax.f32 %v872, 0.0
        %v960 = vmax.f32 %v910, 0.0
        %v961 = vmax.f32 %v948, 0.0
        %v962 = vld [vmem:[#allocation8] sm:$0xff]
        %v963 = vld [vmem:[#allocation8 + $0x8] sm:$0xf]
        %v964 = vld [vmem:[#allocation8 + $0xc] sm:$0xff]
        %v965 = vld [vmem:[#allocation8 + $0x14] sm:$0xf]
        %v966 = vld [vmem:[#allocation8 + $0x18] sm:$0xff]
        %v967 = vld [vmem:[#allocation8 + $0x20] sm:$0xf]
        %v968 = vld [vmem:[#allocation8 + $0x24] sm:$0xff]
        %v969 = vld [vmem:[#allocation8 + $0x2c] sm:$0xf]
        %v970 = vld [vmem:[%s5] sm:$0xff]
        %v971 = vld [vmem:[%s5 + $0x8] sm:$0xff]
        %v972 = vld [vmem:[%s5 + $0x10] sm:$0xff]
        %v973 = vld [vmem:[%s5 + $0x18] sm:$0xff]
        %v974 = vmul.f32 %v950, %v323
        %v975 = vmul.f32 %v951, %v324
        %v976 = vmul.f32 %v952, %v325
        %v977 = vmul.f32 %v953, %v323
        %v978 = vmul.f32 %v954, %v324
        %v979 = vmul.f32 %v955, %v325
        %v980 = vmul.f32 %v956, %v323
        %v981 = vmul.f32 %v957, %v324
        %v982 = vmul.f32 %v958, %v325
        %v983 = vmul.f32 %v959, %v323
        %v984 = vmul.f32 %v960, %v324
        %v985 = vmul.f32 %v961, %v325
        %986 = vrot.lane.b32.xlu0 %v974, 17
        %v987 = vpop.permute.xlu0 %986
        %988 = vrot.lane.b32.xlu0 %v977, 17
        %v989 = vpop.permute.xlu0 %988
        %990 = vrot.lane.b32.xlu0 %v980, 17
        %v991 = vpop.permute.xlu0 %990
        %992 = vrot.lane.b32.xlu0 %v983, 17
        %v993 = vpop.permute.xlu0 %992
        %994 = vrot.lane.b32.xlu0 %v975, 17
        %v995 = vpop.permute.xlu0 %994
        %996 = vrot.lane.b32.xlu0 %v978, 17
        %v997 = vpop.permute.xlu0 %996
        %998 = vrot.lane.b32.xlu0 %v981, 17
        %v999 = vpop.permute.xlu0 %998
        %1000 = vrot.lane.b32.xlu0 %v984, 17
        %v1001 = vpop.permute.xlu0 %1000
        %1002 = vrot.lane.b32.xlu0 %v976, 17
        %v1003 = vpop.permute.xlu0 %1002
        %1004 = vrot.lane.b32.xlu0 %v979, 17
        %v1005 = vpop.permute.xlu0 %1004
        %1006 = vrot.lane.b32.xlu0 %v982, 17
        %v1007 = vpop.permute.xlu0 %1006
        %1008 = vrot.lane.b32.xlu0 %v985, 17
        %v1009 = vpop.permute.xlu0 %1008
        %v1010 = vsel %vm349, %v995, %v1003
        %v1011 = vsel %vm349, %v997, %v1005
        %v1012 = vsel %vm349, %v999, %v1007
        %v1013 = vsel %vm349, %v1001, %v1009
        %v1014 = vsel %vm349, %v987, %v995
        %v1015 = vsel %vm349, %v989, %v997
        %v1016 = vsel %vm349, %v991, %v999
        %v1017 = vsel %vm349, %v993, %v1001
        %v1018 = vsel %vm349, %v1003, %v987
        %v1019 = vsel %vm349, %v1005, %v989
        %v1020 = vsel %vm349, %v1007, %v991
        %v1021 = vsel %vm349, %v1009, %v993
        %v1022 = vmul.f32 %v1018, %v357
        %v1023 = vmul.f32 %v1014, %v358
        %v1024 = vmul.f32 %v1010, %v359
        %v1025 = vmul.f32 %v1019, %v357
        %v1026 = vmul.f32 %v1015, %v358
        %v1027 = vmul.f32 %v1011, %v359
        %v1028 = vmul.f32 %v1020, %v357
        %v1029 = vmul.f32 %v1016, %v358
        %v1030 = vmul.f32 %v1012, %v359
        %v1031 = vmul.f32 %v1021, %v357
        %v1032 = vmul.f32 %v1017, %v358
        %v1033 = vmul.f32 %v1013, %v359
        %v1034 = vpack.c.bf16 %v1023, %v1022
        %v1035 = vpack.c.bf16 %v1024, %v1024
        %v1036 = vpack.c.bf16 %v1026, %v1025
        %v1037 = vpack.c.bf16 %v1027, %v1027
        %v1038 = vpack.c.bf16 %v1029, %v1028
        %v1039 = vpack.c.bf16 %v1030, %v1030
        %v1040 = vpack.c.bf16 %v1032, %v1031
        %v1041 = vpack.c.bf16 %v1033, %v1033
        %1042 = vst [vmem:[#allocation2] sm:$0xff] %v1034
        %1043 = vst [vmem:[#allocation2 + $0x8] sm:$0xf] %v1035
        %1044 = vst [vmem:[#allocation2 + $0xc] sm:$0xff] %v1036
        %1045 = vst [vmem:[#allocation2 + $0x14] sm:$0xf] %v1037
        %1046 = vst [vmem:[#allocation2 + $0x18] sm:$0xff] %v1038
        %1047 = vst [vmem:[#allocation2 + $0x20] sm:$0xf] %v1039
        %1048 = vst [vmem:[#allocation2 + $0x24] sm:$0xff] %v1040
        %1049 = vst [vmem:[#allocation2 + $0x2c] sm:$0xf] %v1041
        %1050 = vrot.lane.b32.xlu0 %v974, 16
        %v1051 = vpop.permute.xlu0 %1050
        %1052 = vrot.lane.b32.xlu0 %v977, 16
        %v1053 = vpop.permute.xlu0 %1052
        %1054 = vrot.lane.b32.xlu0 %v980, 16
        %v1055 = vpop.permute.xlu0 %1054
        %1056 = vrot.lane.b32.xlu0 %v983, 16
        %v1057 = vpop.permute.xlu0 %1056
        %1058 = vrot.lane.b32.xlu0 %v975, 16
        %v1059 = vpop.permute.xlu0 %1058
        %1060 = vrot.lane.b32.xlu0 %v978, 16
        %v1061 = vpop.permute.xlu0 %1060
        %1062 = vrot.lane.b32.xlu0 %v981, 16
        %v1063 = vpop.permute.xlu0 %1062
        %1064 = vrot.lane.b32.xlu0 %v984, 16
        %v1065 = vpop.permute.xlu0 %1064
        %1066 = vrot.lane.b32.xlu0 %v976, 16
        %v1067 = vpop.permute.xlu0 %1066
        %1068 = vrot.lane.b32.xlu0 %v979, 16
        %v1069 = vpop.permute.xlu0 %1068
        %1070 = vrot.lane.b32.xlu0 %v982, 16
        %v1071 = vpop.permute.xlu0 %1070
        %1072 = vrot.lane.b32.xlu0 %v985, 16
        %v1073 = vpop.permute.xlu0 %1072
        %v1074 = vsel %vm389, %v1059, %v1067
        %v1075 = vsel %vm389, %v1061, %v1069
        %v1076 = vsel %vm389, %v1063, %v1071
        %v1077 = vsel %vm389, %v1065, %v1073
        %v1078 = vsel %vm389, %v1051, %v1059
        %v1079 = vsel %vm389, %v1053, %v1061
        %v1080 = vsel %vm389, %v1055, %v1063
        %v1081 = vsel %vm389, %v1057, %v1065
        %v1082 = vsel %vm389, %v1067, %v1051
        %v1083 = vsel %vm389, %v1069, %v1053
        %v1084 = vsel %vm389, %v1071, %v1055
        %v1085 = vsel %vm389, %v1073, %v1057
        %v1086 = vpack.c.bf16 %v1078, %v1082
        %v1087 = vpack.c.bf16 %v1074, %v1074
        %v1088 = vpack.c.bf16 %v1079, %v1083
        %v1089 = vpack.c.bf16 %v1075, %v1075
        %v1090 = vpack.c.bf16 %v1080, %v1084
        %v1091 = vpack.c.bf16 %v1076, %v1076
        %v1092 = vpack.c.bf16 %v1081, %v1085
        %v1093 = vpack.c.bf16 %v1077, %v1077
        %1094 = vst [vmem:[#allocation2 + $0x30] sm:$0xff] %v1086
        %1095 = vst [vmem:[#allocation2 + $0x38] sm:$0xf] %v1087
        %1096 = vst [vmem:[#allocation2 + $0x3c] sm:$0xff] %v1088
        %1097 = vst [vmem:[#allocation2 + $0x44] sm:$0xf] %v1089
        %1098 = vst [vmem:[#allocation2 + $0x48] sm:$0xff] %v1090
        %1099 = vst [vmem:[#allocation2 + $0x50] sm:$0xf] %v1091
        %1100 = vst [vmem:[#allocation2 + $0x54] sm:$0xff] %v1092
        %1101 = vst [vmem:[#allocation2 + $0x5c] sm:$0xf] %v1093
        %1102 = vrot.lane.b32.xlu0 %v974, 15
        %v1103 = vpop.permute.xlu0 %1102
        %1104 = vrot.lane.b32.xlu0 %v977, 15
        %v1105 = vpop.permute.xlu0 %1104
        %1106 = vrot.lane.b32.xlu0 %v980, 15
        %v1107 = vpop.permute.xlu0 %1106
        %1108 = vrot.lane.b32.xlu0 %v983, 15
        %v1109 = vpop.permute.xlu0 %1108
        %1110 = vrot.lane.b32.xlu0 %v975, 15
        %v1111 = vpop.permute.xlu0 %1110
        %1112 = vrot.lane.b32.xlu0 %v978, 15
        %v1113 = vpop.permute.xlu0 %1112
        %1114 = vrot.lane.b32.xlu0 %v981, 15
        %v1115 = vpop.permute.xlu0 %1114
        %1116 = vrot.lane.b32.xlu0 %v984, 15
        %v1117 = vpop.permute.xlu0 %1116
        %1118 = vrot.lane.b32.xlu0 %v976, 15
        %v1119 = vpop.permute.xlu0 %1118
        %1120 = vrot.lane.b32.xlu0 %v979, 15
        %v1121 = vpop.permute.xlu0 %1120
        %1122 = vrot.lane.b32.xlu0 %v982, 15
        %v1123 = vpop.permute.xlu0 %1122
        %1124 = vrot.lane.b32.xlu0 %v985, 15
        %v1125 = vpop.permute.xlu0 %1124
        %v1126 = vsel %vm416, %v1111, %v1119
        %v1127 = vsel %vm416, %v1113, %v1121
        %v1128 = vsel %vm416, %v1115, %v1123
        %v1129 = vsel %vm416, %v1117, %v1125
        %v1130 = vsel %vm416, %v1103, %v1111
        %v1131 = vsel %vm416, %v1105, %v1113
        %v1132 = vsel %vm416, %v1107, %v1115
        %v1133 = vsel %vm416, %v1109, %v1117
        %v1134 = vsel %vm416, %v1119, %v1103
        %v1135 = vsel %vm416, %v1121, %v1105
        %v1136 = vsel %vm416, %v1123, %v1107
        %v1137 = vsel %vm416, %v1125, %v1109
        %v1138 = vmul.f32 %v1134, %v424
        %v1139 = vmul.f32 %v1130, %v425
        %v1140 = vmul.f32 %v1126, %v426
        %v1141 = vmul.f32 %v1135, %v424
        %v1142 = vmul.f32 %v1131, %v425
        %v1143 = vmul.f32 %v1127, %v426
        %v1144 = vmul.f32 %v1136, %v424
        %v1145 = vmul.f32 %v1132, %v425
        %v1146 = vmul.f32 %v1128, %v426
        %v1147 = vmul.f32 %v1137, %v424
        %v1148 = vmul.f32 %v1133, %v425
        %v1149 = vmul.f32 %v1129, %v426
        %v1150 = vpack.c.bf16 %v1139, %v1138
        %v1151 = vpack.c.bf16 %v1140, %v1140
        %v1152 = vpack.c.bf16 %v1142, %v1141
        %v1153 = vpack.c.bf16 %v1143, %v1143
        %v1154 = vpack.c.bf16 %v1145, %v1144
        %v1155 = vpack.c.bf16 %v1146, %v1146
        %v1156 = vpack.c.bf16 %v1148, %v1147
        %v1157 = vpack.c.bf16 %v1149, %v1149
        %1158 = vst [vmem:[#allocation2 + $0x60] sm:$0xff] %v1150
        %1159 = vst [vmem:[#allocation2 + $0x68] sm:$0xf] %v1151
        %1160 = vst [vmem:[#allocation2 + $0x6c] sm:$0xff] %v1152
        %1161 = vst [vmem:[#allocation2 + $0x74] sm:$0xf] %v1153
        %1162 = vst [vmem:[#allocation2 + $0x78] sm:$0xff] %v1154
        %1163 = vst [vmem:[#allocation2 + $0x80] sm:$0xf] %v1155
        %1164 = vst [vmem:[#allocation2 + $0x84] sm:$0xff] %v1156
        %1165 = vst [vmem:[#allocation2 + $0x8c] sm:$0xf] %v1157
        %1166 = vrot.lane.b32.xlu0 %v974, 1
        %v1167 = vpop.permute.xlu0 %1166
        %1168 = vrot.lane.b32.xlu0 %v977, 1
        %v1169 = vpop.permute.xlu0 %1168
        %1170 = vrot.lane.b32.xlu0 %v980, 1
        %v1171 = vpop.permute.xlu0 %1170
        %1172 = vrot.lane.b32.xlu0 %v983, 1
        %v1173 = vpop.permute.xlu0 %1172
        %1174 = vrot.lane.b32.xlu0 %v975, 1
        %v1175 = vpop.permute.xlu0 %1174
        %1176 = vrot.lane.b32.xlu0 %v978, 1
        %v1177 = vpop.permute.xlu0 %1176
        %1178 = vrot.lane.b32.xlu0 %v981, 1
        %v1179 = vpop.permute.xlu0 %1178
        %1180 = vrot.lane.b32.xlu0 %v984, 1
        %v1181 = vpop.permute.xlu0 %1180
        %1182 = vrot.lane.b32.xlu0 %v976, 1
        %v1183 = vpop.permute.xlu0 %1182
        %1184 = vrot.lane.b32.xlu0 %v979, 1
        %v1185 = vpop.permute.xlu0 %1184
        %1186 = vrot.lane.b32.xlu0 %v982, 1
        %v1187 = vpop.permute.xlu0 %1186
        %1188 = vrot.lane.b32.xlu0 %v985, 1
        %v1189 = vpop.permute.xlu0 %1188
        %v1190 = vsel %vm456, %v1175, %v1183
        %v1191 = vsel %vm456, %v1177, %v1185
        %v1192 = vsel %vm456, %v1179, %v1187
        %v1193 = vsel %vm456, %v1181, %v1189
        %v1194 = vsel %vm456, %v1167, %v1175
        %v1195 = vsel %vm456, %v1169, %v1177
        %v1196 = vsel %vm456, %v1171, %v1179
        %v1197 = vsel %vm456, %v1173, %v1181
        %v1198 = vsel %vm456, %v1183, %v1167
        %v1199 = vsel %vm456, %v1185, %v1169
        %v1200 = vsel %vm456, %v1187, %v1171
        %v1201 = vsel %vm456, %v1189, %v1173
        %v1202 = vmul.f32 %v1198, %v357
        %v1203 = vmul.f32 %v1194, %v358
        %v1204 = vmul.f32 %v1190, %v359
        %v1205 = vmul.f32 %v1199, %v357
        %v1206 = vmul.f32 %v1195, %v358
        %v1207 = vmul.f32 %v1191, %v359
        %v1208 = vmul.f32 %v1200, %v357
        %v1209 = vmul.f32 %v1196, %v358
        %v1210 = vmul.f32 %v1192, %v359
        %v1211 = vmul.f32 %v1201, %v357
        %v1212 = vmul.f32 %v1197, %v358
        %v1213 = vmul.f32 %v1193, %v359
        %v1214 = vpack.c.bf16 %v1203, %v1202
        %v1215 = vpack.c.bf16 %v1204, %v1204
        %v1216 = vpack.c.bf16 %v1206, %v1205
        %v1217 = vpack.c.bf16 %v1207, %v1207
        %v1218 = vpack.c.bf16 %v1209, %v1208
        %v1219 = vpack.c.bf16 %v1210, %v1210
        %v1220 = vpack.c.bf16 %v1212, %v1211
        %v1221 = vpack.c.bf16 %v1213, %v1213
        %1222 = vst [vmem:[#allocation2 + $0x90] sm:$0xff] %v1214
        %1223 = vst [vmem:[#allocation2 + $0x98] sm:$0xf] %v1215
        %1224 = vst [vmem:[#allocation2 + $0x9c] sm:$0xff] %v1216
        %1225 = vst [vmem:[#allocation2 + $0xa4] sm:$0xf] %v1217
        %1226 = vst [vmem:[#allocation2 + $0xa8] sm:$0xff] %v1218
        %1227 = vst [vmem:[#allocation2 + $0xb0] sm:$0xf] %v1219
        %1228 = vst [vmem:[#allocation2 + $0xb4] sm:$0xff] %v1220
        %1229 = vst [vmem:[#allocation2 + $0xbc] sm:$0xf] %v1221
        %v1230 = vpack.c.bf16 %v975, %v974
        %v1231 = vpack.c.bf16 %v976, %v976
        %v1232 = vpack.c.bf16 %v978, %v977
        %v1233 = vpack.c.bf16 %v979, %v979
        %v1234 = vpack.c.bf16 %v981, %v980
        %v1235 = vpack.c.bf16 %v982, %v982
        %v1236 = vpack.c.bf16 %v984, %v983
        %v1237 = vpack.c.bf16 %v985, %v985
        %1238 = vst [vmem:[#allocation2 + $0xc0] sm:$0xff] %v1230
        %1239 = vst [vmem:[#allocation2 + $0xc8] sm:$0xf] %v1231
        %1240 = vst [vmem:[#allocation2 + $0xcc] sm:$0xff] %v1232
        %1241 = vst [vmem:[#allocation2 + $0xd4] sm:$0xf] %v1233
        %1242 = vst [vmem:[#allocation2 + $0xd8] sm:$0xff] %v1234
        %1243 = vst [vmem:[#allocation2 + $0xe0] sm:$0xf] %v1235
        %1244 = vst [vmem:[#allocation2 + $0xe4] sm:$0xff] %v1236
        %1245 = vst [vmem:[#allocation2 + $0xec] sm:$0xf] %v1237
        %1246 = vrot.lane.b32.xlu0 %v974, 127
        %v1247 = vpop.permute.xlu0 %1246
        %1248 = vrot.lane.b32.xlu0 %v977, 127
        %v1249 = vpop.permute.xlu0 %1248
        %1250 = vrot.lane.b32.xlu0 %v980, 127
        %v1251 = vpop.permute.xlu0 %1250
        %1252 = vrot.lane.b32.xlu0 %v983, 127
        %v1253 = vpop.permute.xlu0 %1252
        %1254 = vrot.lane.b32.xlu0 %v975, 127
        %v1255 = vpop.permute.xlu0 %1254
        %1256 = vrot.lane.b32.xlu0 %v978, 127
        %v1257 = vpop.permute.xlu0 %1256
        %1258 = vrot.lane.b32.xlu0 %v981, 127
        %v1259 = vpop.permute.xlu0 %1258
        %1260 = vrot.lane.b32.xlu0 %v984, 127
        %v1261 = vpop.permute.xlu0 %1260
        %1262 = vrot.lane.b32.xlu0 %v976, 127
        %v1263 = vpop.permute.xlu0 %1262
        %1264 = vrot.lane.b32.xlu0 %v979, 127
        %v1265 = vpop.permute.xlu0 %1264
        %1266 = vrot.lane.b32.xlu0 %v982, 127
        %v1267 = vpop.permute.xlu0 %1266
        %1268 = vrot.lane.b32.xlu0 %v985, 127
        %v1269 = vpop.permute.xlu0 %1268
        %v1270 = vsel %vm497, %v1255, %v1263
        %v1271 = vsel %vm497, %v1257, %v1265
        %v1272 = vsel %vm497, %v1259, %v1267
        %v1273 = vsel %vm497, %v1261, %v1269
        %v1274 = vsel %vm497, %v1247, %v1255
        %v1275 = vsel %vm497, %v1249, %v1257
        %v1276 = vsel %vm497, %v1251, %v1259
        %v1277 = vsel %vm497, %v1253, %v1261
        %v1278 = vsel %vm497, %v1263, %v1247
        %v1279 = vsel %vm497, %v1265, %v1249
        %v1280 = vsel %vm497, %v1267, %v1251
        %v1281 = vsel %vm497, %v1269, %v1253
        %v1282 = vmul.f32 %v1274, %v424
        %v1283 = vmul.f32 %v1270, %v425
        %v1284 = vmul.f32 %v1278, %v426
        %v1285 = vmul.f32 %v1275, %v424
        %v1286 = vmul.f32 %v1271, %v425
        %v1287 = vmul.f32 %v1279, %v426
        %v1288 = vmul.f32 %v1276, %v424
        %v1289 = vmul.f32 %v1272, %v425
        %v1290 = vmul.f32 %v1280, %v426
        %v1291 = vmul.f32 %v1277, %v424
        %v1292 = vmul.f32 %v1273, %v425
        %v1293 = vmul.f32 %v1281, %v426
        %v1294 = vpack.c.bf16 %v1283, %v1282
        %v1295 = vpack.c.bf16 %v1284, %v1284
        %v1296 = vpack.c.bf16 %v1286, %v1285
        %v1297 = vpack.c.bf16 %v1287, %v1287
        %v1298 = vpack.c.bf16 %v1289, %v1288
        %v1299 = vpack.c.bf16 %v1290, %v1290
        %v1300 = vpack.c.bf16 %v1292, %v1291
        %v1301 = vpack.c.bf16 %v1293, %v1293
        %1302 = vst [vmem:[#allocation2 + $0xf0] sm:$0xff] %v1294
        %1303 = vst [vmem:[#allocation2 + $0xf8] sm:$0xf] %v1295
        %1304 = vst [vmem:[#allocation2 + $0xfc] sm:$0xff] %v1296
        %1305 = vst [vmem:[#allocation2 + $0x104] sm:$0xf] %v1297
        %1306 = vst [vmem:[#allocation2 + $0x108] sm:$0xff] %v1298
        %1307 = vst [vmem:[#allocation2 + $0x110] sm:$0xf] %v1299
        %1308 = vst [vmem:[#allocation2 + $0x114] sm:$0xff] %v1300
        %1309 = vst [vmem:[#allocation2 + $0x11c] sm:$0xf] %v1301
        %1310 = vrot.lane.b32.xlu0 %v974, 113
        %v1311 = vpop.permute.xlu0 %1310
        %1312 = vrot.lane.b32.xlu0 %v977, 113
        %v1313 = vpop.permute.xlu0 %1312
        %1314 = vrot.lane.b32.xlu0 %v980, 113
        %v1315 = vpop.permute.xlu0 %1314
        %1316 = vrot.lane.b32.xlu0 %v983, 113
        %v1317 = vpop.permute.xlu0 %1316
        %1318 = vrot.lane.b32.xlu0 %v975, 113
        %v1319 = vpop.permute.xlu0 %1318
        %1320 = vrot.lane.b32.xlu0 %v978, 113
        %v1321 = vpop.permute.xlu0 %1320
        %1322 = vrot.lane.b32.xlu0 %v981, 113
        %v1323 = vpop.permute.xlu0 %1322
        %1324 = vrot.lane.b32.xlu0 %v984, 113
        %v1325 = vpop.permute.xlu0 %1324
        %1326 = vrot.lane.b32.xlu0 %v976, 113
        %v1327 = vpop.permute.xlu0 %1326
        %1328 = vrot.lane.b32.xlu0 %v979, 113
        %v1329 = vpop.permute.xlu0 %1328
        %1330 = vrot.lane.b32.xlu0 %v982, 113
        %v1331 = vpop.permute.xlu0 %1330
        %1332 = vrot.lane.b32.xlu0 %v985, 113
        %v1333 = vpop.permute.xlu0 %1332
        %v1334 = vsel %vm530, %v1319, %v1327
        %v1335 = vsel %vm530, %v1321, %v1329
        %v1336 = vsel %vm530, %v1323, %v1331
        %v1337 = vsel %vm530, %v1325, %v1333
        %v1338 = vsel %vm530, %v1311, %v1319
        %v1339 = vsel %vm530, %v1313, %v1321
        %v1340 = vsel %vm530, %v1315, %v1323
        %v1341 = vsel %vm530, %v1317, %v1325
        %v1342 = vsel %vm530, %v1327, %v1311
        %v1343 = vsel %vm530, %v1329, %v1313
        %v1344 = vsel %vm530, %v1331, %v1315
        %v1345 = vsel %vm530, %v1333, %v1317
        %v1346 = vmul.f32 %v1338, %v357
        %v1347 = vmul.f32 %v1334, %v358
        %v1348 = vmul.f32 %v1342, %v359
        %v1349 = vmul.f32 %v1339, %v357
        %v1350 = vmul.f32 %v1335, %v358
        %v1351 = vmul.f32 %v1343, %v359
        %v1352 = vmul.f32 %v1340, %v357
        %v1353 = vmul.f32 %v1336, %v358
        %v1354 = vmul.f32 %v1344, %v359
        %v1355 = vmul.f32 %v1341, %v357
        %v1356 = vmul.f32 %v1337, %v358
        %v1357 = vmul.f32 %v1345, %v359
        %v1358 = vpack.c.bf16 %v1347, %v1346
        %v1359 = vpack.c.bf16 %v1348, %v1348
        %v1360 = vpack.c.bf16 %v1350, %v1349
        %v1361 = vpack.c.bf16 %v1351, %v1351
        %v1362 = vpack.c.bf16 %v1353, %v1352
        %v1363 = vpack.c.bf16 %v1354, %v1354
        %v1364 = vpack.c.bf16 %v1356, %v1355
        %v1365 = vpack.c.bf16 %v1357, %v1357
        %1366 = vst [vmem:[#allocation2 + $0x120] sm:$0xff] %v1358
        %1367 = vst [vmem:[#allocation2 + $0x128] sm:$0xf] %v1359
        %1368 = vst [vmem:[#allocation2 + $0x12c] sm:$0xff] %v1360
        %1369 = vst [vmem:[#allocation2 + $0x134] sm:$0xf] %v1361
        %1370 = vst [vmem:[#allocation2 + $0x138] sm:$0xff] %v1362
        %1371 = vst [vmem:[#allocation2 + $0x140] sm:$0xf] %v1363
        %1372 = vst [vmem:[#allocation2 + $0x144] sm:$0xff] %v1364
        %1373 = vst [vmem:[#allocation2 + $0x14c] sm:$0xf] %v1365
        %1374 = vrot.lane.b32.xlu0 %v974, 112
        %v1375 = vpop.permute.xlu0 %1374
        %1376 = vrot.lane.b32.xlu0 %v977, 112
        %v1377 = vpop.permute.xlu0 %1376
        %1378 = vrot.lane.b32.xlu0 %v980, 112
        %v1379 = vpop.permute.xlu0 %1378
        %1380 = vrot.lane.b32.xlu0 %v983, 112
        %v1381 = vpop.permute.xlu0 %1380
        %1382 = vrot.lane.b32.xlu0 %v975, 112
        %v1383 = vpop.permute.xlu0 %1382
        %1384 = vrot.lane.b32.xlu0 %v978, 112
        %v1385 = vpop.permute.xlu0 %1384
        %1386 = vrot.lane.b32.xlu0 %v981, 112
        %v1387 = vpop.permute.xlu0 %1386
        %1388 = vrot.lane.b32.xlu0 %v984, 112
        %v1389 = vpop.permute.xlu0 %1388
        %1390 = vrot.lane.b32.xlu0 %v976, 112
        %v1391 = vpop.permute.xlu0 %1390
        %1392 = vrot.lane.b32.xlu0 %v979, 112
        %v1393 = vpop.permute.xlu0 %1392
        %1394 = vrot.lane.b32.xlu0 %v982, 112
        %v1395 = vpop.permute.xlu0 %1394
        %1396 = vrot.lane.b32.xlu0 %v985, 112
        %v1397 = vpop.permute.xlu0 %1396
        %v1398 = vsel %vm563, %v1383, %v1391
        %v1399 = vsel %vm563, %v1385, %v1393
        %v1400 = vsel %vm563, %v1387, %v1395
        %v1401 = vsel %vm563, %v1389, %v1397
        %v1402 = vsel %vm563, %v1375, %v1383
        %v1403 = vsel %vm563, %v1377, %v1385
        %v1404 = vsel %vm563, %v1379, %v1387
        %v1405 = vsel %vm563, %v1381, %v1389
        %v1406 = vsel %vm563, %v1391, %v1375
        %v1407 = vsel %vm563, %v1393, %v1377
        %v1408 = vsel %vm563, %v1395, %v1379
        %v1409 = vsel %vm563, %v1397, %v1381
        %v1410 = vpack.c.bf16 %v1398, %v1402
        %v1411 = vpack.c.bf16 %v1406, %v1406
        %v1412 = vpack.c.bf16 %v1399, %v1403
        %v1413 = vpack.c.bf16 %v1407, %v1407
        %v1414 = vpack.c.bf16 %v1400, %v1404
        %v1415 = vpack.c.bf16 %v1408, %v1408
        %v1416 = vpack.c.bf16 %v1401, %v1405
        %v1417 = vpack.c.bf16 %v1409, %v1409
        %1418 = vst [vmem:[#allocation2 + $0x150] sm:$0xff] %v1410
        %1419 = vst [vmem:[#allocation2 + $0x158] sm:$0xf] %v1411
        %1420 = vst [vmem:[#allocation2 + $0x15c] sm:$0xff] %v1412
        %1421 = vst [vmem:[#allocation2 + $0x164] sm:$0xf] %v1413
        %1422 = vst [vmem:[#allocation2 + $0x168] sm:$0xff] %v1414
        %1423 = vst [vmem:[#allocation2 + $0x170] sm:$0xf] %v1415
        %1424 = vst [vmem:[#allocation2 + $0x174] sm:$0xff] %v1416
        %1425 = vst [vmem:[#allocation2 + $0x17c] sm:$0xf] %v1417
        %1426 = vrot.lane.b32.xlu0 %v974, 111
        %v1427 = vpop.permute.xlu0 %1426
        %1428 = vrot.lane.b32.xlu0 %v977, 111
        %v1429 = vpop.permute.xlu0 %1428
        %1430 = vrot.lane.b32.xlu0 %v980, 111
        %v1431 = vpop.permute.xlu0 %1430
        %1432 = vrot.lane.b32.xlu0 %v983, 111
        %v1433 = vpop.permute.xlu0 %1432
        %1434 = vrot.lane.b32.xlu0 %v975, 111
        %v1435 = vpop.permute.xlu0 %1434
        %1436 = vrot.lane.b32.xlu0 %v978, 111
        %v1437 = vpop.permute.xlu0 %1436
        %1438 = vrot.lane.b32.xlu0 %v981, 111
        %v1439 = vpop.permute.xlu0 %1438
        %1440 = vrot.lane.b32.xlu0 %v984, 111
        %v1441 = vpop.permute.xlu0 %1440
        %1442 = vrot.lane.b32.xlu0 %v976, 111
        %v1443 = vpop.permute.xlu0 %1442
        %1444 = vrot.lane.b32.xlu0 %v979, 111
        %v1445 = vpop.permute.xlu0 %1444
        %1446 = vrot.lane.b32.xlu0 %v982, 111
        %v1447 = vpop.permute.xlu0 %1446
        %1448 = vrot.lane.b32.xlu0 %v985, 111
        %v1449 = vpop.permute.xlu0 %1448
        %v1450 = vsel %vm590, %v1435, %v1443
        %v1451 = vsel %vm590, %v1437, %v1445
        %v1452 = vsel %vm590, %v1439, %v1447
        %v1453 = vsel %vm590, %v1441, %v1449
        %v1454 = vsel %vm590, %v1427, %v1435
        %v1455 = vsel %vm590, %v1429, %v1437
        %v1456 = vsel %vm590, %v1431, %v1439
        %v1457 = vsel %vm590, %v1433, %v1441
        %v1458 = vsel %vm590, %v1443, %v1427
        %v1459 = vsel %vm590, %v1445, %v1429
        %v1460 = vsel %vm590, %v1447, %v1431
        %v1461 = vsel %vm590, %v1449, %v1433
        %v1462 = vmul.f32 %v1454, %v424
        %v1463 = vmul.f32 %v1450, %v425
        %v1464 = vmul.f32 %v1458, %v426
        %v1465 = vmul.f32 %v1455, %v424
        %v1466 = vmul.f32 %v1451, %v425
        %v1467 = vmul.f32 %v1459, %v426
        %v1468 = vmul.f32 %v1456, %v424
        %v1469 = vmul.f32 %v1452, %v425
        %v1470 = vmul.f32 %v1460, %v426
        %v1471 = vmul.f32 %v1457, %v424
        %v1472 = vmul.f32 %v1453, %v425
        %v1473 = vmul.f32 %v1461, %v426
        %v1474 = vpack.c.bf16 %v1463, %v1462
        %v1475 = vpack.c.bf16 %v1464, %v1464
        %v1476 = vpack.c.bf16 %v1466, %v1465
        %v1477 = vpack.c.bf16 %v1467, %v1467
        %v1478 = vpack.c.bf16 %v1469, %v1468
        %v1479 = vpack.c.bf16 %v1470, %v1470
        %v1480 = vpack.c.bf16 %v1472, %v1471
        %v1481 = vpack.c.bf16 %v1473, %v1473
        %1482 = vst [vmem:[#allocation2 + $0x180] sm:$0xff] %v1474
        %1483 = vst [vmem:[#allocation2 + $0x188] sm:$0xf] %v1475
        %1484 = vst [vmem:[#allocation2 + $0x18c] sm:$0xff] %v1476
        %1485 = vst [vmem:[#allocation2 + $0x194] sm:$0xf] %v1477
        %1486 = vst [vmem:[#allocation2 + $0x198] sm:$0xff] %v1478
        %1487 = vst [vmem:[#allocation2 + $0x1a0] sm:$0xf] %v1479
        %1488 = vst [vmem:[#allocation2 + $0x1a4] sm:$0xff] %v1480
        %1489 = vst [vmem:[#allocation2 + $0x1ac] sm:$0xf] %v1481
        %v1490 = vld [vmem:[#allocation2] sm:$0xff]
        %v1491 = vld [vmem:[#allocation2 + $0x8] sm:$0xf]
        %v1492 = vld [vmem:[#allocation2 + $0xc] sm:$0xff]
        %v1493 = vld [vmem:[#allocation2 + $0x14] sm:$0xf]
        %v1494 = vld [vmem:[#allocation2 + $0x18] sm:$0xff]
        %v1495 = vld [vmem:[#allocation2 + $0x20] sm:$0xf]
        %v1496 = vld [vmem:[#allocation2 + $0x24] sm:$0xff]
        %v1497 = vld [vmem:[#allocation2 + $0x2c] sm:$0xf]
        %v1498 = vld [vmem:[#allocation2 + $0x30] sm:$0xff]
        %v1499 = vld [vmem:[#allocation2 + $0x38] sm:$0xf]
        %v1500 = vld [vmem:[#allocation2 + $0x3c] sm:$0xff]
        %v1501 = vld [vmem:[#allocation2 + $0x44] sm:$0xf]
        %v1502 = vld [vmem:[#allocation2 + $0x48] sm:$0xff]
        %v1503 = vld [vmem:[#allocation2 + $0x50] sm:$0xf]
        %v1504 = vld [vmem:[#allocation2 + $0x54] sm:$0xff]
        %v1505 = vld [vmem:[#allocation2 + $0x5c] sm:$0xf]
        %v1506 = vld [vmem:[#allocation2 + $0x60] sm:$0xff]
        %v1507 = vld [vmem:[#allocation2 + $0x68] sm:$0xf]
        %v1508 = vld [vmem:[#allocation2 + $0x6c] sm:$0xff]
        %v1509 = vld [vmem:[#allocation2 + $0x74] sm:$0xf]
        %v1510 = vld [vmem:[#allocation2 + $0x78] sm:$0xff]
        %v1511 = vld [vmem:[#allocation2 + $0x80] sm:$0xf]
        %v1512 = vld [vmem:[#allocation2 + $0x84] sm:$0xff]
        %v1513 = vld [vmem:[#allocation2 + $0x8c] sm:$0xf]
        %v1514 = vld [vmem:[#allocation2 + $0x90] sm:$0xff]
        %v1515 = vld [vmem:[#allocation2 + $0x98] sm:$0xf]
        %v1516 = vld [vmem:[#allocation2 + $0x9c] sm:$0xff]
        %v1517 = vld [vmem:[#allocation2 + $0xa4] sm:$0xf]
        %v1518 = vld [vmem:[#allocation2 + $0xa8] sm:$0xff]
        %v1519 = vld [vmem:[#allocation2 + $0xb0] sm:$0xf]
        %v1520 = vld [vmem:[#allocation2 + $0xb4] sm:$0xff]
        %v1521 = vld [vmem:[#allocation2 + $0xbc] sm:$0xf]
        %v1522 = vld [vmem:[#allocation2 + $0xc0] sm:$0xff]
        %v1523 = vld [vmem:[#allocation2 + $0xc8] sm:$0xf]
        %v1524 = vld [vmem:[#allocation2 + $0xcc] sm:$0xff]
        %v1525 = vld [vmem:[#allocation2 + $0xd4] sm:$0xf]
        %v1526 = vld [vmem:[#allocation2 + $0xd8] sm:$0xff]
        %v1527 = vld [vmem:[#allocation2 + $0xe0] sm:$0xf]
        %v1528 = vld [vmem:[#allocation2 + $0xe4] sm:$0xff]
        %v1529 = vld [vmem:[#allocation2 + $0xec] sm:$0xf]
        %v1530 = vld [vmem:[#allocation2 + $0xf0] sm:$0xff]
        %v1531 = vld [vmem:[#allocation2 + $0xf8] sm:$0xf]
        %v1532 = vld [vmem:[#allocation2 + $0xfc] sm:$0xff]
        %v1533 = vld [vmem:[#allocation2 + $0x104] sm:$0xf]
        %v1534 = vld [vmem:[#allocation2 + $0x108] sm:$0xff]
        %v1535 = vld [vmem:[#allocation2 + $0x110] sm:$0xf]
        %v1536 = vld [vmem:[#allocation2 + $0x114] sm:$0xff]
        %v1537 = vld [vmem:[#allocation2 + $0x11c] sm:$0xf]
        %v1538 = vld [vmem:[#allocation2 + $0x120] sm:$0xff]
        %v1539 = vld [vmem:[#allocation2 + $0x128] sm:$0xf]
        %v1540 = vld [vmem:[#allocation2 + $0x12c] sm:$0xff]
        %v1541 = vld [vmem:[#allocation2 + $0x134] sm:$0xf]
        %v1542 = vld [vmem:[#allocation2 + $0x138] sm:$0xff]
        %v1543 = vld [vmem:[#allocation2 + $0x140] sm:$0xf]
        %v1544 = vld [vmem:[#allocation2 + $0x144] sm:$0xff]
        %v1545 = vld [vmem:[#allocation2 + $0x14c] sm:$0xf]
        %v1546 = vld [vmem:[#allocation2 + $0x150] sm:$0xff]
        %v1547 = vld [vmem:[#allocation2 + $0x158] sm:$0xf]
        %v1548 = vld [vmem:[#allocation2 + $0x15c] sm:$0xff]
        %v1549 = vld [vmem:[#allocation2 + $0x164] sm:$0xf]
        %v1550 = vld [vmem:[#allocation2 + $0x168] sm:$0xff]
        %v1551 = vld [vmem:[#allocation2 + $0x170] sm:$0xf]
        %v1552 = vld [vmem:[#allocation2 + $0x174] sm:$0xff]
        %v1553 = vld [vmem:[#allocation2 + $0x17c] sm:$0xf]
        %v1554 = vld [vmem:[#allocation2 + $0x180] sm:$0xff]
        %v1555 = vld [vmem:[#allocation2 + $0x188] sm:$0xf]
        %v1556 = vld [vmem:[#allocation2 + $0x18c] sm:$0xff]
        %v1557 = vld [vmem:[#allocation2 + $0x194] sm:$0xf]
        %v1558 = vld [vmem:[#allocation2 + $0x198] sm:$0xff]
        %v1559 = vld [vmem:[#allocation2 + $0x1a0] sm:$0xf]
        %v1560 = vld [vmem:[#allocation2 + $0x1a4] sm:$0xff]
        %v1561 = vld [vmem:[#allocation2 + $0x1ac] sm:$0xf]
        %1563 = vset.pattern.permute.xlu0 0
        %1564 = vperm.xlu0 %1563, %v970
        %v1565 = vpop.permute.xlu0 %1564
        %1568 = vset.pattern.permute.xlu0 0
        %1569 = vperm.xlu0 %1568, %v971
        %v1570 = vpop.permute.xlu0 %1569
        %1573 = vset.pattern.permute.xlu0 0
        %1574 = vperm.xlu0 %1573, %v972
        %v1575 = vpop.permute.xlu0 %1574
        %1578 = vset.pattern.permute.xlu0 0
        %1579 = vperm.xlu0 %1578, %v973
        %v1580 = vpop.permute.xlu0 %1579
        %v1590 = vunpack.c.l.b16 %v962
        %v1591 = vunpack.c.h.b16 %v962
        %v1592 = vunpack.c.l.b16 %v963
        %v1593 = vunpack.c.l.b16 %v964
        %v1594 = vunpack.c.h.b16 %v964
        %v1595 = vunpack.c.l.b16 %v965
        %v1596 = vunpack.c.l.b16 %v966
        %v1597 = vunpack.c.h.b16 %v966
        %v1598 = vunpack.c.l.b16 %v967
        %v1599 = vunpack.c.l.b16 %v968
        %v1600 = vunpack.c.h.b16 %v968
        %v1601 = vunpack.c.l.b16 %v969
        %v1602 = vpack.c.b16 %v1593, %v1590
        %v1603 = vpack.c.b16 %v1594, %v1591
        %v1604 = vpack.c.b16 %v1595, %v1592
        %v1605 = vpack.c.b16 %v1599, %v1596
        %v1606 = vpack.c.b16 %v1600, %v1597
        %v1607 = vpack.c.b16 %v1601, %v1598
        %v1684 = vunpack.c.l.b16 %v1490
        %v1685 = vunpack.c.h.b16 %v1490
        %v1686 = vunpack.c.l.b16 %v1491
        %v1687 = vunpack.c.l.b16 %v1492
        %v1688 = vunpack.c.h.b16 %v1492
        %v1689 = vunpack.c.l.b16 %v1493
        %v1690 = vunpack.c.l.b16 %v1494
        %v1691 = vunpack.c.h.b16 %v1494
        %v1692 = vunpack.c.l.b16 %v1495
        %v1693 = vunpack.c.l.b16 %v1496
        %v1694 = vunpack.c.h.b16 %v1496
        %v1695 = vunpack.c.l.b16 %v1497
        %v1696 = vunpack.c.l.b16 %v1498
        %v1697 = vunpack.c.h.b16 %v1498
        %v1698 = vunpack.c.l.b16 %v1499
        %v1699 = vunpack.c.l.b16 %v1500
        %v1700 = vunpack.c.h.b16 %v1500
        %v1701 = vunpack.c.l.b16 %v1501
        %v1702 = vunpack.c.l.b16 %v1502
        %v1703 = vunpack.c.h.b16 %v1502
        %v1704 = vunpack.c.l.b16 %v1503
        %v1705 = vunpack.c.l.b16 %v1504
        %v1706 = vunpack.c.h.b16 %v1504
        %v1707 = vunpack.c.l.b16 %v1505
        %v1708 = vunpack.c.l.b16 %v1506
        %v1709 = vunpack.c.h.b16 %v1506
        %v1710 = vunpack.c.l.b16 %v1507
        %v1711 = vunpack.c.l.b16 %v1508
        %v1712 = vunpack.c.h.b16 %v1508
        %v1713 = vunpack.c.l.b16 %v1509
        %v1714 = vunpack.c.l.b16 %v1510
        %v1715 = vunpack.c.h.b16 %v1510
        %v1716 = vunpack.c.l.b16 %v1511
        %v1717 = vunpack.c.l.b16 %v1512
        %v1718 = vunpack.c.h.b16 %v1512
        %v1719 = vunpack.c.l.b16 %v1513
        %v1720 = vunpack.c.l.b16 %v1514
        %v1721 = vunpack.c.h.b16 %v1514
        %v1722 = vunpack.c.l.b16 %v1515
        %v1723 = vunpack.c.l.b16 %v1516
        %v1724 = vunpack.c.h.b16 %v1516
        %v1725 = vunpack.c.l.b16 %v1517
        %v1726 = vunpack.c.l.b16 %v1518
        %v1727 = vunpack.c.h.b16 %v1518
        %v1728 = vunpack.c.l.b16 %v1519
        %v1729 = vunpack.c.l.b16 %v1520
        %v1730 = vunpack.c.h.b16 %v1520
        %v1731 = vunpack.c.l.b16 %v1521
        %v1732 = vunpack.c.l.b16 %v1522
        %v1733 = vunpack.c.h.b16 %v1522
        %v1734 = vunpack.c.l.b16 %v1523
        %v1735 = vunpack.c.l.b16 %v1524
        %v1736 = vunpack.c.h.b16 %v1524
        %v1737 = vunpack.c.l.b16 %v1525
        %v1738 = vunpack.c.l.b16 %v1526
        %v1739 = vunpack.c.h.b16 %v1526
        %v1740 = vunpack.c.l.b16 %v1527
        %v1741 = vunpack.c.l.b16 %v1528
        %v1742 = vunpack.c.h.b16 %v1528
        %v1743 = vunpack.c.l.b16 %v1529
        %v1744 = vunpack.c.l.b16 %v1530
        %v1745 = vunpack.c.h.b16 %v1530
        %v1746 = vunpack.c.l.b16 %v1531
        %v1747 = vunpack.c.l.b16 %v1532
        %v1748 = vunpack.c.h.b16 %v1532
        %v1749 = vunpack.c.l.b16 %v1533
        %v1750 = vunpack.c.l.b16 %v1534
        %v1751 = vunpack.c.h.b16 %v1534
        %v1752 = vunpack.c.l.b16 %v1535
        %v1753 = vunpack.c.l.b16 %v1536
        %v1754 = vunpack.c.h.b16 %v1536
        %v1755 = vunpack.c.l.b16 %v1537
        %v1756 = vunpack.c.l.b16 %v1538
        %v1757 = vunpack.c.h.b16 %v1538
        %v1758 = vunpack.c.l.b16 %v1539
        %v1759 = vunpack.c.l.b16 %v1540
        %v1760 = vunpack.c.h.b16 %v1540
        %v1761 = vunpack.c.l.b16 %v1541
        %v1762 = vunpack.c.l.b16 %v1542
        %v1763 = vunpack.c.h.b16 %v1542
        %v1764 = vunpack.c.l.b16 %v1543
        %v1765 = vunpack.c.l.b16 %v1544
        %v1766 = vunpack.c.h.b16 %v1544
        %v1767 = vunpack.c.l.b16 %v1545
        %v1768 = vunpack.c.l.b16 %v1546
        %v1769 = vunpack.c.h.b16 %v1546
        %v1770 = vunpack.c.l.b16 %v1547
        %v1771 = vunpack.c.l.b16 %v1548
        %v1772 = vunpack.c.h.b16 %v1548
        %v1773 = vunpack.c.l.b16 %v1549
        %v1774 = vunpack.c.l.b16 %v1550
        %v1775 = vunpack.c.h.b16 %v1550
        %v1776 = vunpack.c.l.b16 %v1551
        %v1777 = vunpack.c.l.b16 %v1552
        %v1778 = vunpack.c.h.b16 %v1552
        %v1779 = vunpack.c.l.b16 %v1553
        %v1780 = vunpack.c.l.b16 %v1554
        %v1781 = vunpack.c.h.b16 %v1554
        %v1782 = vunpack.c.l.b16 %v1555
        %v1783 = vunpack.c.l.b16 %v1556
        %v1784 = vunpack.c.h.b16 %v1556
        %v1785 = vunpack.c.l.b16 %v1557
        %v1786 = vunpack.c.l.b16 %v1558
        %v1787 = vunpack.c.h.b16 %v1558
        %v1788 = vunpack.c.l.b16 %v1559
        %v1789 = vunpack.c.l.b16 %v1560
        %v1790 = vunpack.c.h.b16 %v1560
        %v1791 = vunpack.c.l.b16 %v1561
        %v1792 = vpack.c.b16 %v1687, %v1684
        %v1793 = vpack.c.b16 %v1688, %v1685
        %v1794 = vpack.c.b16 %v1689, %v1686
        %v1795 = vpack.c.b16 %v1693, %v1690
        %v1796 = vpack.c.b16 %v1694, %v1691
        %v1797 = vpack.c.b16 %v1695, %v1692
        %v1798 = vpack.c.b16 %v1699, %v1696
        %v1799 = vpack.c.b16 %v1700, %v1697
        %v1800 = vpack.c.b16 %v1701, %v1698
        %v1801 = vpack.c.b16 %v1705, %v1702
        %v1802 = vpack.c.b16 %v1706, %v1703
        %v1803 = vpack.c.b16 %v1707, %v1704
        %v1804 = vpack.c.b16 %v1711, %v1708
        %v1805 = vpack.c.b16 %v1712, %v1709
        %v1806 = vpack.c.b16 %v1713, %v1710
        %v1807 = vpack.c.b16 %v1717, %v1714
        %v1808 = vpack.c.b16 %v1718, %v1715
        %v1809 = vpack.c.b16 %v1719, %v1716
        %v1810 = vpack.c.b16 %v1723, %v1720
        %v1811 = vpack.c.b16 %v1724, %v1721
        %v1812 = vpack.c.b16 %v1725, %v1722
        %v1813 = vpack.c.b16 %v1729, %v1726
        %v1814 = vpack.c.b16 %v1730, %v1727
        %v1815 = vpack.c.b16 %v1731, %v1728
        %v1816 = vpack.c.b16 %v1735, %v1732
        %v1817 = vpack.c.b16 %v1736, %v1733
        %v1818 = vpack.c.b16 %v1737, %v1734
        %v1819 = vpack.c.b16 %v1741, %v1738
        %v1820 = vpack.c.b16 %v1742, %v1739
        %v1821 = vpack.c.b16 %v1743, %v1740
        %v1822 = vpack.c.b16 %v1747, %v1744
        %v1823 = vpack.c.b16 %v1748, %v1745
        %v1824 = vpack.c.b16 %v1749, %v1746
        %v1825 = vpack.c.b16 %v1753, %v1750
        %v1826 = vpack.c.b16 %v1754, %v1751
        %v1827 = vpack.c.b16 %v1755, %v1752
        %v1828 = vpack.c.b16 %v1759, %v1756
        %v1829 = vpack.c.b16 %v1760, %v1757
        %v1830 = vpack.c.b16 %v1761, %v1758
        %v1831 = vpack.c.b16 %v1765, %v1762
        %v1832 = vpack.c.b16 %v1766, %v1763
        %v1833 = vpack.c.b16 %v1767, %v1764
        %v1834 = vpack.c.b16 %v1771, %v1768
        %v1835 = vpack.c.b16 %v1772, %v1769
        %v1836 = vpack.c.b16 %v1773, %v1770
        %v1837 = vpack.c.b16 %v1777, %v1774
        %v1838 = vpack.c.b16 %v1778, %v1775
        %v1839 = vpack.c.b16 %v1779, %v1776
        %v1840 = vpack.c.b16 %v1783, %v1780
        %v1841 = vpack.c.b16 %v1784, %v1781
        %v1842 = vpack.c.b16 %v1785, %v1782
        %v1843 = vpack.c.b16 %v1789, %v1786
        %v1844 = vpack.c.b16 %v1790, %v1787
        %v1845 = vpack.c.b16 %v1791, %v1788
        %vm1900 = vcmask 261120
        %v1902 = vsel %vm1900, %v1604, 0
        %v1905 = vsel %vm1900, %v1607, 0
        %1907 = vmatpush.bf16.msra.mxu0 %v1813
        %1908 = vmatpush.bf16.msra.mxu0 %v1810
        %1909 = vmatpush.bf16.msra.mxu0 %v1807
        %1910 = vmatpush.bf16.msra.mxu0 %v1804
        %1911 = vmatpush.bf16.msra.mxu0 %v1801
        %1912 = vmatpush.bf16.msra.mxu0 %v1798
        %1913 = vmatpush.bf16.msra.mxu0 %v1795
        %1914 = vmatpush.bf16.msra.mxu0 %v1792
        %1915 = vmatmul.bf16.gmra.mxu0 %v1602
        %v1916 = vpop.f32.mrf.mxu0
        %v1917 = vadd.f32 %v1565, %v1916
        %v1918 = vpop.f32.mrf.mxu0
        %v1919 = vadd.f32 %v1570, %v1918
        %1920 = vmatmul.bf16.gmra.mxu0 %v1605
        %v1921 = vpop.f32.mrf.mxu0
        %v1922 = vadd.f32 %v1575, %v1921
        %v1923 = vpop.f32.mrf.mxu0
        %v1924 = vadd.f32 %v1580, %v1923
        %1925 = vdwg.mxu0
        %1926 = vmatpush.bf16.msra.mxu0 %v1837
        %1927 = vmatpush.bf16.msra.mxu0 %v1834
        %1928 = vmatpush.bf16.msra.mxu0 %v1831
        %1929 = vmatpush.bf16.msra.mxu0 %v1828
        %1930 = vmatpush.bf16.msra.mxu0 %v1825
        %1931 = vmatpush.bf16.msra.mxu0 %v1822
        %1932 = vmatpush.bf16.msra.mxu0 %v1819
        %1933 = vmatpush.bf16.msra.mxu0 %v1816
        %1934 = vmatmul.bf16.gmra.mxu0 %v1603
        %v1935 = vpop.f32.mrf.mxu0
        %v1936 = vadd.f32 %v1917, %v1935
        %v1937 = vpop.f32.mrf.mxu0
        %v1938 = vadd.f32 %v1919, %v1937
        %1939 = vmatmul.bf16.gmra.mxu0 %v1606
        %v1940 = vpop.f32.mrf.mxu0
        %v1941 = vadd.f32 %v1922, %v1940
        %v1942 = vpop.f32.mrf.mxu0
        %v1943 = vadd.f32 %v1924, %v1942
        %1944 = vdwg.mxu0
        %1945 = vmatpush.bf16.msra.mxu0 0
        %1946 = vmatpush.bf16.msra.mxu0 0
        %1947 = vmatpush.bf16.msra.mxu0 0
        %1948 = vmatpush.bf16.msra.mxu0 0
        %1949 = vmatpush.bf16.msra.mxu0 0
        %1950 = vmatpush.bf16.msra.mxu0 0
        %1951 = vmatpush.bf16.msra.mxu0 %v1843
        %1952 = vmatpush.bf16.msra.mxu0 %v1840
        %1953 = vmatmul.bf16.gmra.mxu0 %v1902
        %v1954 = vpop.f32.mrf.mxu0
        %v1955 = vadd.f32 %v1936, %v1954
        %v1956 = vpop.f32.mrf.mxu0
        %v1957 = vadd.f32 %v1938, %v1956
        %1958 = vmatmul.bf16.gmra.mxu0 %v1905
        %v1959 = vpop.f32.mrf.mxu0
        %v1960 = vadd.f32 %v1941, %v1959
        %v1961 = vpop.f32.mrf.mxu0
        %v1962 = vadd.f32 %v1943, %v1961
        %1963 = vdwg.mxu0
        %1964 = vmatpush.bf16.msra.mxu0 %v1814
        %1965 = vmatpush.bf16.msra.mxu0 %v1811
        %1966 = vmatpush.bf16.msra.mxu0 %v1808
        %1967 = vmatpush.bf16.msra.mxu0 %v1805
        %1968 = vmatpush.bf16.msra.mxu0 %v1802
        %1969 = vmatpush.bf16.msra.mxu0 %v1799
        %1970 = vmatpush.bf16.msra.mxu0 %v1796
        %1971 = vmatpush.bf16.msra.mxu0 %v1793
        %1972 = vmatmul.bf16.gmra.mxu0 %v1602
        %v1973 = vpop.f32.mrf.mxu0
        %v1974 = vadd.f32 %v1565, %v1973
        %v1975 = vpop.f32.mrf.mxu0
        %v1976 = vadd.f32 %v1570, %v1975
        %1977 = vmatmul.bf16.gmra.mxu0 %v1605
        %v1978 = vpop.f32.mrf.mxu0
        %v1979 = vadd.f32 %v1575, %v1978
        %v1980 = vpop.f32.mrf.mxu0
        %v1981 = vadd.f32 %v1580, %v1980
        %1982 = vdwg.mxu0
        %1983 = vmatpush.bf16.msra.mxu0 %v1838
        %1984 = vmatpush.bf16.msra.mxu0 %v1835
        %1985 = vmatpush.bf16.msra.mxu0 %v1832
        %1986 = vmatpush.bf16.msra.mxu0 %v1829
        %1987 = vmatpush.bf16.msra.mxu0 %v1826
        %1988 = vmatpush.bf16.msra.mxu0 %v1823
        %1989 = vmatpush.bf16.msra.mxu0 %v1820
        %1990 = vmatpush.bf16.msra.mxu0 %v1817
        %1991 = vmatmul.bf16.gmra.mxu0 %v1603
        %v1992 = vpop.f32.mrf.mxu0
        %v1993 = vadd.f32 %v1974, %v1992
        %v1994 = vpop.f32.mrf.mxu0
        %v1995 = vadd.f32 %v1976, %v1994
        %1996 = vmatmul.bf16.gmra.mxu0 %v1606
        %v1997 = vpop.f32.mrf.mxu0
        %v1998 = vadd.f32 %v1979, %v1997
        %v1999 = vpop.f32.mrf.mxu0
        %v2000 = vadd.f32 %v1981, %v1999
        %2001 = vdwg.mxu0
        %2002 = vmatpush.bf16.msra.mxu0 0
        %2003 = vmatpush.bf16.msra.mxu0 0
        %2004 = vmatpush.bf16.msra.mxu0 0
        %2005 = vmatpush.bf16.msra.mxu0 0
        %2006 = vmatpush.bf16.msra.mxu0 0
        %2007 = vmatpush.bf16.msra.mxu0 0
        %2008 = vmatpush.bf16.msra.mxu0 %v1844
        %2009 = vmatpush.bf16.msra.mxu0 %v1841
        %2010 = vmatmul.bf16.gmra.mxu0 %v1902
        %v2011 = vpop.f32.mrf.mxu0
        %v2012 = vadd.f32 %v1993, %v2011
        %v2013 = vpop.f32.mrf.mxu0
        %v2014 = vadd.f32 %v1995, %v2013
        %2015 = vmatmul.bf16.gmra.mxu0 %v1905
        %v2016 = vpop.f32.mrf.mxu0
        %v2017 = vadd.f32 %v1998, %v2016
        %v2018 = vpop.f32.mrf.mxu0
        %v2019 = vadd.f32 %v2000, %v2018
        %2020 = vdwg.mxu0
        %2021 = vmatpush.bf16.msra.mxu0 %v1815
        %2022 = vmatpush.bf16.msra.mxu0 %v1812
        %2023 = vmatpush.bf16.msra.mxu0 %v1809
        %2024 = vmatpush.bf16.msra.mxu0 %v1806
        %2025 = vmatpush.bf16.msra.mxu0 %v1803
        %2026 = vmatpush.bf16.msra.mxu0 %v1800
        %2027 = vmatpush.bf16.msra.mxu0 %v1797
        %2028 = vmatpush.bf16.msra.mxu0 %v1794
        %2029 = vmatmul.bf16.gmra.mxu0 %v1602
        %v2030 = vpop.f32.mrf.mxu0
        %v2031 = vadd.f32 %v1565, %v2030
        %v2032 = vpop.f32.mrf.mxu0
        %v2033 = vadd.f32 %v1570, %v2032
        %2034 = vmatmul.bf16.gmra.mxu0 %v1605
        %v2035 = vpop.f32.mrf.mxu0
        %v2036 = vadd.f32 %v1575, %v2035
        %v2037 = vpop.f32.mrf.mxu0
        %v2038 = vadd.f32 %v1580, %v2037
        %2039 = vdwg.mxu0
        %2040 = vmatpush.bf16.msra.mxu0 %v1839
        %2041 = vmatpush.bf16.msra.mxu0 %v1836
        %2042 = vmatpush.bf16.msra.mxu0 %v1833
        %2043 = vmatpush.bf16.msra.mxu0 %v1830
        %2044 = vmatpush.bf16.msra.mxu0 %v1827
        %2045 = vmatpush.bf16.msra.mxu0 %v1824
        %2046 = vmatpush.bf16.msra.mxu0 %v1821
        %2047 = vmatpush.bf16.msra.mxu0 %v1818
        %2048 = vmatmul.bf16.gmra.mxu0 %v1603
        %v2049 = vpop.f32.mrf.mxu0
        %v2050 = vadd.f32 %v2031, %v2049
        %v2051 = vpop.f32.mrf.mxu0
        %v2052 = vadd.f32 %v2033, %v2051
        %2053 = vmatmul.bf16.gmra.mxu0 %v1606
        %v2054 = vpop.f32.mrf.mxu0
        %v2055 = vadd.f32 %v2036, %v2054
        %v2056 = vpop.f32.mrf.mxu0
        %v2057 = vadd.f32 %v2038, %v2056
        %2058 = vdwg.mxu0
        %2059 = vmatpush.bf16.msra.mxu0 0
        %2060 = vmatpush.bf16.msra.mxu0 0
        %2061 = vmatpush.bf16.msra.mxu0 0
        %2062 = vmatpush.bf16.msra.mxu0 0
        %2063 = vmatpush.bf16.msra.mxu0 0
        %2064 = vmatpush.bf16.msra.mxu0 0
        %2065 = vmatpush.bf16.msra.mxu0 %v1845
        %2066 = vmatpush.bf16.msra.mxu0 %v1842
        %2067 = vmatmul.bf16.gmra.mxu0 %v1902
        %v2068 = vpop.f32.mrf.mxu0
        %v2069 = vadd.f32 %v2050, %v2068
        %v2070 = vpop.f32.mrf.mxu0
        %v2071 = vadd.f32 %v2052, %v2070
        %2072 = vmatmul.bf16.gmra.mxu0 %v1905
        %v2073 = vpop.f32.mrf.mxu0
        %v2074 = vadd.f32 %v2055, %v2073
        %v2075 = vpop.f32.mrf.mxu0
        %v2076 = vadd.f32 %v2057, %v2075
        %2077 = vdwg.mxu0
        %v2078 = vmax.f32 %v1955, 0.0
        %v2079 = vmax.f32 %v2012, 0.0
        %v2080 = vmax.f32 %v2069, 0.0
        %v2081 = vmax.f32 %v1957, 0.0
        %v2082 = vmax.f32 %v2014, 0.0
        %v2083 = vmax.f32 %v2071, 0.0
        %v2084 = vmax.f32 %v1960, 0.0
        %v2085 = vmax.f32 %v2017, 0.0
        %v2086 = vmax.f32 %v2074, 0.0
        %v2087 = vmax.f32 %v1962, 0.0
        %v2088 = vmax.f32 %v2019, 0.0
        %v2089 = vmax.f32 %v2076, 0.0
        %2090 = vst [vmem:[%s292] sm:$0xff] %v2078
        %2091 = vst [vmem:[%s292 + $0x8] sm:$0xff] %v2079
        %2092 = vst [vmem:[%s292 + $0x10] sm:$0xff] %v2080
        %2093 = vst [vmem:[%s292 + $0x18] sm:$0xff] %v2081
        %2094 = vst [vmem:[%s292 + $0x20] sm:$0xff] %v2082
        %2095 = vst [vmem:[%s292 + $0x28] sm:$0xff] %v2083
        %2096 = vst [vmem:[%s292 + $0x30] sm:$0xff] %v2084
        %2097 = vst [vmem:[%s292 + $0x38] sm:$0xff] %v2085
        %2098 = vst [vmem:[%s292 + $0x40] sm:$0xff] %v2086
        %2099 = vst [vmem:[%s292 + $0x48] sm:$0xff] %v2087
        %2100 = vst [vmem:[%s292 + $0x50] sm:$0xff] %v2088
        %2101 = vst [vmem:[%s292 + $0x58] sm:$0xff] %v2089
        %s2102 = sand.u32 %s161, 1
        %s2103 = scalar_lea.sflag [#allocation5], %s2102
        %s2104 = sand.u32 %s161, 1
        %s2105 = smul.addr %s2104, 96
        %s2106 = scalar_lea.vmem [#allocation9], %s2105
        // Predicated region
        $region57: #{tpu_custom_call.1} parent=43 // pred_check
          %p2107 = pneg %p171
        $region58: #{tpu_custom_call.1} parent=43 // pred_check_branch
          %2109 = sbr.rel (%p2107) target = $region60
        $region59: #{tpu_custom_call.1} parent=43 // pred_region
          %2111 = vsyncadd %s2103, 0
          %s2112 = smul.addr %s22, 12
          %s2113 = smul.addr %s2112, 8
          %s2114 = scalar_lea.hbm %s6, %s2113
          %s2115 = sshll.u32 %s2106, 4
          %s2116 = int_to_ptr.vmem [resolvable:$true] %s2115
          %s2117 = sshll.u32 %s2114, 4
          %s2118 = int_to_ptr.hbm [resolvable:$true] %s2117
          %2123 = dma.vmem_to_hbm [thread:$0]  %s2116, 1536, %s2118, %s2103, 384, 384, 24
        $region60: #{tpu_custom_call.1} parent=43 // pred_fallthru
          _
      $region44: #{tpu_custom_call.1} parent=5 // pred_fallthru
        _
      %p2124 = scmp.le.s32.totalorder 2, %s17
      // Predicated region
      $region61: #{tpu_custom_call.1} parent=5 // pred_check
        %p2125 = pneg %p2124
      $region62: #{tpu_custom_call.1} parent=5 // pred_check_branch
        %2127 = sbr.rel (%p2125) target = $region64
      $region63: #{tpu_custom_call.1} parent=5 // pred_region
        %s2128 = ssub.s32 %s17, 2
        // Predicated region
        $region65: #{tpu_custom_call.1} parent=63 // pred_check
          %p2129 = pneg %p177
        $region66: #{tpu_custom_call.1} parent=63 // pred_check_branch
          %2131 = sbr.rel (%p2129) target = $region68
        $region67: #{tpu_custom_call.1} parent=63 // pred_region
          %s2132 = sand.u32 %s162, 1
          %s2133 = scalar_lea.sflag [#allocation5], %s2132
          %s2134 = sand.u32 %s162, 1
          %s2135 = smul.addr %s2134, 96
          %s2136 = scalar_lea.vmem [#allocation9], %s2135
          %2138 = dma.done %s2133, 1536
        $region68: #{tpu_custom_call.1} parent=63 // pred_fallthru
          _
      $region64: #{tpu_custom_call.1} parent=5 // pred_fallthru
        _
    $region6: #{tpu_custom_call.1} parent=1 // loop_footer
      %s21 = sadd.s32 1, %s17
    $region7: #{tpu_custom_call.1} parent=1 // loop_footer_branch
      %16 = sbr.rel target = $region3
    $region8: #{tpu_custom_call.1} parent=1 // loop_exit
      _
    %2139 = vsyncpa [#allocation4], 1
    %s2140 = scalar_lea.sflag [#allocation4], 1
    %2141 = vsyncpa %s2140, 1
    %2142 = vsyncpa [#allocation7], 1
    %2143 = vsyncpa [#allocation5], 1
    %s2144 = scalar_lea.sflag [#allocation5], 1
    %2145 = vsyncpa %s2144, 1

// kernel: tpu_custom_call.1
$region0: #{tpu_custom_call.1}
  #allocation0 [shape = 'u32[]', space=smem, size = 0x4, offset = 0x4, fixed_abs, tag = 'smem constant byte address 0x4 - core index']
  #allocation1 [shape = 'u32[72,128]{1,0:T(1,128)}', space=vmem, size = 0x9000, scoped, tag = 'internal scratch']
  #allocation2 [shape = 'bf16[288,384]{1,0:T(8,128)(2,1)}', space=vmem, size = 0x36000, scoped, tag = 'scratch operand']
  %s0 = inlined_call_operand.vmem [shape: bf16[2,16,384], index: 0, kind: input, shape index: {}]
  %s1 = inlined_call_operand.hbm [shape: f32[8,384], index: 1, kind: input, shape index: {}]
  %s2 = inlined_call_operand.hbm [shape: bf16[32,144], index: 2, kind: input, shape index: {}]
  %s3 = inlined_call_operand.vmem [shape: f32[32,1], index: 3, kind: input, shape index: {}]
  %s4 = inlined_call_operand.hbm [shape: bf16[32,288], index: 4, kind: input, shape index: {}]
  %s5 = inlined_call_operand.vmem [shape: f32[32,1], index: 5, kind: input, shape index: {}]
  %s6 = inlined_call_operand.hbm [shape: f32[2,32,384], index: 6, kind: output, shape index: {}]
  %s7 = sld [smem:[#allocation0]]
  $region69: #{tpu_custom_call.1} parent=0
    _
  %s9 = ssub.s32 1, %s7
  %s10 = scalar_select 0, %s9, %s7
  $region1: #{tpu_custom_call.1} parent=0
    #allocation3 [shape = 'u8[12288]{0}', space=vmem, size = 0x3000, scoped, tag = 'input window, operand 1, single buffered']
    #allocation4 [shape = 's32[2]{0}', space=sflag, size = 0x8, scoped, tag = 'scoped memory for tpu_custom_call.1']
    #allocation5 [shape = 's32[2]{0}', space=sflag, size = 0x8, scoped, tag = 'scoped memory for tpu_custom_call.1']
    #allocation6 [shape = 'u8[16384]{0}', space=vmem, size = 0x4000, scoped, tag = 'input window, operand 2, single buffered']
    #allocation7 [shape = 's32[1]{0}', space=sflag, size = 0x4, scoped, tag = 'scoped memory for tpu_custom_call.1']
    #allocation8 [shape = 'u8[24576]{0}', space=vmem, size = 0x6000, scoped, tag = 'input window, operand 4, single buffered']
    #allocation9 [shape = 'u8[98304]{0}', space=vmem, size = 0x18000, scoped, tag = 'output window, operand 0']
    %11 = vsyncpa [#allocation4], 0
    %12 = vsyncpa [#allocation7], 0
    %13 = vsyncpa [#allocation5], 0
    %s14 = scalar_lea.sflag [#allocation5], 1
    %15 = vsyncpa %s14, 0
    loop: start=0, step=1, limit=4
    $region2: #{tpu_custom_call.1} parent=1 // loop_pre_header
      _
    $region3: #{tpu_custom_call.1} parent=1 // loop_header
      %s17 = sphi 0, %s21
      %p18 = scmp.ge.s32.totalorder %s17, 4
      %s27 = sphi 0, %s29
      %s30 = sphi 0, %s27
      %s31 = sphi 0, %s30
      %s47 = sphi 0, %s31
      %s51 = sphi 0, %s51
      %s53 = sphi 0, %s51
      %s54 = sphi 0, %s53
      %s68 = sphi 0, %s54
      %s72 = sphi 0, %s72
      %s74 = sphi 0, %s72
      %s75 = sphi 0, %s74
      %s89 = sphi 0, %s75
      %s93 = sphi 0, %s93
      %s95 = sphi 0, %s93
      %s96 = sphi 0, %s95
      %s110 = sphi 0, %s96
      %s114 = sphi 0, %s114
      %s116 = sphi 0, %s114
      %s117 = sphi 0, %s116
      %s131 = sphi 0, %s117
      %s135 = sphi 0, %s135
      %s137 = sphi 0, %s135
      %s138 = sphi 0, %s137
      %s152 = sphi 0, %s138
      %s158 = sphi 0, %s160
      %s161 = sphi 0, %s158
      %s162 = sphi 0, %s161
      %s178 = sphi 0, %s162
    $region4: #{tpu_custom_call.1} parent=1 // loop_header_branch
      %20 = sbr.rel (%p18) target = $region8
    $region5: #{tpu_custom_call.1} parent=1 // loop_body
      %s22 = ssub.s32 %s17, 1
      %s23 = ssub.s32 %s17, 2
      %s24 = sadd.s32 %s17, 1
      %s25 = ssub.s32 %s17, %s24
      %p26 = scmp.eq.s32.totalorder %s25, 0
      %s28 = sadd.s32 %s27, 1
      %s29 = scalar_select %p26, %s27, %s28
      %p32 = pneg %p26
      %p33 = scmp.eq.s32.totalorder %s17, 1
      %p34 = por %p32, %p33
      %p35 = scmp.ne.s32.totalorder %s27, %s30
      %p36 = scmp.eq.s32.totalorder %s17, 0
      %p37 = por %p35, %p36
      %p38 = scmp.ne.s32.totalorder %s27, %s30
      %p39 = scmp.eq.s32.totalorder %s22, 1
      %p40 = por %p38, %p39
      %p41 = scmp.ne.s32.totalorder %s30, %s31
      %p42 = scmp.eq.s32.totalorder %s22, 0
      %p43 = por %p41, %p42
      %p44 = scmp.ne.s32.totalorder %s30, %s31
      %p45 = scmp.eq.s32.totalorder %s23, 1
      %p46 = por %p44, %p45
      %p48 = scmp.ne.s32.totalorder %s31, %s47
      %p49 = scmp.eq.s32.totalorder %s23, 0
      %p50 = por %p48, %p49
      %s52 = sadd.s32 %s51, 1
      %p55 = scmp.eq.s32.totalorder %s17, 1
      %p56 = scmp.ne.s32.totalorder %s51, %s53
      %p57 = scmp.eq.s32.totalorder %s17, 0
      %p58 = por %p56, %p57
      %p59 = scmp.ne.s32.totalorder %s51, %s53
      %p60 = scmp.eq.s32.totalorder %s22, 1
      %p61 = por %p59, %p60
      %p62 = scmp.ne.s32.totalorder %s53, %s54
      %p63 = scmp.eq.s32.totalorder %s22, 0
      %p64 = por %p62, %p63
      %p65 = scmp.ne.s32.totalorder %s53, %s54
      %p66 = scmp.eq.s32.totalorder %s23, 1
      %p67 = por %p65, %p66
      %p69 = scmp.ne.s32.totalorder %s54, %s68
      %p70 = scmp.eq.s32.totalorder %s23, 0
      %p71 = por %p69, %p70
      %s73 = sadd.s32 %s72, 1
      %p76 = scmp.eq.s32.totalorder %s17, 1
      %p77 = scmp.ne.s32.totalorder %s72, %s74
      %p78 = scmp.eq.s32.totalorder %s17, 0
      %p79 = por %p77, %p78
      %p80 = scmp.ne.s32.totalorder %s72, %s74
      %p81 = scmp.eq.s32.totalorder %s22, 1
      %p82 = por %p80, %p81
      %p83 = scmp.ne.s32.totalorder %s74, %s75
      %p84 = scmp.eq.s32.totalorder %s22, 0
      %p85 = por %p83, %p84
      %p86 = scmp.ne.s32.totalorder %s74, %s75
      %p87 = scmp.eq.s32.totalorder %s23, 1
      %p88 = por %p86, %p87
      %p90 = scmp.ne.s32.totalorder %s75, %s89
      %p91 = scmp.eq.s32.totalorder %s23, 0
      %p92 = por %p90, %p91
      %s94 = sadd.s32 %s93, 1
      %p97 = scmp.eq.s32.totalorder %s17, 1
      %p98 = scmp.ne.s32.totalorder %s93, %s95
      %p99 = scmp.eq.s32.totalorder %s17, 0
      %p100 = por %p98, %p99
      %p101 = scmp.ne.s32.totalorder %s93, %s95
      %p102 = scmp.eq.s32.totalorder %s22, 1
      %p103 = por %p101, %p102
      %p104 = scmp.ne.s32.totalorder %s95, %s96
      %p105 = scmp.eq.s32.totalorder %s22, 0
      %p106 = por %p104, %p105
      %p107 = scmp.ne.s32.totalorder %s95, %s96
      %p108 = scmp.eq.s32.totalorder %s23, 1
      %p109 = por %p107, %p108
      %p111 = scmp.ne.s32.totalorder %s96, %s110
      %p112 = scmp.eq.s32.totalorder %s23, 0
      %p113 = por %p111, %p112
      %s115 = sadd.s32 %s114, 1
      %p118 = scmp.eq.s32.totalorder %s17, 1
      %p119 = scmp.ne.s32.totalorder %s114, %s116
      %p120 = scmp.eq.s32.totalorder %s17, 0
      %p121 = por %p119, %p120
      %p122 = scmp.ne.s32.totalorder %s114, %s116
      %p123 = scmp.eq.s32.totalorder %s22, 1
      %p124 = por %p122, %p123
      %p125 = scmp.ne.s32.totalorder %s116, %s117
      %p126 = scmp.eq.s32.totalorder %s22, 0
      %p127 = por %p125, %p126
      %p128 = scmp.ne.s32.totalorder %s116, %s117
      %p129 = scmp.eq.s32.totalorder %s23, 1
      %p130 = por %p128, %p129
      %p132 = scmp.ne.s32.totalorder %s117, %s131
      %p133 = scmp.eq.s32.totalorder %s23, 0
      %p134 = por %p132, %p133
      %s136 = sadd.s32 %s135, 1
      %p139 = scmp.eq.s32.totalorder %s17, 1
      %p140 = scmp.ne.s32.totalorder %s135, %s137
      %p141 = scmp.eq.s32.totalorder %s17, 0
      %p142 = por %p140, %p141
      %p143 = scmp.ne.s32.totalorder %s135, %s137
      %p144 = scmp.eq.s32.totalorder %s22, 1
      %p145 = por %p143, %p144
      %p146 = scmp.ne.s32.totalorder %s137, %s138
      %p147 = scmp.eq.s32.totalorder %s22, 0
      %p148 = por %p146, %p147
      %p149 = scmp.ne.s32.totalorder %s137, %s138
      %p150 = scmp.eq.s32.totalorder %s23, 1
      %p151 = por %p149, %p150
      %p153 = scmp.ne.s32.totalorder %s138, %s152
      %p154 = scmp.eq.s32.totalorder %s23, 0
      %p155 = por %p153, %p154
      %s156 = ssub.s32 %s17, %s24
      %p157 = scmp.eq.s32.totalorder %s156, 0
      %s159 = sadd.s32 %s158, 1
      %s160 = scalar_select %p157, %s158, %s159
      %p163 = pneg %p157
      %p164 = scmp.eq.s32.totalorder %s17, 1
      %p165 = por %p163, %p164
      %p166 = scmp.ne.s32.totalorder %s158, %s161
      %p167 = scmp.eq.s32.totalorder %s17, 0
      %p168 = por %p166, %p167
      %p169 = scmp.ne.s32.totalorder %s158, %s161
      %p170 = scmp.eq.s32.totalorder %s22, 1
      %p171 = por %p169, %p170
      %p172 = scmp.ne.s32.totalorder %s161, %s162
      %p173 = scmp.eq.s32.totalorder %s22, 0
      %p174 = por %p172, %p173
      %p175 = scmp.ne.s32.totalorder %s161, %s162
      %p176 = scmp.eq.s32.totalorder %s23, 1
      %p177 = por %p175, %p176
      %p179 = scmp.ne.s32.totalorder %s162, %s178
      %p180 = scmp.eq.s32.totalorder %s23, 0
      %p181 = por %p179, %p180
      %p182 = scmp.le.s32.totalorder 1, %s17
      %p183 = scmp.lt.s32.totalorder %s17, 3
      %p184 = pnand %p182, %p183
      %p185 = pneg %p184
      // Predicated region
      $region9: #{tpu_custom_call.1} parent=5 // pred_check
        _
      $region10: #{tpu_custom_call.1} parent=5 // pred_check_branch
        %187 = sbr.rel (%p184) target = $region12
      $region11: #{tpu_custom_call.1} parent=5 // pred_region
        %s188 = ssub.s32 %s17, 1
        // Predicated region
        $region13: #{tpu_custom_call.1} parent=11 // pred_check
          %p189 = pneg %p64
        $region14: #{tpu_custom_call.1} parent=11 // pred_check_branch
          %191 = sbr.rel (%p189) target = $region16
        $region15: #{tpu_custom_call.1} parent=11 // pred_region
          %193 = vsyncadd [#allocation4], 0
          %s195 = sshll.u32 %s1, 4
          %s196 = int_to_ptr.hbm [resolvable:$true] %s195
          %s197 = sshll.u32 [#allocation3], 4
          %s198 = int_to_ptr.vmem [resolvable:$true] %s197
          %200 = dma.hbm_to_vmem [thread:$0]  %s196, 384, %s198, [#allocation4]
        $region16: #{tpu_custom_call.1} parent=11 // pred_fallthru
          _
        // Predicated region
        $region17: #{tpu_custom_call.1} parent=11 // pred_check
          %p201 = pneg %p85
        $region18: #{tpu_custom_call.1} parent=11 // pred_check_branch
          %203 = sbr.rel (%p201) target = $region20
        $region19: #{tpu_custom_call.1} parent=11 // pred_region
          %205 = vsyncadd [#allocation7], 0
          %s206 = sshll.u32 %s2, 4
          %s207 = int_to_ptr.hbm [resolvable:$true] %s206
          %s208 = sshll.u32 [#allocation6], 4
          %s209 = int_to_ptr.vmem [resolvable:$true] %s208
          %214 = dma.hbm_to_vmem [thread:$0]  %s207, 512, %s209, [#allocation7], 128, 128, 8
        $region20: #{tpu_custom_call.1} parent=11 // pred_fallthru
          _
        // Predicated region
        $region21: #{tpu_custom_call.1} parent=11 // pred_check
          %p215 = pneg %p106
        $region22: #{tpu_custom_call.1} parent=11 // pred_check_branch
          %217 = sbr.rel (%p215) target = $region24
        $region23: #{tpu_custom_call.1} parent=11 // pred_region
          _
        $region24: #{tpu_custom_call.1} parent=11 // pred_fallthru
          _
        // Predicated region
        $region25: #{tpu_custom_call.1} parent=11 // pred_check
          %p218 = pneg %p127
        $region26: #{tpu_custom_call.1} parent=11 // pred_check_branch
          %220 = sbr.rel (%p218) target = $region28
        $region27: #{tpu_custom_call.1} parent=11 // pred_region
          %222 = vsyncadd [#allocation7], 0
          %s223 = sshll.u32 %s4, 4
          %s224 = int_to_ptr.hbm [resolvable:$true] %s223
          %s225 = sshll.u32 [#allocation8], 4
          %s226 = int_to_ptr.vmem [resolvable:$true] %s225
          %231 = dma.hbm_to_vmem [thread:$0]  %s224, 768, %s226, [#allocation7], 192, 192, 12
        $region28: #{tpu_custom_call.1} parent=11 // pred_fallthru
          _
        // Predicated region
        $region29: #{tpu_custom_call.1} parent=11 // pred_check
          %p232 = pneg %p148
        $region30: #{tpu_custom_call.1} parent=11 // pred_check_branch
          %234 = sbr.rel (%p232) target = $region32
        $region31: #{tpu_custom_call.1} parent=11 // pred_region
          _
        $region32: #{tpu_custom_call.1} parent=11 // pred_fallthru
          _
      $region12: #{tpu_custom_call.1} parent=5 // pred_fallthru
        _
      %p235 = scmp.lt.s32.totalorder %s17, 2
      // Predicated region
      $region33: #{tpu_custom_call.1} parent=5 // pred_check
        %p236 = pneg %p235
      $region34: #{tpu_custom_call.1} parent=5 // pred_check_branch
        %238 = sbr.rel (%p236) target = $region36
      $region35: #{tpu_custom_call.1} parent=5 // pred_region
        // Predicated region
        $region37: #{tpu_custom_call.1} parent=35 // pred_check
          %p239 = pneg %p37
        $region38: #{tpu_custom_call.1} parent=35 // pred_check_branch
          %241 = sbr.rel (%p239) target = $region40
        $region39: #{tpu_custom_call.1} parent=35 // pred_region
          %p242 = scmp.lt.s32.totalorder %s17, 1
          %s243 = scalar_select %p242, %s17, 1
          %s244 = smul.addr %s243, 6
          %s245 = smul.addr %s244, 4
          %s246 = scalar_lea.vmem %s0, %s245
        $region40: #{tpu_custom_call.1} parent=35 // pred_fallthru
          _
      $region36: #{tpu_custom_call.1} parent=5 // pred_fallthru
        _
      %p247 = scmp.le.s32.totalorder 1, %s17
      %p248 = scmp.lt.s32.totalorder %s17, 3
      %p249 = pnand %p247, %p248
      %p250 = pneg %p249
      // Predicated region
      $region41: #{tpu_custom_call.1} parent=5 // pred_check
        _
      $region42: #{tpu_custom_call.1} parent=5 // pred_check_branch
        %252 = sbr.rel (%p249) target = $region44
      $region43: #{tpu_custom_call.1} parent=5 // pred_region
        %s253 = ssub.s32 %s17, 1
        // Predicated region
        $region45: #{tpu_custom_call.1} parent=43 // pred_check
          %p254 = pneg %p64
        $region46: #{tpu_custom_call.1} parent=43 // pred_check_branch
          %256 = sbr.rel (%p254) target = $region48
        $region47: #{tpu_custom_call.1} parent=43 // pred_region
          %258 = dma.done [#allocation4], 384
        $region48: #{tpu_custom_call.1} parent=43 // pred_fallthru
          _
        // Predicated region
        $region49: #{tpu_custom_call.1} parent=43 // pred_check
          %p259 = pneg %p85
        $region50: #{tpu_custom_call.1} parent=43 // pred_check_branch
          %261 = sbr.rel (%p259) target = $region52
        $region51: #{tpu_custom_call.1} parent=43 // pred_region
          %263 = dma.done [#allocation7], 512
        $region52: #{tpu_custom_call.1} parent=43 // pred_fallthru
          _
        // Predicated region
        $region53: #{tpu_custom_call.1} parent=43 // pred_check
          %p264 = pneg %p127
        $region54: #{tpu_custom_call.1} parent=43 // pred_check_branch
          %266 = sbr.rel (%p264) target = $region56
        $region55: #{tpu_custom_call.1} parent=43 // pred_region
          %268 = dma.done [#allocation7], 768
        $region56: #{tpu_custom_call.1} parent=43 // pred_fallthru
          _
        %p269 = scmp.lt.s32.totalorder %s22, 1
        %s270 = scalar_select %p269, %s22, 1
        %s271 = smul.addr %s270, 6
        %s272 = smul.addr %s271, 4
        %s273 = scalar_lea.vmem %s0, %s272
        %p274 = pneg %p43
        %p275 = pneg %p40
        %p276 = pneg %p64
        %p277 = pneg %p61
        %p278 = pneg %p85
        %p279 = pneg %p82
        %p280 = pneg %p106
        %p281 = pneg %p103
        %p282 = pneg %p127
        %p283 = pneg %p124
        %p284 = pneg %p148
        %p285 = pneg %p145
        %p286 = pneg %p174
        %p287 = pneg %p171
        %s288 = sand.u32 %s161, 1
        %s289 = scalar_lea.sflag [#allocation5], %s288
        %s290 = sand.u32 %s161, 1
        %s291 = smul.addr %s290, 96
        %s292 = scalar_lea.vmem [#allocation9], %s291
        %p293 = scmp.lt.s32.totalorder %s22, 1
        %s294 = scalar_select %p293, %s22, 1
        %s295 = smul.addr %s294, 6
        %s296 = smul.addr %s295, 4
        %s297 = scalar_lea.vmem %s0, %s296
        %v299 = vld [vmem:[#allocation3] ss:$8 sm:$0x7]
        %s300 = scalar_lea.vmem [#allocation3], 1
        %v301 = vld [vmem:[%s300] ss:$8 sm:$0x7]
        %s302 = scalar_lea.vmem [#allocation3], 2
        %v303 = vld [vmem:[%s302] ss:$8 sm:$0x7]
        %v304 = vld [vmem:[%s297] sm:$0xff]
        %v305 = vld [vmem:[%s297 + $0x8] sm:$0xf]
        %v306 = vld [vmem:[%s297 + $0xc] sm:$0xff]
        %v307 = vld [vmem:[%s297 + $0x14] sm:$0xf]
        %v308 = vunpack.c.l.bf16 %v304
        %v309 = vunpack.c.h.bf16 %v304
        %v310 = vunpack.c.l.bf16 %v305
        %v311 = vunpack.c.l.bf16 %v306
        %v312 = vunpack.c.h.bf16 %v306
        %v313 = vunpack.c.l.bf16 %v307
        %v314 = vld [vmem:[#allocation6] sm:$0xff]
        %v315 = vld [vmem:[#allocation6 + $0x8] sm:$0xff]
        %v316 = vld [vmem:[#allocation6 + $0x10] sm:$0xff]
        %v317 = vld [vmem:[#allocation6 + $0x18] sm:$0xff]
        %v318 = vld [vmem:[%s3] sm:$0xff]
        %v319 = vld [vmem:[%s3 + $0x8] sm:$0xff]
        %v320 = vld [vmem:[%s3 + $0x10] sm:$0xff]
        %v321 = vld [vmem:[%s3 + $0x18] sm:$0xff]
        %v323 = vperm.slane %v299, 0
        %v324 = vperm.slane %v299, 1
        %v325 = vperm.slane %v299, 2
        %v329 = vmul.f32 %v308, %v323
        %v330 = vmul.f32 %v309, %v324
        %v331 = vmul.f32 %v310, %v325
        %v332 = vmul.f32 %v311, %v323
        %v333 = vmul.f32 %v312, %v324
        %v334 = vmul.f32 %v313, %v325
        %335 = vrot.lane.b32.xlu0 %v329, 17
        %v336 = vpop.permute.xlu0 %335
        %337 = vrot.lane.b32.xlu0 %v332, 17
        %v338 = vpop.permute.xlu0 %337
        %339 = vrot.lane.b32.xlu0 %v330, 17
        %v340 = vpop.permute.xlu0 %339
        %341 = vrot.lane.b32.xlu0 %v333, 17
        %v342 = vpop.permute.xlu0 %341
        %343 = vrot.lane.b32.xlu0 %v331, 17
        %v344 = vpop.permute.xlu0 %343
        %345 = vrot.lane.b32.xlu0 %v334, 17
        %v346 = vpop.permute.xlu0 %345
        %v347 = vlaneseq
        %v348 = vand.u32 %v347, 127
        %vm349 = vcmp.lt.s32.totalorder %v348, 17
        %v350 = vsel %vm349, %v340, %v344
        %v351 = vsel %vm349, %v342, %v346
        %v352 = vsel %vm349, %v336, %v340
        %v353 = vsel %vm349, %v338, %v342
        %v354 = vsel %vm349, %v344, %v336
        %v355 = vsel %vm349, %v346, %v338
        %v357 = vperm.slane %v301, 0
        %v358 = vperm.slane %v301, 1
        %v359 = vperm.slane %v301, 2
        %v363 = vmul.f32 %v354, %v357
        %v364 = vmul.f32 %v352, %v358
        %v365 = vmul.f32 %v350, %v359
        %v366 = vmul.f32 %v355, %v357
        %v367 = vmul.f32 %v353, %v358
        %v368 = vmul.f32 %v351, %v359
        %v369 = vpack.c.bf16 %v364, %v363
        %v370 = vpack.c.bf16 %v365, %v365
        %v371 = vpack.c.bf16 %v367, %v366
        %v372 = vpack.c.bf16 %v368, %v368
        %373 = vst [vmem:[#allocation2] sm:$0xff] %v369
        %374 = vst [vmem:[#allocation2 + $0x8] sm:$0xf] %v370
        %375 = vst [vmem:[#allocation2 + $0xc] sm:$0xff] %v371
        %376 = vst [vmem:[#allocation2 + $0x14] sm:$0xf] %v372
        %377 = vrot.lane.b32.xlu0 %v329, 16
        %v378 = vpop.permute.xlu0 %377
        %379 = vrot.lane.b32.xlu0 %v332, 16
        %v380 = vpop.permute.xlu0 %379
        %381 = vrot.lane.b32.xlu0 %v330, 16
        %v382 = vpop.permute.xlu0 %381
        %383 = vrot.lane.b32.xlu0 %v333, 16
        %v384 = vpop.permute.xlu0 %383
        %385 = vrot.lane.b32.xlu0 %v331, 16
        %v386 = vpop.permute.xlu0 %385
        %387 = vrot.lane.b32.xlu0 %v334, 16
        %v388 = vpop.permute.xlu0 %387
        %vm389 = vcmp.lt.s32.totalorder %v348, 16
        %v390 = vsel %vm389, %v382, %v386
        %v391 = vsel %vm389, %v384, %v388
        %v392 = vsel %vm389, %v378, %v382
        %v393 = vsel %vm389, %v380, %v384
        %v394 = vsel %vm389, %v386, %v378
        %v395 = vsel %vm389, %v388, %v380
        %v396 = vpack.c.bf16 %v392, %v394
        %v397 = vpack.c.bf16 %v390, %v390
        %v398 = vpack.c.bf16 %v393, %v395
        %v399 = vpack.c.bf16 %v391, %v391
        %400 = vst [vmem:[#allocation2 + $0x18] sm:$0xff] %v396
        %401 = vst [vmem:[#allocation2 + $0x20] sm:$0xf] %v397
        %402 = vst [vmem:[#allocation2 + $0x24] sm:$0xff] %v398
        %403 = vst [vmem:[#allocation2 + $0x2c] sm:$0xf] %v399
        %404 = vrot.lane.b32.xlu0 %v329, 15
        %v405 = vpop.permute.xlu0 %404
        %406 = vrot.lane.b32.xlu0 %v332, 15
        %v407 = vpop.permute.xlu0 %406
        %408 = vrot.lane.b32.xlu0 %v330, 15
        %v409 = vpop.permute.xlu0 %408
        %410 = vrot.lane.b32.xlu0 %v333, 15
        %v411 = vpop.permute.xlu0 %410
        %412 = vrot.lane.b32.xlu0 %v331, 15
        %v413 = vpop.permute.xlu0 %412
        %414 = vrot.lane.b32.xlu0 %v334, 15
        %v415 = vpop.permute.xlu0 %414
        %vm416 = vcmp.lt.s32.totalorder %v348, 15
        %v417 = vsel %vm416, %v409, %v413
        %v418 = vsel %vm416, %v411, %v415
        %v419 = vsel %vm416, %v405, %v409
        %v420 = vsel %vm416, %v407, %v411
        %v421 = vsel %vm416, %v413, %v405
        %v422 = vsel %vm416, %v415, %v407
        %v424 = vperm.slane %v303, 0
        %v425 = vperm.slane %v303, 1
        %v426 = vperm.slane %v303, 2
        %v430 = vmul.f32 %v421, %v424
        %v431 = vmul.f32 %v419, %v425
        %v432 = vmul.f32 %v417, %v426
        %v433 = vmul.f32 %v422, %v424
        %v434 = vmul.f32 %v420, %v425
        %v435 = vmul.f32 %v418, %v426
        %v436 = vpack.c.bf16 %v431, %v430
        %v437 = vpack.c.bf16 %v432, %v432
        %v438 = vpack.c.bf16 %v434, %v433
        %v439 = vpack.c.bf16 %v435, %v435
        %440 = vst [vmem:[#allocation2 + $0x30] sm:$0xff] %v436
        %441 = vst [vmem:[#allocation2 + $0x38] sm:$0xf] %v437
        %442 = vst [vmem:[#allocation2 + $0x3c] sm:$0xff] %v438
        %443 = vst [vmem:[#allocation2 + $0x44] sm:$0xf] %v439
        %444 = vrot.lane.b32.xlu0 %v329, 1
        %v445 = vpop.permute.xlu0 %444
        %446 = vrot.lane.b32.xlu0 %v332, 1
        %v447 = vpop.permute.xlu0 %446
        %448 = vrot.lane.b32.xlu0 %v330, 1
        %v449 = vpop.permute.xlu0 %448
        %450 = vrot.lane.b32.xlu0 %v333, 1
        %v451 = vpop.permute.xlu0 %450
        %452 = vrot.lane.b32.xlu0 %v331, 1
        %v453 = vpop.permute.xlu0 %452
        %454 = vrot.lane.b32.xlu0 %v334, 1
        %v455 = vpop.permute.xlu0 %454
        %vm456 = vcmp.lt.s32.totalorder %v348, 1
        %v457 = vsel %vm456, %v449, %v453
        %v458 = vsel %vm456, %v451, %v455
        %v459 = vsel %vm456, %v445, %v449
        %v460 = vsel %vm456, %v447, %v451
        %v461 = vsel %vm456, %v453, %v445
        %v462 = vsel %vm456, %v455, %v447
        %v463 = vmul.f32 %v461, %v357
        %v464 = vmul.f32 %v459, %v358
        %v465 = vmul.f32 %v457, %v359
        %v466 = vmul.f32 %v462, %v357
        %v467 = vmul.f32 %v460, %v358
        %v468 = vmul.f32 %v458, %v359
        %v469 = vpack.c.bf16 %v464, %v463
        %v470 = vpack.c.bf16 %v465, %v465
        %v471 = vpack.c.bf16 %v467, %v466
        %v472 = vpack.c.bf16 %v468, %v468
        %473 = vst [vmem:[#allocation2 + $0x48] sm:$0xff] %v469
        %474 = vst [vmem:[#allocation2 + $0x50] sm:$0xf] %v470
        %475 = vst [vmem:[#allocation2 + $0x54] sm:$0xff] %v471
        %476 = vst [vmem:[#allocation2 + $0x5c] sm:$0xf] %v472
        %v477 = vpack.c.bf16 %v330, %v329
        %v478 = vpack.c.bf16 %v331, %v331
        %v479 = vpack.c.bf16 %v333, %v332
        %v480 = vpack.c.bf16 %v334, %v334
        %481 = vst [vmem:[#allocation2 + $0x60] sm:$0xff] %v477
        %482 = vst [vmem:[#allocation2 + $0x68] sm:$0xf] %v478
        %483 = vst [vmem:[#allocation2 + $0x6c] sm:$0xff] %v479
        %484 = vst [vmem:[#allocation2 + $0x74] sm:$0xf] %v480
        %485 = vrot.lane.b32.xlu0 %v329, 127
        %v486 = vpop.permute.xlu0 %485
        %487 = vrot.lane.b32.xlu0 %v332, 127
        %v488 = vpop.permute.xlu0 %487
        %489 = vrot.lane.b32.xlu0 %v330, 127
        %v490 = vpop.permute.xlu0 %489
        %491 = vrot.lane.b32.xlu0 %v333, 127
        %v492 = vpop.permute.xlu0 %491
        %493 = vrot.lane.b32.xlu0 %v331, 127
        %v494 = vpop.permute.xlu0 %493
        %495 = vrot.lane.b32.xlu0 %v334, 127
        %v496 = vpop.permute.xlu0 %495
        %vm497 = vcmp.lt.s32.totalorder %v348, 127
        %v498 = vsel %vm497, %v490, %v494
        %v499 = vsel %vm497, %v492, %v496
        %v500 = vsel %vm497, %v486, %v490
        %v501 = vsel %vm497, %v488, %v492
        %v502 = vsel %vm497, %v494, %v486
        %v503 = vsel %vm497, %v496, %v488
        %v504 = vmul.f32 %v500, %v424
        %v505 = vmul.f32 %v498, %v425
        %v506 = vmul.f32 %v502, %v426
        %v507 = vmul.f32 %v501, %v424
        %v508 = vmul.f32 %v499, %v425
        %v509 = vmul.f32 %v503, %v426
        %v510 = vpack.c.bf16 %v505, %v504
        %v511 = vpack.c.bf16 %v506, %v506
        %v512 = vpack.c.bf16 %v508, %v507
        %v513 = vpack.c.bf16 %v509, %v509
        %514 = vst [vmem:[#allocation2 + $0x78] sm:$0xff] %v510
        %515 = vst [vmem:[#allocation2 + $0x80] sm:$0xf] %v511
        %516 = vst [vmem:[#allocation2 + $0x84] sm:$0xff] %v512
        %517 = vst [vmem:[#allocation2 + $0x8c] sm:$0xf] %v513
        %518 = vrot.lane.b32.xlu0 %v329, 113
        %v519 = vpop.permute.xlu0 %518
        %520 = vrot.lane.b32.xlu0 %v332, 113
        %v521 = vpop.permute.xlu0 %520
        %522 = vrot.lane.b32.xlu0 %v330, 113
        %v523 = vpop.permute.xlu0 %522
        %524 = vrot.lane.b32.xlu0 %v333, 113
        %v525 = vpop.permute.xlu0 %524
        %526 = vrot.lane.b32.xlu0 %v331, 113
        %v527 = vpop.permute.xlu0 %526
        %528 = vrot.lane.b32.xlu0 %v334, 113
        %v529 = vpop.permute.xlu0 %528
        %vm530 = vcmp.lt.s32.totalorder %v348, 113
        %v531 = vsel %vm530, %v523, %v527
        %v532 = vsel %vm530, %v525, %v529
        %v533 = vsel %vm530, %v519, %v523
        %v534 = vsel %vm530, %v521, %v525
        %v535 = vsel %vm530, %v527, %v519
        %v536 = vsel %vm530, %v529, %v521
        %v537 = vmul.f32 %v533, %v357
        %v538 = vmul.f32 %v531, %v358
        %v539 = vmul.f32 %v535, %v359
        %v540 = vmul.f32 %v534, %v357
        %v541 = vmul.f32 %v532, %v358
        %v542 = vmul.f32 %v536, %v359
        %v543 = vpack.c.bf16 %v538, %v537
        %v544 = vpack.c.bf16 %v539, %v539
        %v545 = vpack.c.bf16 %v541, %v540
        %v546 = vpack.c.bf16 %v542, %v542
        %547 = vst [vmem:[#allocation2 + $0x90] sm:$0xff] %v543
        %548 = vst [vmem:[#allocation2 + $0x98] sm:$0xf] %v544
        %549 = vst [vmem:[#allocation2 + $0x9c] sm:$0xff] %v545
        %550 = vst [vmem:[#allocation2 + $0xa4] sm:$0xf] %v546
        %551 = vrot.lane.b32.xlu0 %v329, 112
        %v552 = vpop.permute.xlu0 %551
        %553 = vrot.lane.b32.xlu0 %v332, 112
        %v554 = vpop.permute.xlu0 %553
        %555 = vrot.lane.b32.xlu0 %v330, 112
        %v556 = vpop.permute.xlu0 %555
        %557 = vrot.lane.b32.xlu0 %v333, 112
        %v558 = vpop.permute.xlu0 %557
        %559 = vrot.lane.b32.xlu0 %v331, 112
        %v560 = vpop.permute.xlu0 %559
        %561 = vrot.lane.b32.xlu0 %v334, 112
        %v562 = vpop.permute.xlu0 %561
        %vm563 = vcmp.lt.s32.totalorder %v348, 112
        %v564 = vsel %vm563, %v556, %v560
        %v565 = vsel %vm563, %v558, %v562
        %v566 = vsel %vm563, %v552, %v556
        %v567 = vsel %vm563, %v554, %v558
        %v568 = vsel %vm563, %v560, %v552
        %v569 = vsel %vm563, %v562, %v554
        %v570 = vpack.c.bf16 %v564, %v566
        %v571 = vpack.c.bf16 %v568, %v568
        %v572 = vpack.c.bf16 %v565, %v567
        %v573 = vpack.c.bf16 %v569, %v569
        %574 = vst [vmem:[#allocation2 + $0xa8] sm:$0xff] %v570
        %575 = vst [vmem:[#allocation2 + $0xb0] sm:$0xf] %v571
        %576 = vst [vmem:[#allocation2 + $0xb4] sm:$0xff] %v572
        %577 = vst [vmem:[#allocation2 + $0xbc] sm:$0xf] %v573
        %578 = vrot.lane.b32.xlu0 %v329, 111
        %v579 = vpop.permute.xlu0 %578
        %580 = vrot.lane.b32.xlu0 %v332, 111
        %v581 = vpop.permute.xlu0 %580
        %582 = vrot.lane.b32.xlu0 %v330, 111
        %v583 = vpop.permute.xlu0 %582
        %584 = vrot.lane.b32.xlu0 %v333, 111
        %v585 = vpop.permute.xlu0 %584
        %586 = vrot.lane.b32.xlu0 %v331, 111
        %v587 = vpop.permute.xlu0 %586
        %588 = vrot.lane.b32.xlu0 %v334, 111
        %v589 = vpop.permute.xlu0 %588
        %vm590 = vcmp.lt.s32.totalorder %v348, 111
        %v591 = vsel %vm590, %v583, %v587
        %v592 = vsel %vm590, %v585, %v589
        %v593 = vsel %vm590, %v579, %v583
        %v594 = vsel %vm590, %v581, %v585
        %v595 = vsel %vm590, %v587, %v579
        %v596 = vsel %vm590, %v589, %v581
        %v597 = vmul.f32 %v593, %v424
        %v598 = vmul.f32 %v591, %v425
        %v599 = vmul.f32 %v595, %v426
        %v600 = vmul.f32 %v594, %v424
        %v601 = vmul.f32 %v592, %v425
        %v602 = vmul.f32 %v596, %v426
        %v603 = vpack.c.bf16 %v598, %v597
        %v604 = vpack.c.bf16 %v599, %v599
        %v605 = vpack.c.bf16 %v601, %v600
        %v606 = vpack.c.bf16 %v602, %v602
        %607 = vst [vmem:[#allocation2 + $0xc0] sm:$0xff] %v603
        %608 = vst [vmem:[#allocation2 + $0xc8] sm:$0xf] %v604
        %609 = vst [vmem:[#allocation2 + $0xcc] sm:$0xff] %v605
        %610 = vst [vmem:[#allocation2 + $0xd4] sm:$0xf] %v606
        %v611 = vld [vmem:[#allocation2] sm:$0xff]
        %v612 = vld [vmem:[#allocation2 + $0x8] sm:$0xf]
        %v613 = vld [vmem:[#allocation2 + $0xc] sm:$0xff]
        %v614 = vld [vmem:[#allocation2 + $0x14] sm:$0xf]
        %v615 = vld [vmem:[#allocation2 + $0x18] sm:$0xff]
        %v616 = vld [vmem:[#allocation2 + $0x20] sm:$0xf]
        %v617 = vld [vmem:[#allocation2 + $0x24] sm:$0xff]
        %v618 = vld [vmem:[#allocation2 + $0x2c] sm:$0xf]
        %v619 = vld [vmem:[#allocation2 + $0x30] sm:$0xff]
        %v620 = vld [vmem:[#allocation2 + $0x38] sm:$0xf]
        %v621 = vld [vmem:[#allocation2 + $0x3c] sm:$0xff]
        %v622 = vld [vmem:[#allocation2 + $0x44] sm:$0xf]
        %v623 = vld [vmem:[#allocation2 + $0x48] sm:$0xff]
        %v624 = vld [vmem:[#allocation2 + $0x50] sm:$0xf]
        %v625 = vld [vmem:[#allocation2 + $0x54] sm:$0xff]
        %v626 = vld [vmem:[#allocation2 + $0x5c] sm:$0xf]
        %v627 = vld [vmem:[#allocation2 + $0x60] sm:$0xff]
        %v628 = vld [vmem:[#allocation2 + $0x68] sm:$0xf]
        %v629 = vld [vmem:[#allocation2 + $0x6c] sm:$0xff]
        %v630 = vld [vmem:[#allocation2 + $0x74] sm:$0xf]
        %v631 = vld [vmem:[#allocation2 + $0x78] sm:$0xff]
        %v632 = vld [vmem:[#allocation2 + $0x80] sm:$0xf]
        %v633 = vld [vmem:[#allocation2 + $0x84] sm:$0xff]
        %v634 = vld [vmem:[#allocation2 + $0x8c] sm:$0xf]
        %v635 = vld [vmem:[#allocation2 + $0x90] sm:$0xff]
        %v636 = vld [vmem:[#allocation2 + $0x98] sm:$0xf]
        %v637 = vld [vmem:[#allocation2 + $0x9c] sm:$0xff]
        %v638 = vld [vmem:[#allocation2 + $0xa4] sm:$0xf]
        %v639 = vld [vmem:[#allocation2 + $0xa8] sm:$0xff]
        %v640 = vld [vmem:[#allocation2 + $0xb0] sm:$0xf]
        %v641 = vld [vmem:[#allocation2 + $0xb4] sm:$0xff]
        %v642 = vld [vmem:[#allocation2 + $0xbc] sm:$0xf]
        %v643 = vld [vmem:[#allocation2 + $0xc0] sm:$0xff]
        %v644 = vld [vmem:[#allocation2 + $0xc8] sm:$0xf]
        %v645 = vld [vmem:[#allocation2 + $0xcc] sm:$0xff]
        %v646 = vld [vmem:[#allocation2 + $0xd4] sm:$0xf]
        %648 = vset.pattern.permute.xlu0 0
        %649 = vperm.xlu0 %648, %v318
        %v650 = vpop.permute.xlu0 %649
        %653 = vset.pattern.permute.xlu0 0
        %654 = vperm.xlu0 %653, %v319
        %v655 = vpop.permute.xlu0 %654
        %658 = vset.pattern.permute.xlu0 0
        %659 = vperm.xlu0 %658, %v320
        %v660 = vpop.permute.xlu0 %659
        %663 = vset.pattern.permute.xlu0 0
        %664 = vperm.xlu0 %663, %v321
        %v665 = vpop.permute.xlu0 %664
        %v671 = vunpack.c.l.b16 %v314
        %v672 = vunpack.c.h.b16 %v314
        %v673 = vunpack.c.l.b16 %v315
        %v674 = vunpack.c.h.b16 %v315
        %v675 = vunpack.c.l.b16 %v316
        %v676 = vunpack.c.h.b16 %v316
        %v677 = vunpack.c.l.b16 %v317
        %v678 = vunpack.c.h.b16 %v317
        %v679 = vpack.c.b16 %v673, %v671
        %v680 = vpack.c.b16 %v674, %v672
        %v681 = vpack.c.b16 %v677, %v675
        %v682 = vpack.c.b16 %v678, %v676
        %v721 = vunpack.c.l.b16 %v611
        %v722 = vunpack.c.h.b16 %v611
        %v723 = vunpack.c.l.b16 %v612
        %v724 = vunpack.c.l.b16 %v613
        %v725 = vunpack.c.h.b16 %v613
        %v726 = vunpack.c.l.b16 %v614
        %v727 = vunpack.c.l.b16 %v615
        %v728 = vunpack.c.h.b16 %v615
        %v729 = vunpack.c.l.b16 %v616
        %v730 = vunpack.c.l.b16 %v617
        %v731 = vunpack.c.h.b16 %v617
        %v732 = vunpack.c.l.b16 %v618
        %v733 = vunpack.c.l.b16 %v619
        %v734 = vunpack.c.h.b16 %v619
        %v735 = vunpack.c.l.b16 %v620
        %v736 = vunpack.c.l.b16 %v621
        %v737 = vunpack.c.h.b16 %v621
        %v738 = vunpack.c.l.b16 %v622
        %v739 = vunpack.c.l.b16 %v623
        %v740 = vunpack.c.h.b16 %v623
        %v741 = vunpack.c.l.b16 %v624
        %v742 = vunpack.c.l.b16 %v625
        %v743 = vunpack.c.h.b16 %v625
        %v744 = vunpack.c.l.b16 %v626
        %v745 = vunpack.c.l.b16 %v627
        %v746 = vunpack.c.h.b16 %v627
        %v747 = vunpack.c.l.b16 %v628
        %v748 = vunpack.c.l.b16 %v629
        %v749 = vunpack.c.h.b16 %v629
        %v750 = vunpack.c.l.b16 %v630
        %v751 = vunpack.c.l.b16 %v631
        %v752 = vunpack.c.h.b16 %v631
        %v753 = vunpack.c.l.b16 %v632
        %v754 = vunpack.c.l.b16 %v633
        %v755 = vunpack.c.h.b16 %v633
        %v756 = vunpack.c.l.b16 %v634
        %v757 = vunpack.c.l.b16 %v635
        %v758 = vunpack.c.h.b16 %v635
        %v759 = vunpack.c.l.b16 %v636
        %v760 = vunpack.c.l.b16 %v637
        %v761 = vunpack.c.h.b16 %v637
        %v762 = vunpack.c.l.b16 %v638
        %v763 = vunpack.c.l.b16 %v639
        %v764 = vunpack.c.h.b16 %v639
        %v765 = vunpack.c.l.b16 %v640
        %v766 = vunpack.c.l.b16 %v641
        %v767 = vunpack.c.h.b16 %v641
        %v768 = vunpack.c.l.b16 %v642
        %v769 = vunpack.c.l.b16 %v643
        %v770 = vunpack.c.h.b16 %v643
        %v771 = vunpack.c.l.b16 %v644
        %v772 = vunpack.c.l.b16 %v645
        %v773 = vunpack.c.h.b16 %v645
        %v774 = vunpack.c.l.b16 %v646
        %v775 = vpack.c.b16 %v724, %v721
        %v776 = vpack.c.b16 %v725, %v722
        %v777 = vpack.c.b16 %v726, %v723
        %v778 = vpack.c.b16 %v730, %v727
        %v779 = vpack.c.b16 %v731, %v728
        %v780 = vpack.c.b16 %v732, %v729
        %v781 = vpack.c.b16 %v736, %v733
        %v782 = vpack.c.b16 %v737, %v734
        %v783 = vpack.c.b16 %v738, %v735
        %v784 = vpack.c.b16 %v742, %v739
        %v785 = vpack.c.b16 %v743, %v740
        %v786 = vpack.c.b16 %v744, %v741
        %v787 = vpack.c.b16 %v748, %v745
        %v788 = vpack.c.b16 %v749, %v746
        %v789 = vpack.c.b16 %v750, %v747
        %v790 = vpack.c.b16 %v754, %v751
        %v791 = vpack.c.b16 %v755, %v752
        %v792 = vpack.c.b16 %v756, %v753
        %v793 = vpack.c.b16 %v760, %v757
        %v794 = vpack.c.b16 %v761, %v758
        %v795 = vpack.c.b16 %v762, %v759
        %v796 = vpack.c.b16 %v766, %v763
        %v797 = vpack.c.b16 %v767, %v764
        %v798 = vpack.c.b16 %v768, %v765
        %v799 = vpack.c.b16 %v772, %v769
        %v800 = vpack.c.b16 %v773, %v770
        %v801 = vpack.c.b16 %v774, %v771
        %vm829 = vcmask 130048
        %v831 = vsel %vm829, %v680, 0
        %v834 = vsel %vm829, %v682, 0
        %836 = vmatpush.bf16.msra.mxu0 %v796
        %837 = vmatpush.bf16.msra.mxu0 %v793
        %838 = vmatpush.bf16.msra.mxu0 %v790
        %839 = vmatpush.bf16.msra.mxu0 %v787
        %840 = vmatpush.bf16.msra.mxu0 %v784
        %841 = vmatpush.bf16.msra.mxu0 %v781
        %842 = vmatpush.bf16.msra.mxu0 %v778
        %843 = vmatpush.bf16.msra.mxu0 %v775
        %844 = vmatmul.bf16.gmra.mxu0 %v679
        %v845 = vpop.f32.mrf.mxu0
        %v846 = vadd.f32 %v650, %v845
        %v847 = vpop.f32.mrf.mxu0
        %v848 = vadd.f32 %v655, %v847
        %849 = vmatmul.bf16.gmra.mxu0 %v681
        %v850 = vpop.f32.mrf.mxu0
        %v851 = vadd.f32 %v660, %v850
        %v852 = vpop.f32.mrf.mxu0
        %v853 = vadd.f32 %v665, %v852
        %854 = vdwg.mxu0
        %855 = vmatpush.bf16.msra.mxu0 0
        %856 = vmatpush.bf16.msra.mxu0 0
        %857 = vmatpush.bf16.msra.mxu0 0
        %858 = vmatpush.bf16.msra.mxu0 0
        %859 = vmatpush.bf16.msra.mxu0 0
        %860 = vmatpush.bf16.msra.mxu0 0
        %861 = vmatpush.bf16.msra.mxu0 0
        %862 = vmatpush.bf16.msra.mxu0 %v799
        %863 = vmatmul.bf16.gmra.mxu0 %v831
        %v864 = vpop.f32.mrf.mxu0
        %v865 = vadd.f32 %v846, %v864
        %v866 = vpop.f32.mrf.mxu0
        %v867 = vadd.f32 %v848, %v866
        %868 = vmatmul.bf16.gmra.mxu0 %v834
        %v869 = vpop.f32.mrf.mxu0
        %v870 = vadd.f32 %v851, %v869
        %v871 = vpop.f32.mrf.mxu0
        %v872 = vadd.f32 %v853, %v871
        %873 = vdwg.mxu0
        %874 = vmatpush.bf16.msra.mxu0 %v797
        %875 = vmatpush.bf16.msra.mxu0 %v794
        %876 = vmatpush.bf16.msra.mxu0 %v791
        %877 = vmatpush.bf16.msra.mxu0 %v788
        %878 = vmatpush.bf16.msra.mxu0 %v785
        %879 = vmatpush.bf16.msra.mxu0 %v782
        %880 = vmatpush.bf16.msra.mxu0 %v779
        %881 = vmatpush.bf16.msra.mxu0 %v776
        %882 = vmatmul.bf16.gmra.mxu0 %v679
        %v883 = vpop.f32.mrf.mxu0
        %v884 = vadd.f32 %v650, %v883
        %v885 = vpop.f32.mrf.mxu0
        %v886 = vadd.f32 %v655, %v885
        %887 = vmatmul.bf16.gmra.mxu0 %v681
        %v888 = vpop.f32.mrf.mxu0
        %v889 = vadd.f32 %v660, %v888
        %v890 = vpop.f32.mrf.mxu0
        %v891 = vadd.f32 %v665, %v890
        %892 = vdwg.mxu0
        %893 = vmatpush.bf16.msra.mxu0 0
        %894 = vmatpush.bf16.msra.mxu0 0
        %895 = vmatpush.bf16.msra.mxu0 0
        %896 = vmatpush.bf16.msra.mxu0 0
        %897 = vmatpush.bf16.msra.mxu0 0
        %898 = vmatpush.bf16.msra.mxu0 0
        %899 = vmatpush.bf16.msra.mxu0 0
        %900 = vmatpush.bf16.msra.mxu0 %v800
        %901 = vmatmul.bf16.gmra.mxu0 %v831
        %v902 = vpop.f32.mrf.mxu0
        %v903 = vadd.f32 %v884, %v902
        %v904 = vpop.f32.mrf.mxu0
        %v905 = vadd.f32 %v886, %v904
        %906 = vmatmul.bf16.gmra.mxu0 %v834
        %v907 = vpop.f32.mrf.mxu0
        %v908 = vadd.f32 %v889, %v907
        %v909 = vpop.f32.mrf.mxu0
        %v910 = vadd.f32 %v891, %v909
        %911 = vdwg.mxu0
        %912 = vmatpush.bf16.msra.mxu0 %v798
        %913 = vmatpush.bf16.msra.mxu0 %v795
        %914 = vmatpush.bf16.msra.mxu0 %v792
        %915 = vmatpush.bf16.msra.mxu0 %v789
        %916 = vmatpush.bf16.msra.mxu0 %v786
        %917 = vmatpush.bf16.msra.mxu0 %v783
        %918 = vmatpush.bf16.msra.mxu0 %v780
        %919 = vmatpush.bf16.msra.mxu0 %v777
        %920 = vmatmul.bf16.gmra.mxu0 %v679
        %v921 = vpop.f32.mrf.mxu0
        %v922 = vadd.f32 %v650, %v921
        %v923 = vpop.f32.mrf.mxu0
        %v924 = vadd.f32 %v655, %v923
        %925 = vmatmul.bf16.gmra.mxu0 %v681
        %v926 = vpop.f32.mrf.mxu0
        %v927 = vadd.f32 %v660, %v926
        %v928 = vpop.f32.mrf.mxu0
        %v929 = vadd.f32 %v665, %v928
        %930 = vdwg.mxu0
        %931 = vmatpush.bf16.msra.mxu0 0
        %932 = vmatpush.bf16.msra.mxu0 0
        %933 = vmatpush.bf16.msra.mxu0 0
        %934 = vmatpush.bf16.msra.mxu0 0
        %935 = vmatpush.bf16.msra.mxu0 0
        %936 = vmatpush.bf16.msra.mxu0 0
        %937 = vmatpush.bf16.msra.mxu0 0
        %938 = vmatpush.bf16.msra.mxu0 %v801
        %939 = vmatmul.bf16.gmra.mxu0 %v831
        %v940 = vpop.f32.mrf.mxu0
        %v941 = vadd.f32 %v922, %v940
        %v942 = vpop.f32.mrf.mxu0
        %v943 = vadd.f32 %v924, %v942
        %944 = vmatmul.bf16.gmra.mxu0 %v834
        %v945 = vpop.f32.mrf.mxu0
        %v946 = vadd.f32 %v927, %v945
        %v947 = vpop.f32.mrf.mxu0
        %v948 = vadd.f32 %v929, %v947
        %949 = vdwg.mxu0
        %v950 = vmax.f32 %v865, 0.0
        %v951 = vmax.f32 %v903, 0.0
        %v952 = vmax.f32 %v941, 0.0
        %v953 = vmax.f32 %v867, 0.0
        %v954 = vmax.f32 %v905, 0.0
        %v955 = vmax.f32 %v943, 0.0
        %v956 = vmax.f32 %v870, 0.0
        %v957 = vmax.f32 %v908, 0.0
        %v958 = vmax.f32 %v946, 0.0
        %v959 = vmax.f32 %v872, 0.0
        %v960 = vmax.f32 %v910, 0.0
        %v961 = vmax.f32 %v948, 0.0
        %v962 = vld [vmem:[#allocation8] sm:$0xff]
        %v963 = vld [vmem:[#allocation8 + $0x8] sm:$0xf]
        %v964 = vld [vmem:[#allocation8 + $0xc] sm:$0xff]
        %v965 = vld [vmem:[#allocation8 + $0x14] sm:$0xf]
        %v966 = vld [vmem:[#allocation8 + $0x18] sm:$0xff]
        %v967 = vld [vmem:[#allocation8 + $0x20] sm:$0xf]
        %v968 = vld [vmem:[#allocation8 + $0x24] sm:$0xff]
        %v969 = vld [vmem:[#allocation8 + $0x2c] sm:$0xf]
        %v970 = vld [vmem:[%s5] sm:$0xff]
        %v971 = vld [vmem:[%s5 + $0x8] sm:$0xff]
        %v972 = vld [vmem:[%s5 + $0x10] sm:$0xff]
        %v973 = vld [vmem:[%s5 + $0x18] sm:$0xff]
        %v974 = vmul.f32 %v950, %v323
        %v975 = vmul.f32 %v951, %v324
        %v976 = vmul.f32 %v952, %v325
        %v977 = vmul.f32 %v953, %v323
        %v978 = vmul.f32 %v954, %v324
        %v979 = vmul.f32 %v955, %v325
        %v980 = vmul.f32 %v956, %v323
        %v981 = vmul.f32 %v957, %v324
        %v982 = vmul.f32 %v958, %v325
        %v983 = vmul.f32 %v959, %v323
        %v984 = vmul.f32 %v960, %v324
        %v985 = vmul.f32 %v961, %v325
        %986 = vrot.lane.b32.xlu0 %v974, 17
        %v987 = vpop.permute.xlu0 %986
        %988 = vrot.lane.b32.xlu0 %v977, 17
        %v989 = vpop.permute.xlu0 %988
        %990 = vrot.lane.b32.xlu0 %v980, 17
        %v991 = vpop.permute.xlu0 %990
        %992 = vrot.lane.b32.xlu0 %v983, 17
        %v993 = vpop.permute.xlu0 %992
        %994 = vrot.lane.b32.xlu0 %v975, 17
        %v995 = vpop.permute.xlu0 %994
        %996 = vrot.lane.b32.xlu0 %v978, 17
        %v997 = vpop.permute.xlu0 %996
        %998 = vrot.lane.b32.xlu0 %v981, 17
        %v999 = vpop.permute.xlu0 %998
        %1000 = vrot.lane.b32.xlu0 %v984, 17
        %v1001 = vpop.permute.xlu0 %1000
        %1002 = vrot.lane.b32.xlu0 %v976, 17
        %v1003 = vpop.permute.xlu0 %1002
        %1004 = vrot.lane.b32.xlu0 %v979, 17
        %v1005 = vpop.permute.xlu0 %1004
        %1006 = vrot.lane.b32.xlu0 %v982, 17
        %v1007 = vpop.permute.xlu0 %1006
        %1008 = vrot.lane.b32.xlu0 %v985, 17
        %v1009 = vpop.permute.xlu0 %1008
        %v1010 = vsel %vm349, %v995, %v1003
        %v1011 = vsel %vm349, %v997, %v1005
        %v1012 = vsel %vm349, %v999, %v1007
        %v1013 = vsel %vm349, %v1001, %v1009
        %v1014 = vsel %vm349, %v987, %v995
        %v1015 = vsel %vm349, %v989, %v997
        %v1016 = vsel %vm349, %v991, %v999
        %v1017 = vsel %vm349, %v993, %v1001
        %v1018 = vsel %vm349, %v1003, %v987
        %v1019 = vsel %vm349, %v1005, %v989
        %v1020 = vsel %vm349, %v1007, %v991
        %v1021 = vsel %vm349, %v1009, %v993
        %v1022 = vmul.f32 %v1018, %v357
        %v1023 = vmul.f32 %v1014, %v358
        %v1024 = vmul.f32 %v1010, %v359
        %v1025 = vmul.f32 %v1019, %v357
        %v1026 = vmul.f32 %v1015, %v358
        %v1027 = vmul.f32 %v1011, %v359
        %v1028 = vmul.f32 %v1020, %v357
        %v1029 = vmul.f32 %v1016, %v358
        %v1030 = vmul.f32 %v1012, %v359
        %v1031 = vmul.f32 %v1021, %v357
        %v1032 = vmul.f32 %v1017, %v358
        %v1033 = vmul.f32 %v1013, %v359
        %v1034 = vpack.c.bf16 %v1023, %v1022
        %v1035 = vpack.c.bf16 %v1024, %v1024
        %v1036 = vpack.c.bf16 %v1026, %v1025
        %v1037 = vpack.c.bf16 %v1027, %v1027
        %v1038 = vpack.c.bf16 %v1029, %v1028
        %v1039 = vpack.c.bf16 %v1030, %v1030
        %v1040 = vpack.c.bf16 %v1032, %v1031
        %v1041 = vpack.c.bf16 %v1033, %v1033
        %1042 = vst [vmem:[#allocation2] sm:$0xff] %v1034
        %1043 = vst [vmem:[#allocation2 + $0x8] sm:$0xf] %v1035
        %1044 = vst [vmem:[#allocation2 + $0xc] sm:$0xff] %v1036
        %1045 = vst [vmem:[#allocation2 + $0x14] sm:$0xf] %v1037
        %1046 = vst [vmem:[#allocation2 + $0x18] sm:$0xff] %v1038
        %1047 = vst [vmem:[#allocation2 + $0x20] sm:$0xf] %v1039
        %1048 = vst [vmem:[#allocation2 + $0x24] sm:$0xff] %v1040
        %1049 = vst [vmem:[#allocation2 + $0x2c] sm:$0xf] %v1041
        %1050 = vrot.lane.b32.xlu0 %v974, 16
        %v1051 = vpop.permute.xlu0 %1050
        %1052 = vrot.lane.b32.xlu0 %v977, 16
        %v1053 = vpop.permute.xlu0 %1052
        %1054 = vrot.lane.b32.xlu0 %v980, 16
        %v1055 = vpop.permute.xlu0 %1054
        %1056 = vrot.lane.b32.xlu0 %v983, 16
        %v1057 = vpop.permute.xlu0 %1056
        %1058 = vrot.lane.b32.xlu0 %v975, 16
        %v1059 = vpop.permute.xlu0 %1058
        %1060 = vrot.lane.b32.xlu0 %v978, 16
        %v1061 = vpop.permute.xlu0 %1060
        %1062 = vrot.lane.b32.xlu0 %v981, 16
        %v1063 = vpop.permute.xlu0 %1062
        %1064 = vrot.lane.b32.xlu0 %v984, 16
        %v1065 = vpop.permute.xlu0 %1064
        %1066 = vrot.lane.b32.xlu0 %v976, 16
        %v1067 = vpop.permute.xlu0 %1066
        %1068 = vrot.lane.b32.xlu0 %v979, 16
        %v1069 = vpop.permute.xlu0 %1068
        %1070 = vrot.lane.b32.xlu0 %v982, 16
        %v1071 = vpop.permute.xlu0 %1070
        %1072 = vrot.lane.b32.xlu0 %v985, 16
        %v1073 = vpop.permute.xlu0 %1072
        %v1074 = vsel %vm389, %v1059, %v1067
        %v1075 = vsel %vm389, %v1061, %v1069
        %v1076 = vsel %vm389, %v1063, %v1071
        %v1077 = vsel %vm389, %v1065, %v1073
        %v1078 = vsel %vm389, %v1051, %v1059
        %v1079 = vsel %vm389, %v1053, %v1061
        %v1080 = vsel %vm389, %v1055, %v1063
        %v1081 = vsel %vm389, %v1057, %v1065
        %v1082 = vsel %vm389, %v1067, %v1051
        %v1083 = vsel %vm389, %v1069, %v1053
        %v1084 = vsel %vm389, %v1071, %v1055
        %v1085 = vsel %vm389, %v1073, %v1057
        %v1086 = vpack.c.bf16 %v1078, %v1082
        %v1087 = vpack.c.bf16 %v1074, %v1074
        %v1088 = vpack.c.bf16 %v1079, %v1083
        %v1089 = vpack.c.bf16 %v1075, %v1075
        %v1090 = vpack.c.bf16 %v1080, %v1084
        %v1091 = vpack.c.bf16 %v1076, %v1076
        %v1092 = vpack.c.bf16 %v1081, %v1085
        %v1093 = vpack.c.bf16 %v1077, %v1077
        %1094 = vst [vmem:[#allocation2 + $0x30] sm:$0xff] %v1086
        %1095 = vst [vmem:[#allocation2 + $0x38] sm:$0xf] %v1087
        %1096 = vst [vmem:[#allocation2 + $0x3c] sm:$0xff] %v1088
        %1097 = vst [vmem:[#allocation2 + $0x44] sm:$0xf] %v1089
        %1098 = vst [vmem:[#allocation2 + $0x48] sm:$0xff] %v1090
        %1099 = vst [vmem:[#allocation2 + $0x50] sm:$0xf] %v1091
        %1100 = vst [vmem:[#allocation2 + $0x54] sm:$0xff] %v1092
        %1101 = vst [vmem:[#allocation2 + $0x5c] sm:$0xf] %v1093
        %1102 = vrot.lane.b32.xlu0 %v974, 15
        %v1103 = vpop.permute.xlu0 %1102
        %1104 = vrot.lane.b32.xlu0 %v977, 15
        %v1105 = vpop.permute.xlu0 %1104
        %1106 = vrot.lane.b32.xlu0 %v980, 15
        %v1107 = vpop.permute.xlu0 %1106
        %1108 = vrot.lane.b32.xlu0 %v983, 15
        %v1109 = vpop.permute.xlu0 %1108
        %1110 = vrot.lane.b32.xlu0 %v975, 15
        %v1111 = vpop.permute.xlu0 %1110
        %1112 = vrot.lane.b32.xlu0 %v978, 15
        %v1113 = vpop.permute.xlu0 %1112
        %1114 = vrot.lane.b32.xlu0 %v981, 15
        %v1115 = vpop.permute.xlu0 %1114
        %1116 = vrot.lane.b32.xlu0 %v984, 15
        %v1117 = vpop.permute.xlu0 %1116
        %1118 = vrot.lane.b32.xlu0 %v976, 15
        %v1119 = vpop.permute.xlu0 %1118
        %1120 = vrot.lane.b32.xlu0 %v979, 15
        %v1121 = vpop.permute.xlu0 %1120
        %1122 = vrot.lane.b32.xlu0 %v982, 15
        %v1123 = vpop.permute.xlu0 %1122
        %1124 = vrot.lane.b32.xlu0 %v985, 15
        %v1125 = vpop.permute.xlu0 %1124
        %v1126 = vsel %vm416, %v1111, %v1119
        %v1127 = vsel %vm416, %v1113, %v1121
        %v1128 = vsel %vm416, %v1115, %v1123
        %v1129 = vsel %vm416, %v1117, %v1125
        %v1130 = vsel %vm416, %v1103, %v1111
        %v1131 = vsel %vm416, %v1105, %v1113
        %v1132 = vsel %vm416, %v1107, %v1115
        %v1133 = vsel %vm416, %v1109, %v1117
        %v1134 = vsel %vm416, %v1119, %v1103
        %v1135 = vsel %vm416, %v1121, %v1105
        %v1136 = vsel %vm416, %v1123, %v1107
        %v1137 = vsel %vm416, %v1125, %v1109
        %v1138 = vmul.f32 %v1134, %v424
        %v1139 = vmul.f32 %v1130, %v425
        %v1140 = vmul.f32 %v1126, %v426
        %v1141 = vmul.f32 %v1135, %v424
        %v1142 = vmul.f32 %v1131, %v425
        %v1143 = vmul.f32 %v1127, %v426
        %v1144 = vmul.f32 %v1136, %v424
        %v1145 = vmul.f32 %v1132, %v425
        %v1146 = vmul.f32 %v1128, %v426
        %v1147 = vmul.f32 %v1137, %v424
        %v1148 = vmul.f32 %v1133, %v425
        %v1149 = vmul.f32 %v1129, %v426
        %v1150 = vpack.c.bf16 %v1139, %v1138
        %v1151 = vpack.c.bf16 %v1140, %v1140
        %v1152 = vpack.c.bf16 %v1142, %v1141
        %v1153 = vpack.c.bf16 %v1143, %v1143
        %v1154 = vpack.c.bf16 %v1145, %v1144
        %v1155 = vpack.c.bf16 %v1146, %v1146
        %v1156 = vpack.c.bf16 %v1148, %v1147
        %v1157 = vpack.c.bf16 %v1149, %v1149
        %1158 = vst [vmem:[#allocation2 + $0x60] sm:$0xff] %v1150
        %1159 = vst [vmem:[#allocation2 + $0x68] sm:$0xf] %v1151
        %1160 = vst [vmem:[#allocation2 + $0x6c] sm:$0xff] %v1152
        %1161 = vst [vmem:[#allocation2 + $0x74] sm:$0xf] %v1153
        %1162 = vst [vmem:[#allocation2 + $0x78] sm:$0xff] %v1154
        %1163 = vst [vmem:[#allocation2 + $0x80] sm:$0xf] %v1155
        %1164 = vst [vmem:[#allocation2 + $0x84] sm:$0xff] %v1156
        %1165 = vst [vmem:[#allocation2 + $0x8c] sm:$0xf] %v1157
        %1166 = vrot.lane.b32.xlu0 %v974, 1
        %v1167 = vpop.permute.xlu0 %1166
        %1168 = vrot.lane.b32.xlu0 %v977, 1
        %v1169 = vpop.permute.xlu0 %1168
        %1170 = vrot.lane.b32.xlu0 %v980, 1
        %v1171 = vpop.permute.xlu0 %1170
        %1172 = vrot.lane.b32.xlu0 %v983, 1
        %v1173 = vpop.permute.xlu0 %1172
        %1174 = vrot.lane.b32.xlu0 %v975, 1
        %v1175 = vpop.permute.xlu0 %1174
        %1176 = vrot.lane.b32.xlu0 %v978, 1
        %v1177 = vpop.permute.xlu0 %1176
        %1178 = vrot.lane.b32.xlu0 %v981, 1
        %v1179 = vpop.permute.xlu0 %1178
        %1180 = vrot.lane.b32.xlu0 %v984, 1
        %v1181 = vpop.permute.xlu0 %1180
        %1182 = vrot.lane.b32.xlu0 %v976, 1
        %v1183 = vpop.permute.xlu0 %1182
        %1184 = vrot.lane.b32.xlu0 %v979, 1
        %v1185 = vpop.permute.xlu0 %1184
        %1186 = vrot.lane.b32.xlu0 %v982, 1
        %v1187 = vpop.permute.xlu0 %1186
        %1188 = vrot.lane.b32.xlu0 %v985, 1
        %v1189 = vpop.permute.xlu0 %1188
        %v1190 = vsel %vm456, %v1175, %v1183
        %v1191 = vsel %vm456, %v1177, %v1185
        %v1192 = vsel %vm456, %v1179, %v1187
        %v1193 = vsel %vm456, %v1181, %v1189
        %v1194 = vsel %vm456, %v1167, %v1175
        %v1195 = vsel %vm456, %v1169, %v1177
        %v1196 = vsel %vm456, %v1171, %v1179
        %v1197 = vsel %vm456, %v1173, %v1181
        %v1198 = vsel %vm456, %v1183, %v1167
        %v1199 = vsel %vm456, %v1185, %v1169
        %v1200 = vsel %vm456, %v1187, %v1171
        %v1201 = vsel %vm456, %v1189, %v1173
        %v1202 = vmul.f32 %v1198, %v357
        %v1203 = vmul.f32 %v1194, %v358
        %v1204 = vmul.f32 %v1190, %v359
        %v1205 = vmul.f32 %v1199, %v357
        %v1206 = vmul.f32 %v1195, %v358
        %v1207 = vmul.f32 %v1191, %v359
        %v1208 = vmul.f32 %v1200, %v357
        %v1209 = vmul.f32 %v1196, %v358
        %v1210 = vmul.f32 %v1192, %v359
        %v1211 = vmul.f32 %v1201, %v357
        %v1212 = vmul.f32 %v1197, %v358
        %v1213 = vmul.f32 %v1193, %v359
        %v1214 = vpack.c.bf16 %v1203, %v1202
        %v1215 = vpack.c.bf16 %v1204, %v1204
        %v1216 = vpack.c.bf16 %v1206, %v1205
        %v1217 = vpack.c.bf16 %v1207, %v1207
        %v1218 = vpack.c.bf16 %v1209, %v1208
        %v1219 = vpack.c.bf16 %v1210, %v1210
        %v1220 = vpack.c.bf16 %v1212, %v1211
        %v1221 = vpack.c.bf16 %v1213, %v1213
        %1222 = vst [vmem:[#allocation2 + $0x90] sm:$0xff] %v1214
        %1223 = vst [vmem:[#allocation2 + $0x98] sm:$0xf] %v1215
        %1224 = vst [vmem:[#allocation2 + $0x9c] sm:$0xff] %v1216
        %1225 = vst [vmem:[#allocation2 + $0xa4] sm:$0xf] %v1217
        %1226 = vst [vmem:[#allocation2 + $0xa8] sm:$0xff] %v1218
        %1227 = vst [vmem:[#allocation2 + $0xb0] sm:$0xf] %v1219
        %1228 = vst [vmem:[#allocation2 + $0xb4] sm:$0xff] %v1220
        %1229 = vst [vmem:[#allocation2 + $0xbc] sm:$0xf] %v1221
        %v1230 = vpack.c.bf16 %v975, %v974
        %v1231 = vpack.c.bf16 %v976, %v976
        %v1232 = vpack.c.bf16 %v978, %v977
        %v1233 = vpack.c.bf16 %v979, %v979
        %v1234 = vpack.c.bf16 %v981, %v980
        %v1235 = vpack.c.bf16 %v982, %v982
        %v1236 = vpack.c.bf16 %v984, %v983
        %v1237 = vpack.c.bf16 %v985, %v985
        %1238 = vst [vmem:[#allocation2 + $0xc0] sm:$0xff] %v1230
        %1239 = vst [vmem:[#allocation2 + $0xc8] sm:$0xf] %v1231
        %1240 = vst [vmem:[#allocation2 + $0xcc] sm:$0xff] %v1232
        %1241 = vst [vmem:[#allocation2 + $0xd4] sm:$0xf] %v1233
        %1242 = vst [vmem:[#allocation2 + $0xd8] sm:$0xff] %v1234
        %1243 = vst [vmem:[#allocation2 + $0xe0] sm:$0xf] %v1235
        %1244 = vst [vmem:[#allocation2 + $0xe4] sm:$0xff] %v1236
        %1245 = vst [vmem:[#allocation2 + $0xec] sm:$0xf] %v1237
        %1246 = vrot.lane.b32.xlu0 %v974, 127
        %v1247 = vpop.permute.xlu0 %1246
        %1248 = vrot.lane.b32.xlu0 %v977, 127
        %v1249 = vpop.permute.xlu0 %1248
        %1250 = vrot.lane.b32.xlu0 %v980, 127
        %v1251 = vpop.permute.xlu0 %1250
        %1252 = vrot.lane.b32.xlu0 %v983, 127
        %v1253 = vpop.permute.xlu0 %1252
        %1254 = vrot.lane.b32.xlu0 %v975, 127
        %v1255 = vpop.permute.xlu0 %1254
        %1256 = vrot.lane.b32.xlu0 %v978, 127
        %v1257 = vpop.permute.xlu0 %1256
        %1258 = vrot.lane.b32.xlu0 %v981, 127
        %v1259 = vpop.permute.xlu0 %1258
        %1260 = vrot.lane.b32.xlu0 %v984, 127
        %v1261 = vpop.permute.xlu0 %1260
        %1262 = vrot.lane.b32.xlu0 %v976, 127
        %v1263 = vpop.permute.xlu0 %1262
        %1264 = vrot.lane.b32.xlu0 %v979, 127
        %v1265 = vpop.permute.xlu0 %1264
        %1266 = vrot.lane.b32.xlu0 %v982, 127
        %v1267 = vpop.permute.xlu0 %1266
        %1268 = vrot.lane.b32.xlu0 %v985, 127
        %v1269 = vpop.permute.xlu0 %1268
        %v1270 = vsel %vm497, %v1255, %v1263
        %v1271 = vsel %vm497, %v1257, %v1265
        %v1272 = vsel %vm497, %v1259, %v1267
        %v1273 = vsel %vm497, %v1261, %v1269
        %v1274 = vsel %vm497, %v1247, %v1255
        %v1275 = vsel %vm497, %v1249, %v1257
        %v1276 = vsel %vm497, %v1251, %v1259
        %v1277 = vsel %vm497, %v1253, %v1261
        %v1278 = vsel %vm497, %v1263, %v1247
        %v1279 = vsel %vm497, %v1265, %v1249
        %v1280 = vsel %vm497, %v1267, %v1251
        %v1281 = vsel %vm497, %v1269, %v1253
        %v1282 = vmul.f32 %v1274, %v424
        %v1283 = vmul.f32 %v1270, %v425
        %v1284 = vmul.f32 %v1278, %v426
        %v1285 = vmul.f32 %v1275, %v424
        %v1286 = vmul.f32 %v1271, %v425
        %v1287 = vmul.f32 %v1279, %v426
        %v1288 = vmul.f32 %v1276, %v424
        %v1289 = vmul.f32 %v1272, %v425
        %v1290 = vmul.f32 %v1280, %v426
        %v1291 = vmul.f32 %v1277, %v424
        %v1292 = vmul.f32 %v1273, %v425
        %v1293 = vmul.f32 %v1281, %v426
        %v1294 = vpack.c.bf16 %v1283, %v1282
        %v1295 = vpack.c.bf16 %v1284, %v1284
        %v1296 = vpack.c.bf16 %v1286, %v1285
        %v1297 = vpack.c.bf16 %v1287, %v1287
        %v1298 = vpack.c.bf16 %v1289, %v1288
        %v1299 = vpack.c.bf16 %v1290, %v1290
        %v1300 = vpack.c.bf16 %v1292, %v1291
        %v1301 = vpack.c.bf16 %v1293, %v1293
        %1302 = vst [vmem:[#allocation2 + $0xf0] sm:$0xff] %v1294
        %1303 = vst [vmem:[#allocation2 + $0xf8] sm:$0xf] %v1295
        %1304 = vst [vmem:[#allocation2 + $0xfc] sm:$0xff] %v1296
        %1305 = vst [vmem:[#allocation2 + $0x104] sm:$0xf] %v1297
        %1306 = vst [vmem:[#allocation2 + $0x108] sm:$0xff] %v1298
        %1307 = vst [vmem:[#allocation2 + $0x110] sm:$0xf] %v1299
        %1308 = vst [vmem:[#allocation2 + $0x114] sm:$0xff] %v1300
        %1309 = vst [vmem:[#allocation2 + $0x11c] sm:$0xf] %v1301
        %1310 = vrot.lane.b32.xlu0 %v974, 113
        %v1311 = vpop.permute.xlu0 %1310
        %1312 = vrot.lane.b32.xlu0 %v977, 113
        %v1313 = vpop.permute.xlu0 %1312
        %1314 = vrot.lane.b32.xlu0 %v980, 113
        %v1315 = vpop.permute.xlu0 %1314
        %1316 = vrot.lane.b32.xlu0 %v983, 113
        %v1317 = vpop.permute.xlu0 %1316
        %1318 = vrot.lane.b32.xlu0 %v975, 113
        %v1319 = vpop.permute.xlu0 %1318
        %1320 = vrot.lane.b32.xlu0 %v978, 113
        %v1321 = vpop.permute.xlu0 %1320
        %1322 = vrot.lane.b32.xlu0 %v981, 113
        %v1323 = vpop.permute.xlu0 %1322
        %1324 = vrot.lane.b32.xlu0 %v984, 113
        %v1325 = vpop.permute.xlu0 %1324
        %1326 = vrot.lane.b32.xlu0 %v976, 113
        %v1327 = vpop.permute.xlu0 %1326
        %1328 = vrot.lane.b32.xlu0 %v979, 113
        %v1329 = vpop.permute.xlu0 %1328
        %1330 = vrot.lane.b32.xlu0 %v982, 113
        %v1331 = vpop.permute.xlu0 %1330
        %1332 = vrot.lane.b32.xlu0 %v985, 113
        %v1333 = vpop.permute.xlu0 %1332
        %v1334 = vsel %vm530, %v1319, %v1327
        %v1335 = vsel %vm530, %v1321, %v1329
        %v1336 = vsel %vm530, %v1323, %v1331
        %v1337 = vsel %vm530, %v1325, %v1333
        %v1338 = vsel %vm530, %v1311, %v1319
        %v1339 = vsel %vm530, %v1313, %v1321
        %v1340 = vsel %vm530, %v1315, %v1323
        %v1341 = vsel %vm530, %v1317, %v1325
        %v1342 = vsel %vm530, %v1327, %v1311
        %v1343 = vsel %vm530, %v1329, %v1313
        %v1344 = vsel %vm530, %v1331, %v1315
        %v1345 = vsel %vm530, %v1333, %v1317
        %v1346 = vmul.f32 %v1338, %v357
        %v1347 = vmul.f32 %v1334, %v358
        %v1348 = vmul.f32 %v1342, %v359
        %v1349 = vmul.f32 %v1339, %v357
        %v1350 = vmul.f32 %v1335, %v358
        %v1351 = vmul.f32 %v1343, %v359
        %v1352 = vmul.f32 %v1340, %v357
        %v1353 = vmul.f32 %v1336, %v358
        %v1354 = vmul.f32 %v1344, %v359
        %v1355 = vmul.f32 %v1341, %v357
        %v1356 = vmul.f32 %v1337, %v358
        %v1357 = vmul.f32 %v1345, %v359
        %v1358 = vpack.c.bf16 %v1347, %v1346
        %v1359 = vpack.c.bf16 %v1348, %v1348
        %v1360 = vpack.c.bf16 %v1350, %v1349
        %v1361 = vpack.c.bf16 %v1351, %v1351
        %v1362 = vpack.c.bf16 %v1353, %v1352
        %v1363 = vpack.c.bf16 %v1354, %v1354
        %v1364 = vpack.c.bf16 %v1356, %v1355
        %v1365 = vpack.c.bf16 %v1357, %v1357
        %1366 = vst [vmem:[#allocation2 + $0x120] sm:$0xff] %v1358
        %1367 = vst [vmem:[#allocation2 + $0x128] sm:$0xf] %v1359
        %1368 = vst [vmem:[#allocation2 + $0x12c] sm:$0xff] %v1360
        %1369 = vst [vmem:[#allocation2 + $0x134] sm:$0xf] %v1361
        %1370 = vst [vmem:[#allocation2 + $0x138] sm:$0xff] %v1362
        %1371 = vst [vmem:[#allocation2 + $0x140] sm:$0xf] %v1363
        %1372 = vst [vmem:[#allocation2 + $0x144] sm:$0xff] %v1364
        %1373 = vst [vmem:[#allocation2 + $0x14c] sm:$0xf] %v1365
        %1374 = vrot.lane.b32.xlu0 %v974, 112
        %v1375 = vpop.permute.xlu0 %1374
        %1376 = vrot.lane.b32.xlu0 %v977, 112
        %v1377 = vpop.permute.xlu0 %1376
        %1378 = vrot.lane.b32.xlu0 %v980, 112
        %v1379 = vpop.permute.xlu0 %1378
        %1380 = vrot.lane.b32.xlu0 %v983, 112
        %v1381 = vpop.permute.xlu0 %1380
        %1382 = vrot.lane.b32.xlu0 %v975, 112
        %v1383 = vpop.permute.xlu0 %1382
        %1384 = vrot.lane.b32.xlu0 %v978, 112
        %v1385 = vpop.permute.xlu0 %1384
        %1386 = vrot.lane.b32.xlu0 %v981, 112
        %v1387 = vpop.permute.xlu0 %1386
        %1388 = vrot.lane.b32.xlu0 %v984, 112
        %v1389 = vpop.permute.xlu0 %1388
        %1390 = vrot.lane.b32.xlu0 %v976, 112
        %v1391 = vpop.permute.xlu0 %1390
        %1392 = vrot.lane.b32.xlu0 %v979, 112
        %v1393 = vpop.permute.xlu0 %1392
        %1394 = vrot.lane.b32.xlu0 %v982, 112
        %v1395 = vpop.permute.xlu0 %1394
        %1396 = vrot.lane.b32.xlu0 %v985, 112
        %v1397 = vpop.permute.xlu0 %1396
        %v1398 = vsel %vm563, %v1383, %v1391
        %v1399 = vsel %vm563, %v1385, %v1393
        %v1400 = vsel %vm563, %v1387, %v1395
        %v1401 = vsel %vm563, %v1389, %v1397
        %v1402 = vsel %vm563, %v1375, %v1383
        %v1403 = vsel %vm563, %v1377, %v1385
        %v1404 = vsel %vm563, %v1379, %v1387
        %v1405 = vsel %vm563, %v1381, %v1389
        %v1406 = vsel %vm563, %v1391, %v1375
        %v1407 = vsel %vm563, %v1393, %v1377
        %v1408 = vsel %vm563, %v1395, %v1379
        %v1409 = vsel %vm563, %v1397, %v1381
        %v1410 = vpack.c.bf16 %v1398, %v1402
        %v1411 = vpack.c.bf16 %v1406, %v1406
        %v1412 = vpack.c.bf16 %v1399, %v1403
        %v1413 = vpack.c.bf16 %v1407, %v1407
        %v1414 = vpack.c.bf16 %v1400, %v1404
        %v1415 = vpack.c.bf16 %v1408, %v1408
        %v1416 = vpack.c.bf16 %v1401, %v1405
        %v1417 = vpack.c.bf16 %v1409, %v1409
        %1418 = vst [vmem:[#allocation2 + $0x150] sm:$0xff] %v1410
        %1419 = vst [vmem:[#allocation2 + $0x158] sm:$0xf] %v1411
        %1420 = vst [vmem:[#allocation2 + $0x15c] sm:$0xff] %v1412
        %1421 = vst [vmem:[#allocation2 + $0x164] sm:$0xf] %v1413
        %1422 = vst [vmem:[#allocation2 + $0x168] sm:$0xff] %v1414
        %1423 = vst [vmem:[#allocation2 + $0x170] sm:$0xf] %v1415
        %1424 = vst [vmem:[#allocation2 + $0x174] sm:$0xff] %v1416
        %1425 = vst [vmem:[#allocation2 + $0x17c] sm:$0xf] %v1417
        %1426 = vrot.lane.b32.xlu0 %v974, 111
        %v1427 = vpop.permute.xlu0 %1426
        %1428 = vrot.lane.b32.xlu0 %v977, 111
        %v1429 = vpop.permute.xlu0 %1428
        %1430 = vrot.lane.b32.xlu0 %v980, 111
        %v1431 = vpop.permute.xlu0 %1430
        %1432 = vrot.lane.b32.xlu0 %v983, 111
        %v1433 = vpop.permute.xlu0 %1432
        %1434 = vrot.lane.b32.xlu0 %v975, 111
        %v1435 = vpop.permute.xlu0 %1434
        %1436 = vrot.lane.b32.xlu0 %v978, 111
        %v1437 = vpop.permute.xlu0 %1436
        %1438 = vrot.lane.b32.xlu0 %v981, 111
        %v1439 = vpop.permute.xlu0 %1438
        %1440 = vrot.lane.b32.xlu0 %v984, 111
        %v1441 = vpop.permute.xlu0 %1440
        %1442 = vrot.lane.b32.xlu0 %v976, 111
        %v1443 = vpop.permute.xlu0 %1442
        %1444 = vrot.lane.b32.xlu0 %v979, 111
        %v1445 = vpop.permute.xlu0 %1444
        %1446 = vrot.lane.b32.xlu0 %v982, 111
        %v1447 = vpop.permute.xlu0 %1446
        %1448 = vrot.lane.b32.xlu0 %v985, 111
        %v1449 = vpop.permute.xlu0 %1448
        %v1450 = vsel %vm590, %v1435, %v1443
        %v1451 = vsel %vm590, %v1437, %v1445
        %v1452 = vsel %vm590, %v1439, %v1447
        %v1453 = vsel %vm590, %v1441, %v1449
        %v1454 = vsel %vm590, %v1427, %v1435
        %v1455 = vsel %vm590, %v1429, %v1437
        %v1456 = vsel %vm590, %v1431, %v1439
        %v1457 = vsel %vm590, %v1433, %v1441
        %v1458 = vsel %vm590, %v1443, %v1427
        %v1459 = vsel %vm590, %v1445, %v1429
        %v1460 = vsel %vm590, %v1447, %v1431
        %v1461 = vsel %vm590, %v1449, %v1433
        %v1462 = vmul.f32 %v1454, %v424
        %v1463 = vmul.f32 %v1450, %v425
        %v1464 = vmul.f32 %v1458, %v426
        %v1465 = vmul.f32 %v1455, %v424
        %v1466 = vmul.f32 %v1451, %v425
        %v1467 = vmul.f32 %v1459, %v426
        %v1468 = vmul.f32 %v1456, %v424
        %v1469 = vmul.f32 %v1452, %v425
        %v1470 = vmul.f32 %v1460, %v426
        %v1471 = vmul.f32 %v1457, %v424
        %v1472 = vmul.f32 %v1453, %v425
        %v1473 = vmul.f32 %v1461, %v426
        %v1474 = vpack.c.bf16 %v1463, %v1462
        %v1475 = vpack.c.bf16 %v1464, %v1464
        %v1476 = vpack.c.bf16 %v1466, %v1465
        %v1477 = vpack.c.bf16 %v1467, %v1467
        %v1478 = vpack.c.bf16 %v1469, %v1468
        %v1479 = vpack.c.bf16 %v1470, %v1470
        %v1480 = vpack.c.bf16 %v1472, %v1471
        %v1481 = vpack.c.bf16 %v1473, %v1473
        %1482 = vst [vmem:[#allocation2 + $0x180] sm:$0xff] %v1474
        %1483 = vst [vmem:[#allocation2 + $0x188] sm:$0xf] %v1475
        %1484 = vst [vmem:[#allocation2 + $0x18c] sm:$0xff] %v1476
        %1485 = vst [vmem:[#allocation2 + $0x194] sm:$0xf] %v1477
        %1486 = vst [vmem:[#allocation2 + $0x198] sm:$0xff] %v1478
        %1487 = vst [vmem:[#allocation2 + $0x1a0] sm:$0xf] %v1479
        %1488 = vst [vmem:[#allocation2 + $0x1a4] sm:$0xff] %v1480
        %1489 = vst [vmem:[#allocation2 + $0x1ac] sm:$0xf] %v1481
        %v1490 = vld [vmem:[#allocation2] sm:$0xff]
        %v1491 = vld [vmem:[#allocation2 + $0x8] sm:$0xf]
        %v1492 = vld [vmem:[#allocation2 + $0xc] sm:$0xff]
        %v1493 = vld [vmem:[#allocation2 + $0x14] sm:$0xf]
        %v1494 = vld [vmem:[#allocation2 + $0x18] sm:$0xff]
        %v1495 = vld [vmem:[#allocation2 + $0x20] sm:$0xf]
        %v1496 = vld [vmem:[#allocation2 + $0x24] sm:$0xff]
        %v1497 = vld [vmem:[#allocation2 + $0x2c] sm:$0xf]
        %v1498 = vld [vmem:[#allocation2 + $0x30] sm:$0xff]
        %v1499 = vld [vmem:[#allocation2 + $0x38] sm:$0xf]
        %v1500 = vld [vmem:[#allocation2 + $0x3c] sm:$0xff]
        %v1501 = vld [vmem:[#allocation2 + $0x44] sm:$0xf]
        %v1502 = vld [vmem:[#allocation2 + $0x48] sm:$0xff]
        %v1503 = vld [vmem:[#allocation2 + $0x50] sm:$0xf]
        %v1504 = vld [vmem:[#allocation2 + $0x54] sm:$0xff]
        %v1505 = vld [vmem:[#allocation2 + $0x5c] sm:$0xf]
        %v1506 = vld [vmem:[#allocation2 + $0x60] sm:$0xff]
        %v1507 = vld [vmem:[#allocation2 + $0x68] sm:$0xf]
        %v1508 = vld [vmem:[#allocation2 + $0x6c] sm:$0xff]
        %v1509 = vld [vmem:[#allocation2 + $0x74] sm:$0xf]
        %v1510 = vld [vmem:[#allocation2 + $0x78] sm:$0xff]
        %v1511 = vld [vmem:[#allocation2 + $0x80] sm:$0xf]
        %v1512 = vld [vmem:[#allocation2 + $0x84] sm:$0xff]
        %v1513 = vld [vmem:[#allocation2 + $0x8c] sm:$0xf]
        %v1514 = vld [vmem:[#allocation2 + $0x90] sm:$0xff]
        %v1515 = vld [vmem:[#allocation2 + $0x98] sm:$0xf]
        %v1516 = vld [vmem:[#allocation2 + $0x9c] sm:$0xff]
        %v1517 = vld [vmem:[#allocation2 + $0xa4] sm:$0xf]
        %v1518 = vld [vmem:[#allocation2 + $0xa8] sm:$0xff]
        %v1519 = vld [vmem:[#allocation2 + $0xb0] sm:$0xf]
        %v1520 = vld [vmem:[#allocation2 + $0xb4] sm:$0xff]
        %v1521 = vld [vmem:[#allocation2 + $0xbc] sm:$0xf]
        %v1522 = vld [vmem:[#allocation2 + $0xc0] sm:$0xff]
        %v1523 = vld [vmem:[#allocation2 + $0xc8] sm:$0xf]
        %v1524 = vld [vmem:[#allocation2 + $0xcc] sm:$0xff]
        %v1525 = vld [vmem:[#allocation2 + $0xd4] sm:$0xf]
        %v1526 = vld [vmem:[#allocation2 + $0xd8] sm:$0xff]
        %v1527 = vld [vmem:[#allocation2 + $0xe0] sm:$0xf]
        %v1528 = vld [vmem:[#allocation2 + $0xe4] sm:$0xff]
        %v1529 = vld [vmem:[#allocation2 + $0xec] sm:$0xf]
        %v1530 = vld [vmem:[#allocation2 + $0xf0] sm:$0xff]
        %v1531 = vld [vmem:[#allocation2 + $0xf8] sm:$0xf]
        %v1532 = vld [vmem:[#allocation2 + $0xfc] sm:$0xff]
        %v1533 = vld [vmem:[#allocation2 + $0x104] sm:$0xf]
        %v1534 = vld [vmem:[#allocation2 + $0x108] sm:$0xff]
        %v1535 = vld [vmem:[#allocation2 + $0x110] sm:$0xf]
        %v1536 = vld [vmem:[#allocation2 + $0x114] sm:$0xff]
        %v1537 = vld [vmem:[#allocation2 + $0x11c] sm:$0xf]
        %v1538 = vld [vmem:[#allocation2 + $0x120] sm:$0xff]
        %v1539 = vld [vmem:[#allocation2 + $0x128] sm:$0xf]
        %v1540 = vld [vmem:[#allocation2 + $0x12c] sm:$0xff]
        %v1541 = vld [vmem:[#allocation2 + $0x134] sm:$0xf]
        %v1542 = vld [vmem:[#allocation2 + $0x138] sm:$0xff]
        %v1543 = vld [vmem:[#allocation2 + $0x140] sm:$0xf]
        %v1544 = vld [vmem:[#allocation2 + $0x144] sm:$0xff]
        %v1545 = vld [vmem:[#allocation2 + $0x14c] sm:$0xf]
        %v1546 = vld [vmem:[#allocation2 + $0x150] sm:$0xff]
        %v1547 = vld [vmem:[#allocation2 + $0x158] sm:$0xf]
        %v1548 = vld [vmem:[#allocation2 + $0x15c] sm:$0xff]
        %v1549 = vld [vmem:[#allocation2 + $0x164] sm:$0xf]
        %v1550 = vld [vmem:[#allocation2 + $0x168] sm:$0xff]
        %v1551 = vld [vmem:[#allocation2 + $0x170] sm:$0xf]
        %v1552 = vld [vmem:[#allocation2 + $0x174] sm:$0xff]
        %v1553 = vld [vmem:[#allocation2 + $0x17c] sm:$0xf]
        %v1554 = vld [vmem:[#allocation2 + $0x180] sm:$0xff]
        %v1555 = vld [vmem:[#allocation2 + $0x188] sm:$0xf]
        %v1556 = vld [vmem:[#allocation2 + $0x18c] sm:$0xff]
        %v1557 = vld [vmem:[#allocation2 + $0x194] sm:$0xf]
        %v1558 = vld [vmem:[#allocation2 + $0x198] sm:$0xff]
        %v1559 = vld [vmem:[#allocation2 + $0x1a0] sm:$0xf]
        %v1560 = vld [vmem:[#allocation2 + $0x1a4] sm:$0xff]
        %v1561 = vld [vmem:[#allocation2 + $0x1ac] sm:$0xf]
        %1563 = vset.pattern.permute.xlu0 0
        %1564 = vperm.xlu0 %1563, %v970
        %v1565 = vpop.permute.xlu0 %1564
        %1568 = vset.pattern.permute.xlu0 0
        %1569 = vperm.xlu0 %1568, %v971
        %v1570 = vpop.permute.xlu0 %1569
        %1573 = vset.pattern.permute.xlu0 0
        %1574 = vperm.xlu0 %1573, %v972
        %v1575 = vpop.permute.xlu0 %1574
        %1578 = vset.pattern.permute.xlu0 0
        %1579 = vperm.xlu0 %1578, %v973
        %v1580 = vpop.permute.xlu0 %1579
        %v1590 = vunpack.c.l.b16 %v962
        %v1591 = vunpack.c.h.b16 %v962
        %v1592 = vunpack.c.l.b16 %v963
        %v1593 = vunpack.c.l.b16 %v964
        %v1594 = vunpack.c.h.b16 %v964
        %v1595 = vunpack.c.l.b16 %v965
        %v1596 = vunpack.c.l.b16 %v966
        %v1597 = vunpack.c.h.b16 %v966
        %v1598 = vunpack.c.l.b16 %v967
        %v1599 = vunpack.c.l.b16 %v968
        %v1600 = vunpack.c.h.b16 %v968
        %v1601 = vunpack.c.l.b16 %v969
        %v1602 = vpack.c.b16 %v1593, %v1590
        %v1603 = vpack.c.b16 %v1594, %v1591
        %v1604 = vpack.c.b16 %v1595, %v1592
        %v1605 = vpack.c.b16 %v1599, %v1596
        %v1606 = vpack.c.b16 %v1600, %v1597
        %v1607 = vpack.c.b16 %v1601, %v1598
        %v1684 = vunpack.c.l.b16 %v1490
        %v1685 = vunpack.c.h.b16 %v1490
        %v1686 = vunpack.c.l.b16 %v1491
        %v1687 = vunpack.c.l.b16 %v1492
        %v1688 = vunpack.c.h.b16 %v1492
        %v1689 = vunpack.c.l.b16 %v1493
        %v1690 = vunpack.c.l.b16 %v1494
        %v1691 = vunpack.c.h.b16 %v1494
        %v1692 = vunpack.c.l.b16 %v1495
        %v1693 = vunpack.c.l.b16 %v1496
        %v1694 = vunpack.c.h.b16 %v1496
        %v1695 = vunpack.c.l.b16 %v1497
        %v1696 = vunpack.c.l.b16 %v1498
        %v1697 = vunpack.c.h.b16 %v1498
        %v1698 = vunpack.c.l.b16 %v1499
        %v1699 = vunpack.c.l.b16 %v1500
        %v1700 = vunpack.c.h.b16 %v1500
        %v1701 = vunpack.c.l.b16 %v1501
        %v1702 = vunpack.c.l.b16 %v1502
        %v1703 = vunpack.c.h.b16 %v1502
        %v1704 = vunpack.c.l.b16 %v1503
        %v1705 = vunpack.c.l.b16 %v1504
        %v1706 = vunpack.c.h.b16 %v1504
        %v1707 = vunpack.c.l.b16 %v1505
        %v1708 = vunpack.c.l.b16 %v1506
        %v1709 = vunpack.c.h.b16 %v1506
        %v1710 = vunpack.c.l.b16 %v1507
        %v1711 = vunpack.c.l.b16 %v1508
        %v1712 = vunpack.c.h.b16 %v1508
        %v1713 = vunpack.c.l.b16 %v1509
        %v1714 = vunpack.c.l.b16 %v1510
        %v1715 = vunpack.c.h.b16 %v1510
        %v1716 = vunpack.c.l.b16 %v1511
        %v1717 = vunpack.c.l.b16 %v1512
        %v1718 = vunpack.c.h.b16 %v1512
        %v1719 = vunpack.c.l.b16 %v1513
        %v1720 = vunpack.c.l.b16 %v1514
        %v1721 = vunpack.c.h.b16 %v1514
        %v1722 = vunpack.c.l.b16 %v1515
        %v1723 = vunpack.c.l.b16 %v1516
        %v1724 = vunpack.c.h.b16 %v1516
        %v1725 = vunpack.c.l.b16 %v1517
        %v1726 = vunpack.c.l.b16 %v1518
        %v1727 = vunpack.c.h.b16 %v1518
        %v1728 = vunpack.c.l.b16 %v1519
        %v1729 = vunpack.c.l.b16 %v1520
        %v1730 = vunpack.c.h.b16 %v1520
        %v1731 = vunpack.c.l.b16 %v1521
        %v1732 = vunpack.c.l.b16 %v1522
        %v1733 = vunpack.c.h.b16 %v1522
        %v1734 = vunpack.c.l.b16 %v1523
        %v1735 = vunpack.c.l.b16 %v1524
        %v1736 = vunpack.c.h.b16 %v1524
        %v1737 = vunpack.c.l.b16 %v1525
        %v1738 = vunpack.c.l.b16 %v1526
        %v1739 = vunpack.c.h.b16 %v1526
        %v1740 = vunpack.c.l.b16 %v1527
        %v1741 = vunpack.c.l.b16 %v1528
        %v1742 = vunpack.c.h.b16 %v1528
        %v1743 = vunpack.c.l.b16 %v1529
        %v1744 = vunpack.c.l.b16 %v1530
        %v1745 = vunpack.c.h.b16 %v1530
        %v1746 = vunpack.c.l.b16 %v1531
        %v1747 = vunpack.c.l.b16 %v1532
        %v1748 = vunpack.c.h.b16 %v1532
        %v1749 = vunpack.c.l.b16 %v1533
        %v1750 = vunpack.c.l.b16 %v1534
        %v1751 = vunpack.c.h.b16 %v1534
        %v1752 = vunpack.c.l.b16 %v1535
        %v1753 = vunpack.c.l.b16 %v1536
        %v1754 = vunpack.c.h.b16 %v1536
        %v1755 = vunpack.c.l.b16 %v1537
        %v1756 = vunpack.c.l.b16 %v1538
        %v1757 = vunpack.c.h.b16 %v1538
        %v1758 = vunpack.c.l.b16 %v1539
        %v1759 = vunpack.c.l.b16 %v1540
        %v1760 = vunpack.c.h.b16 %v1540
        %v1761 = vunpack.c.l.b16 %v1541
        %v1762 = vunpack.c.l.b16 %v1542
        %v1763 = vunpack.c.h.b16 %v1542
        %v1764 = vunpack.c.l.b16 %v1543
        %v1765 = vunpack.c.l.b16 %v1544
        %v1766 = vunpack.c.h.b16 %v1544
        %v1767 = vunpack.c.l.b16 %v1545
        %v1768 = vunpack.c.l.b16 %v1546
        %v1769 = vunpack.c.h.b16 %v1546
        %v1770 = vunpack.c.l.b16 %v1547
        %v1771 = vunpack.c.l.b16 %v1548
        %v1772 = vunpack.c.h.b16 %v1548
        %v1773 = vunpack.c.l.b16 %v1549
        %v1774 = vunpack.c.l.b16 %v1550
        %v1775 = vunpack.c.h.b16 %v1550
        %v1776 = vunpack.c.l.b16 %v1551
        %v1777 = vunpack.c.l.b16 %v1552
        %v1778 = vunpack.c.h.b16 %v1552
        %v1779 = vunpack.c.l.b16 %v1553
        %v1780 = vunpack.c.l.b16 %v1554
        %v1781 = vunpack.c.h.b16 %v1554
        %v1782 = vunpack.c.l.b16 %v1555
        %v1783 = vunpack.c.l.b16 %v1556
        %v1784 = vunpack.c.h.b16 %v1556
        %v1785 = vunpack.c.l.b16 %v1557
        %v1786 = vunpack.c.l.b16 %v1558
        %v1787 = vunpack.c.h.b16 %v1558
        %v1788 = vunpack.c.l.b16 %v1559
        %v1789 = vunpack.c.l.b16 %v1560
        %v1790 = vunpack.c.h.b16 %v1560
        %v1791 = vunpack.c.l.b16 %v1561
        %v1792 = vpack.c.b16 %v1687, %v1684
        %v1793 = vpack.c.b16 %v1688, %v1685
        %v1794 = vpack.c.b16 %v1689, %v1686
        %v1795 = vpack.c.b16 %v1693, %v1690
        %v1796 = vpack.c.b16 %v1694, %v1691
        %v1797 = vpack.c.b16 %v1695, %v1692
        %v1798 = vpack.c.b16 %v1699, %v1696
        %v1799 = vpack.c.b16 %v1700, %v1697
        %v1800 = vpack.c.b16 %v1701, %v1698
        %v1801 = vpack.c.b16 %v1705, %v1702
        %v1802 = vpack.c.b16 %v1706, %v1703
        %v1803 = vpack.c.b16 %v1707, %v1704
        %v1804 = vpack.c.b16 %v1711, %v1708
        %v1805 = vpack.c.b16 %v1712, %v1709
        %v1806 = vpack.c.b16 %v1713, %v1710
        %v1807 = vpack.c.b16 %v1717, %v1714
        %v1808 = vpack.c.b16 %v1718, %v1715
        %v1809 = vpack.c.b16 %v1719, %v1716
        %v1810 = vpack.c.b16 %v1723, %v1720
        %v1811 = vpack.c.b16 %v1724, %v1721
        %v1812 = vpack.c.b16 %v1725, %v1722
        %v1813 = vpack.c.b16 %v1729, %v1726
        %v1814 = vpack.c.b16 %v1730, %v1727
        %v1815 = vpack.c.b16 %v1731, %v1728
        %v1816 = vpack.c.b16 %v1735, %v1732
        %v1817 = vpack.c.b16 %v1736, %v1733
        %v1818 = vpack.c.b16 %v1737, %v1734
        %v1819 = vpack.c.b16 %v1741, %v1738
        %v1820 = vpack.c.b16 %v1742, %v1739
        %v1821 = vpack.c.b16 %v1743, %v1740
        %v1822 = vpack.c.b16 %v1747, %v1744
        %v1823 = vpack.c.b16 %v1748, %v1745
        %v1824 = vpack.c.b16 %v1749, %v1746
        %v1825 = vpack.c.b16 %v1753, %v1750
        %v1826 = vpack.c.b16 %v1754, %v1751
        %v1827 = vpack.c.b16 %v1755, %v1752
        %v1828 = vpack.c.b16 %v1759, %v1756
        %v1829 = vpack.c.b16 %v1760, %v1757
        %v1830 = vpack.c.b16 %v1761, %v1758
        %v1831 = vpack.c.b16 %v1765, %v1762
        %v1832 = vpack.c.b16 %v1766, %v1763
        %v1833 = vpack.c.b16 %v1767, %v1764
        %v1834 = vpack.c.b16 %v1771, %v1768
        %v1835 = vpack.c.b16 %v1772, %v1769
        %v1836 = vpack.c.b16 %v1773, %v1770
        %v1837 = vpack.c.b16 %v1777, %v1774
        %v1838 = vpack.c.b16 %v1778, %v1775
        %v1839 = vpack.c.b16 %v1779, %v1776
        %v1840 = vpack.c.b16 %v1783, %v1780
        %v1841 = vpack.c.b16 %v1784, %v1781
        %v1842 = vpack.c.b16 %v1785, %v1782
        %v1843 = vpack.c.b16 %v1789, %v1786
        %v1844 = vpack.c.b16 %v1790, %v1787
        %v1845 = vpack.c.b16 %v1791, %v1788
        %vm1900 = vcmask 261120
        %v1902 = vsel %vm1900, %v1604, 0
        %v1905 = vsel %vm1900, %v1607, 0
        %1907 = vmatpush.bf16.msra.mxu0 %v1813
        %1908 = vmatpush.bf16.msra.mxu0 %v1810
        %1909 = vmatpush.bf16.msra.mxu0 %v1807
        %1910 = vmatpush.bf16.msra.mxu0 %v1804
        %1911 = vmatpush.bf16.msra.mxu0 %v1801
        %1912 = vmatpush.bf16.msra.mxu0 %v1798
        %1913 = vmatpush.bf16.msra.mxu0 %v1795
        %1914 = vmatpush.bf16.msra.mxu0 %v1792
        %1915 = vmatmul.bf16.gmra.mxu0 %v1602
        %v1916 = vpop.f32.mrf.mxu0
        %v1917 = vadd.f32 %v1565, %v1916
        %v1918 = vpop.f32.mrf.mxu0
        %v1919 = vadd.f32 %v1570, %v1918
        %1920 = vmatmul.bf16.gmra.mxu0 %v1605
        %v1921 = vpop.f32.mrf.mxu0
        %v1922 = vadd.f32 %v1575, %v1921
        %v1923 = vpop.f32.mrf.mxu0
        %v1924 = vadd.f32 %v1580, %v1923
        %1925 = vdwg.mxu0
        %1926 = vmatpush.bf16.msra.mxu0 %v1837
        %1927 = vmatpush.bf16.msra.mxu0 %v1834
        %1928 = vmatpush.bf16.msra.mxu0 %v1831
        %1929 = vmatpush.bf16.msra.mxu0 %v1828
        %1930 = vmatpush.bf16.msra.mxu0 %v1825
        %1931 = vmatpush.bf16.msra.mxu0 %v1822
        %1932 = vmatpush.bf16.msra.mxu0 %v1819
        %1933 = vmatpush.bf16.msra.mxu0 %v1816
        %1934 = vmatmul.bf16.gmra.mxu0 %v1603
        %v1935 = vpop.f32.mrf.mxu0
        %v1936 = vadd.f32 %v1917, %v1935
        %v1937 = vpop.f32.mrf.mxu0
        %v1938 = vadd.f32 %v1919, %v1937
        %1939 = vmatmul.bf16.gmra.mxu0 %v1606
        %v1940 = vpop.f32.mrf.mxu0
        %v1941 = vadd.f32 %v1922, %v1940
        %v1942 = vpop.f32.mrf.mxu0
        %v1943 = vadd.f32 %v1924, %v1942
        %1944 = vdwg.mxu0
        %1945 = vmatpush.bf16.msra.mxu0 0
        %1946 = vmatpush.bf16.msra.mxu0 0
        %1947 = vmatpush.bf16.msra.mxu0 0
        %1948 = vmatpush.bf16.msra.mxu0 0
        %1949 = vmatpush.bf16.msra.mxu0 0
        %1950 = vmatpush.bf16.msra.mxu0 0
        %1951 = vmatpush.bf16.msra.mxu0 %v1843
        %1952 = vmatpush.bf16.msra.mxu0 %v1840
        %1953 = vmatmul.bf16.gmra.mxu0 %v1902
        %v1954 = vpop.f32.mrf.mxu0
        %v1955 = vadd.f32 %v1936, %v1954
        %v1956 = vpop.f32.mrf.mxu0
        %v1957 = vadd.f32 %v1938, %v1956
        %1958 = vmatmul.bf16.gmra.mxu0 %v1905
        %v1959 = vpop.f32.mrf.mxu0
        %v1960 = vadd.f32 %v1941, %v1959
        %v1961 = vpop.f32.mrf.mxu0
        %v1962 = vadd.f32 %v1943, %v1961
        %1963 = vdwg.mxu0
        %1964 = vmatpush.bf16.msra.mxu0 %v1814
        %1965 = vmatpush.bf16.msra.mxu0 %v1811
        %1966 = vmatpush.bf16.msra.mxu0 %v1808
        %1967 = vmatpush.bf16.msra.mxu0 %v1805
        %1968 = vmatpush.bf16.msra.mxu0 %v1802
        %1969 = vmatpush.bf16.msra.mxu0 %v1799
        %1970 = vmatpush.bf16.msra.mxu0 %v1796
        %1971 = vmatpush.bf16.msra.mxu0 %v1793
        %1972 = vmatmul.bf16.gmra.mxu0 %v1602
        %v1973 = vpop.f32.mrf.mxu0
        %v1974 = vadd.f32 %v1565, %v1973
        %v1975 = vpop.f32.mrf.mxu0
        %v1976 = vadd.f32 %v1570, %v1975
        %1977 = vmatmul.bf16.gmra.mxu0 %v1605
        %v1978 = vpop.f32.mrf.mxu0
        %v1979 = vadd.f32 %v1575, %v1978
        %v1980 = vpop.f32.mrf.mxu0
        %v1981 = vadd.f32 %v1580, %v1980
        %1982 = vdwg.mxu0
        %1983 = vmatpush.bf16.msra.mxu0 %v1838
        %1984 = vmatpush.bf16.msra.mxu0 %v1835
        %1985 = vmatpush.bf16.msra.mxu0 %v1832
        %1986 = vmatpush.bf16.msra.mxu0 %v1829
        %1987 = vmatpush.bf16.msra.mxu0 %v1826
        %1988 = vmatpush.bf16.msra.mxu0 %v1823
        %1989 = vmatpush.bf16.msra.mxu0 %v1820
        %1990 = vmatpush.bf16.msra.mxu0 %v1817
        %1991 = vmatmul.bf16.gmra.mxu0 %v1603
        %v1992 = vpop.f32.mrf.mxu0
        %v1993 = vadd.f32 %v1974, %v1992
        %v1994 = vpop.f32.mrf.mxu0
        %v1995 = vadd.f32 %v1976, %v1994
        %1996 = vmatmul.bf16.gmra.mxu0 %v1606
        %v1997 = vpop.f32.mrf.mxu0
        %v1998 = vadd.f32 %v1979, %v1997
        %v1999 = vpop.f32.mrf.mxu0
        %v2000 = vadd.f32 %v1981, %v1999
        %2001 = vdwg.mxu0
        %2002 = vmatpush.bf16.msra.mxu0 0
        %2003 = vmatpush.bf16.msra.mxu0 0
        %2004 = vmatpush.bf16.msra.mxu0 0
        %2005 = vmatpush.bf16.msra.mxu0 0
        %2006 = vmatpush.bf16.msra.mxu0 0
        %2007 = vmatpush.bf16.msra.mxu0 0
        %2008 = vmatpush.bf16.msra.mxu0 %v1844
        %2009 = vmatpush.bf16.msra.mxu0 %v1841
        %2010 = vmatmul.bf16.gmra.mxu0 %v1902
        %v2011 = vpop.f32.mrf.mxu0
        %v2012 = vadd.f32 %v1993, %v2011
        %v2013 = vpop.f32.mrf.mxu0
        %v2014 = vadd.f32 %v1995, %v2013
        %2015 = vmatmul.bf16.gmra.mxu0 %v1905
        %v2016 = vpop.f32.mrf.mxu0
        %v2017 = vadd.f32 %v1998, %v2016
        %v2018 = vpop.f32.mrf.mxu0
        %v2019 = vadd.f32 %v2000, %v2018
        %2020 = vdwg.mxu0
        %2021 = vmatpush.bf16.msra.mxu0 %v1815
        %2022 = vmatpush.bf16.msra.mxu0 %v1812
        %2023 = vmatpush.bf16.msra.mxu0 %v1809
        %2024 = vmatpush.bf16.msra.mxu0 %v1806
        %2025 = vmatpush.bf16.msra.mxu0 %v1803
        %2026 = vmatpush.bf16.msra.mxu0 %v1800
        %2027 = vmatpush.bf16.msra.mxu0 %v1797
        %2028 = vmatpush.bf16.msra.mxu0 %v1794
        %2029 = vmatmul.bf16.gmra.mxu0 %v1602
        %v2030 = vpop.f32.mrf.mxu0
        %v2031 = vadd.f32 %v1565, %v2030
        %v2032 = vpop.f32.mrf.mxu0
        %v2033 = vadd.f32 %v1570, %v2032
        %2034 = vmatmul.bf16.gmra.mxu0 %v1605
        %v2035 = vpop.f32.mrf.mxu0
        %v2036 = vadd.f32 %v1575, %v2035
        %v2037 = vpop.f32.mrf.mxu0
        %v2038 = vadd.f32 %v1580, %v2037
        %2039 = vdwg.mxu0
        %2040 = vmatpush.bf16.msra.mxu0 %v1839
        %2041 = vmatpush.bf16.msra.mxu0 %v1836
        %2042 = vmatpush.bf16.msra.mxu0 %v1833
        %2043 = vmatpush.bf16.msra.mxu0 %v1830
        %2044 = vmatpush.bf16.msra.mxu0 %v1827
        %2045 = vmatpush.bf16.msra.mxu0 %v1824
        %2046 = vmatpush.bf16.msra.mxu0 %v1821
        %2047 = vmatpush.bf16.msra.mxu0 %v1818
        %2048 = vmatmul.bf16.gmra.mxu0 %v1603
        %v2049 = vpop.f32.mrf.mxu0
        %v2050 = vadd.f32 %v2031, %v2049
        %v2051 = vpop.f32.mrf.mxu0
        %v2052 = vadd.f32 %v2033, %v2051
        %2053 = vmatmul.bf16.gmra.mxu0 %v1606
        %v2054 = vpop.f32.mrf.mxu0
        %v2055 = vadd.f32 %v2036, %v2054
        %v2056 = vpop.f32.mrf.mxu0
        %v2057 = vadd.f32 %v2038, %v2056
        %2058 = vdwg.mxu0
        %2059 = vmatpush.bf16.msra.mxu0 0
        %2060 = vmatpush.bf16.msra.mxu0 0
        %2061 = vmatpush.bf16.msra.mxu0 0
        %2062 = vmatpush.bf16.msra.mxu0 0
        %2063 = vmatpush.bf16.msra.mxu0 0
        %2064 = vmatpush.bf16.msra.mxu0 0
        %2065 = vmatpush.bf16.msra.mxu0 %v1845
        %2066 = vmatpush.bf16.msra.mxu0 %v1842
        %2067 = vmatmul.bf16.gmra.mxu0 %v1902
        %v2068 = vpop.f32.mrf.mxu0
        %v2069 = vadd.f32 %v2050, %v2068
        %v2070 = vpop.f32.mrf.mxu0
        %v2071 = vadd.f32 %v2052, %v2070
        %2072 = vmatmul.bf16.gmra.mxu0 %v1905
        %v2073 = vpop.f32.mrf.mxu0
        %v2074 = vadd.f32 %v2055, %v2073
        %v2075 = vpop.f32.mrf.mxu0
        %v2076 = vadd.f32 %v2057, %v2075
        %2077 = vdwg.mxu0
        %v2078 = vmax.f32 %v1955, 0.0
        %v2079 = vmax.f32 %v2012, 0.0
        %v2080 = vmax.f32 %v2069, 0.0
        %v2081 = vmax.f32 %v1957, 0.0
        %v2082 = vmax.f32 %v2014, 0.0
        %v2083 = vmax.f32 %v2071, 0.0
        %v2084 = vmax.f32 %v1960, 0.0
        %v2085 = vmax.f32 %v2017, 0.0
        %v2086 = vmax.f32 %v2074, 0.0
        %v2087 = vmax.f32 %v1962, 0.0
        %v2088 = vmax.f32 %v2019, 0.0
        %v2089 = vmax.f32 %v2076, 0.0
        %2090 = vst [vmem:[%s292] sm:$0xff] %v2078
        %2091 = vst [vmem:[%s292 + $0x8] sm:$0xff] %v2079
        %2092 = vst [vmem:[%s292 + $0x10] sm:$0xff] %v2080
        %2093 = vst [vmem:[%s292 + $0x18] sm:$0xff] %v2081
        %2094 = vst [vmem:[%s292 + $0x20] sm:$0xff] %v2082
        %2095 = vst [vmem:[%s292 + $0x28] sm:$0xff] %v2083
        %2096 = vst [vmem:[%s292 + $0x30] sm:$0xff] %v2084
        %2097 = vst [vmem:[%s292 + $0x38] sm:$0xff] %v2085
        %2098 = vst [vmem:[%s292 + $0x40] sm:$0xff] %v2086
        %2099 = vst [vmem:[%s292 + $0x48] sm:$0xff] %v2087
        %2100 = vst [vmem:[%s292 + $0x50] sm:$0xff] %v2088
        %2101 = vst [vmem:[%s292 + $0x58] sm:$0xff] %v2089
        %s2102 = sand.u32 %s161, 1
        %s2103 = scalar_lea.sflag [#allocation5], %s2102
        %s2104 = sand.u32 %s161, 1
        %s2105 = smul.addr %s2104, 96
        %s2106 = scalar_lea.vmem [#allocation9], %s2105
        // Predicated region
        $region57: #{tpu_custom_call.1} parent=43 // pred_check
          %p2107 = pneg %p171
        $region58: #{tpu_custom_call.1} parent=43 // pred_check_branch
          %2109 = sbr.rel (%p2107) target = $region60
        $region59: #{tpu_custom_call.1} parent=43 // pred_region
          %2111 = vsyncadd %s2103, 0
          %s2112 = smul.addr %s22, 12
          %s2113 = smul.addr %s2112, 8
          %s2114 = scalar_lea.hbm %s6, %s2113
          %s2115 = sshll.u32 %s2106, 4
          %s2116 = int_to_ptr.vmem [resolvable:$true] %s2115
          %s2117 = sshll.u32 %s2114, 4
          %s2118 = int_to_ptr.hbm [resolvable:$true] %s2117
          %2123 = dma.vmem_to_hbm [thread:$0]  %s2116, 1536, %s2118, %s2103, 384, 384, 24
        $region60: #{tpu_custom_call.1} parent=43 // pred_fallthru
          _
      $region44: #{tpu_custom_call.1} parent=5 // pred_fallthru
        _
      %p2124 = scmp.le.s32.totalorder 2, %s17
      // Predicated region
      $region61: #{tpu_custom_call.1} parent=5 // pred_check
        %p2125 = pneg %p2124
      $region62: #{tpu_custom_call.1} parent=5 // pred_check_branch
        %2127 = sbr.rel (%p2125) target = $region64
      $region63: #{tpu_custom_call.1} parent=5 // pred_region
        %s2128 = ssub.s32 %s17, 2
        // Predicated region
        $region65: #{tpu_custom_call.1} parent=63 // pred_check
          %p2129 = pneg %p177
        $region66: #{tpu_custom_call.1} parent=63 // pred_check_branch
          %2131 = sbr.rel (%p2129) target = $region68
        $region67: #{tpu_custom_call.1} parent=63 // pred_region
          %s2132 = sand.u32 %s162, 1
          %s2133 = scalar_lea.sflag [#allocation5], %s2132
          %s2134 = sand.u32 %s162, 1
          %s2135 = smul.addr %s2134, 96
          %s2136 = scalar_lea.vmem [#allocation9], %s2135
          %2138 = dma.done %s2133, 1536
        $region68: #{tpu_custom_call.1} parent=63 // pred_fallthru
          _
      $region64: #{tpu_custom_call.1} parent=5 // pred_fallthru
        _
    $region6: #{tpu_custom_call.1} parent=1 // loop_footer
      %s21 = sadd.s32 1, %s17
    $region7: #{tpu_custom_call.1} parent=1 // loop_footer_branch
      %16 = sbr.rel target = $region3
    $region8: #{tpu_custom_call.1} parent=1 // loop_exit
      _
    %2139 = vsyncpa [#allocation4], 1
    %s2140 = scalar_lea.sflag [#allocation4], 1
    %2141 = vsyncpa %s2140, 1
    %2142 = vsyncpa [#allocation7], 1
    %2143 = vsyncpa [#allocation5], 1
    %s2144 = scalar_lea.sflag [#allocation5], 1
    %2145 = vsyncpa %s2144, 1

</llo_original>
